<compile_context>
chip_gen: v7x
topology: tpu7x:2x2x1
jax: 0.10.0
libtpu: 0.0.40
codegen_flags: <defaults>
</compile_context>

<pallas_src>
import functools

import jax
import jax.numpy as jnp
from jax import lax
from jax.experimental import pallas as pl
from jax.experimental.pallas import tpu as pltpu


def _glo_avg_conv_kernel(x_ref, w_ref, shift_ref, o_ref, acc_ref, *, TP, TQ, S):
    """One (batch, point-tile) grid step.

    x_ref:     (1, C_in, TP*S)  compute dtype, native channels-first layout
    w_ref:     (C_in, C_out)    BN-scale already folded into the weights
    shift_ref: (1, C_out)       f32 per-channel shift (conv bias + BN affine)
    o_ref:     (1, C_out, TP)   lane-dense output tile
    acc_ref:   (TP, C_out)      f32 VMEM scratch holding the post-max result
    """
    w = w_ref[...]                                       # (C_in, C_out)

    # Static chunk schedule: TQ points (TQ*S contiguous lanes of x) per chunk.
    # The per-chunk f32 matmul result is only (TQ*S, C_out) -> a handful of
    # vregs, so nothing spills; the S-max is taken immediately.
    chunks = []
    off = 0
    while off < TP:
        sz = min(TQ, TP - off)
        chunks.append((off, sz))
        off += sz

    for off, sz in chunks:
        xq = x_ref[0, :, off * S:(off + sz) * S]         # (C_in, sz*S)
        yq = lax.dot_general(                            # contract over C_in
            xq, w,
            dimension_numbers=(((0,), (0,)), ((), ())),
            preferred_element_type=jnp.float32)          # (sz*S, C_out)
        c_out = yq.shape[-1]
        yq = jnp.max(yq.reshape(sz, S, c_out), axis=1)   # fused S-max -> (sz, C_out)
        acc_ref[off:off + sz, :] = yq

    # Epilogue: shift + ReLU (both commute with the max) as a cheap sublane
    # broadcast on the (TP, C_out) tile, then one XLU transpose so the store
    # of the PyTorch (B, C_out, npoint) layout is lane-dense.
    y = jnp.maximum(acc_ref[...] + shift_ref[...], 0.0)  # (TP, C_out) f32
    o_ref[0] = y.T.astype(o_ref.dtype)                   # (C_out, TP)


def _vmem_capacity_bytes():
    """Hardware VMEM capacity (64 MiB v7x, 128 MiB v5e/v6e); safe fallback."""
    try:
        return int(pltpu.get_tpu_info().vmem_capacity_bytes)
    except Exception:
        return 64 << 20  # conservative (v7x per-core size), safe everywhere


def _per_step_vmem_bytes(tp, S, C_in, C_out, x_itemsize, out_itemsize):
    x_blk = 2 * C_in * tp * S * x_itemsize               # double-buffered input
    w_blk = 2 * C_in * max(C_out, 128) * x_itemsize      # weights (tiny)
    out_blk = 2 * max(C_out, 8) * tp * out_itemsize      # double-buffered output
    acc = tp * max(C_out, 128) * 4                       # scratch, lane-padded f32
    chunk = 256 * 128 * 4                                 # per-chunk matmul result bound
    return x_blk + w_blk + out_blk + acc + chunk


def _choose_point_tile(P, S, B, C_in, C_out, x_itemsize, out_itemsize, budget):
    """Pick the point-tile TP.

    Lane-dense 128-multiples dividing npoint, fitting the VMEM budget, while
    keeping B*(P//TP) >= 8 grid steps so the software pipeline (and megacore /
    2-TC sharding on v7x) has depth.  For small B this prefers TP=128 over the
    largest tile that fits.
    """
    if P % 128 != 0:
        return P  # full extent: always legal (masked stores are perf-only)
    cands = [tp for tp in (512, 384, 256, 128)
             if tp <= P and P % tp == 0
             and _per_step_vmem_bytes(tp, S, C_in, C_out,
                                      x_itemsize, out_itemsize) <= budget]
    if not cands:
        return 128
    for tp in cands:                      # largest tile that keeps >= 8 steps
        if B * (P // tp) >= 8:
            return tp
    return min(cands)                     # small B: maximize pipeline depth


def _choose_chunk(TP, S, max_rows=256, max_chunks=32):
    """Largest TQ dividing TP with TQ*S <= max_rows (bounded unroll)."""
    divisors = [d for d in range(1, TP + 1) if TP % d == 0]
    ok = [d for d in divisors if d * S <= max_rows]
    tq = max(ok) if ok else min(divisors)
    while TP // tq > max_chunks:          # bound static-unroll length
        bigger = [d for d in divisors if d > tq]
        if not bigger:
            return TP
        tq = bigger[0]
    return tq


def glo_avg_conv_forward(x, w, bias, gamma, beta, running_mean, running_var,
                         eps=1e-5, compute_dtype=jnp.bfloat16,
                         out_dtype=jnp.float32):
    """x: (B, C_in, npoint, nsample) -> (B, C_out, npoint) of out_dtype."""
    B, C_in, P, S = x.shape
    C_out = w.shape[0]
    f32 = jnp.float32

    # Fold eval-mode BN + conv bias:
    #   BN(conv(x)) = (x @ W^T) * scale + shift
    #   scale = gamma/sqrt(var+eps),  shift = beta + (bias - mean) * scale
    # scale is folded into the weight (exact); shift (+ReLU) runs after the
    # max-pool inside the kernel (exact: monotone ops commute with max).
    scale = gamma.astype(f32) / jnp.sqrt(running_var.astype(f32) + eps)      # (C_out,)
    shift = beta.astype(f32) + (bias.astype(f32) - running_mean.astype(f32)) * scale
    w2d = w.reshape(C_out, C_in).astype(f32)
    wk = (w2d * scale[:, None]).T.astype(compute_dtype)                      # (C_in, C_out)
    shift_row = shift.reshape(1, C_out)                                      # lane-dense row

    # Native NCHW layout with the last two dims merged: free reshape, no HBM
    # transpose pass.
    xk = x.reshape(B, C_in, P * S).astype(compute_dtype)

    vmem_cap = _vmem_capacity_bytes()
    budget = vmem_cap // 4
    TP = _choose_point_tile(P, S, B, C_in, C_out,
                            jnp.dtype(compute_dtype).itemsize,
                            jnp.dtype(out_dtype).itemsize, budget)
    TQ = _choose_chunk(TP, S)
    grid = (B, P // TP)

    step_bytes = _per_step_vmem_bytes(TP, S, C_in, C_out,
                                      jnp.dtype(compute_dtype).itemsize,
                                      jnp.dtype(out_dtype).itemsize)
    vmem_limit = int(min(max(4 * step_bytes, 8 << 20), vmem_cap // 4))

    kern = functools.partial(_glo_avg_conv_kernel, TP=TP, TQ=TQ, S=S)
    out = pl.pallas_call(
        kern,
        out_shape=jax.ShapeDtypeStruct((B, C_out, P), out_dtype),
        grid_spec=pltpu.PrefetchScalarGridSpec(
            num_scalar_prefetch=0,
            grid=grid,
            in_specs=[
                pl.BlockSpec((1, C_in, TP * S), lambda b, p: (b, 0, p)),
                pl.BlockSpec((C_in, C_out), lambda b, p: (0, 0)),
                pl.BlockSpec((1, C_out), lambda b, p: (0, 0)),
            ],
            out_specs=pl.BlockSpec((1, C_out, TP), lambda b, p: (b, 0, p)),
            scratch_shapes=[pltpu.VMEM((TP, C_out), jnp.float32)],
        ),
        compiler_params=pltpu.CompilerParams(
            dimension_semantics=("parallel", "parallel"),
            vmem_limit_bytes=vmem_limit),
    )(xk, wk, shift_row)
    return out  # already (B, C_out, npoint): no wrapper transpose needed


def _reference(x, w, bias, gamma, beta, r_mean, r_var, eps=1e-5):
    """Plain-JAX f32 reference of the same forward pass (eval-mode BN)."""
    C_out = w.shape[0]
    C_in = x.shape[1]
    y = jnp.einsum('bcps,oc->bops', x, w.reshape(C_out, C_in)) + \
        bias.reshape(1, C_out, 1, 1)
    y = (y - r_mean.reshape(1, C_out, 1, 1)) / jnp.sqrt(
        r_var.reshape(1, C_out, 1, 1) + eps)
    y = y * gamma.reshape(1, C_out, 1, 1) + beta.reshape(1, C_out, 1, 1)
    y = jnp.maximum(y, 0.0)
    return jnp.max(y, axis=3)


if __name__ == "__main__":
    B, C_in, C_out, npoint, nsample = 2, 4, 32, 256, 16

    key = jax.random.PRNGKey(0)
    x = jax.random.normal(key, (B, C_in, npoint, nsample), dtype=jnp.float32)

    # Deterministic synthetic parameters (shapes from nn.Conv2d(C_in, C_out, 1)
    # and nn.BatchNorm2d(C_out)).
    w = (jnp.sin(jnp.arange(C_out * C_in, dtype=jnp.float32)) * 0.5
         ).reshape(C_out, C_in)
    bias = jnp.cos(jnp.arange(C_out, dtype=jnp.float32)) * 0.1
    gamma = 1.0 + 0.05 * jnp.arange(C_out, dtype=jnp.float32) / C_out
    beta = 0.02 * jnp.arange(C_out, dtype=jnp.float32)
    running_mean = 0.01 * jnp.arange(C_out, dtype=jnp.float32)
    running_var = 1.0 + 0.1 * jnp.arange(C_out, dtype=jnp.float32) / C_out

    ref = _reference(x, w, bias, gamma, beta, running_mean, running_var)

    # f32 compute path: all structural transforms (scale fold, fused max,
    # post-max shift+ReLU, layout changes) are exact -> tight tolerance.
    out_f32 = glo_avg_conv_forward(x, w, bias, gamma, beta, running_mean,
                                   running_var, compute_dtype=jnp.float32)
    out_f32 = jax.block_until_ready(out_f32)
    assert out_f32.shape == (B, C_out, npoint)
    assert jnp.allclose(out_f32, ref, atol=1e-4, rtol=1e-4)

    # Default bf16-operand path (halves input HBM traffic, f32 accumulation);
    # tolerance loosened only for bf16 input rounding.
    out_bf16 = glo_avg_conv_forward(x, w, bias, gamma, beta, running_mean,
                                    running_var, compute_dtype=jnp.bfloat16)
    out_bf16 = jax.block_until_ready(out_bf16)
    assert out_bf16.shape == (B, C_out, npoint)
    assert jnp.allclose(out_bf16, ref, atol=8e-2, rtol=5e-2)

    # Optional bf16 output (halves writeback on the HBM-bound kernel).
    out_bf16o = glo_avg_conv_forward(x, w, bias, gamma, beta, running_mean,
                                     running_var, compute_dtype=jnp.bfloat16,
                                     out_dtype=jnp.bfloat16)
    out_bf16o = jax.block_until_ready(out_bf16o)
    assert out_bf16o.dtype == jnp.bfloat16
    assert jnp.allclose(out_bf16o.astype(jnp.float32), ref, atol=1e-1, rtol=5e-2)

    print("KERNEL_OK")
</pallas_src>

<mosaic_0001>
module attributes {stable_mosaic.version = 11 : i64} {
  func.func @_glo_avg_conv_kernel(%arg0: i32, %arg1: i32, %arg2: memref<1x4x2048xf32, #tpu.memory_space<vmem>>, %arg3: memref<4x32xf32, #tpu.memory_space<vmem>>, %arg4: memref<1x32xf32, #tpu.memory_space<vmem>>, %arg5: memref<1x32x128xf32, #tpu.memory_space<vmem>>, %arg6: memref<128x32xf32, #tpu.memory_space<vmem>>) attributes {dimension_semantics = [#tpu.dimension_semantics<parallel>, #tpu.dimension_semantics<parallel>], iteration_bounds = array<i64: 2, 2>, scalar_prefetch = 0 : i64, scratch_operands = 1 : i64, tpu.core_type = #tpu.core_type<tc>, window_params = [{transform_indices = @transform_0, window_bounds = array<i64: 1, 4, 2048>}, {pipeline_mode = #tpu.pipeline_mode<synchronous>, transform_indices = @transform_1, window_bounds = array<i64: 4, 32>}, {pipeline_mode = #tpu.pipeline_mode<synchronous>, transform_indices = @transform_2, window_bounds = array<i64: 1, 32>}, {transform_indices = @transform_3, window_bounds = array<i64: 1, 32, 128>}]} {
    %c0 = arith.constant 0 : index
    %c0_0 = arith.constant 0 : index
    %0 = vector.load %arg3[%c0, %c0_0] : memref<4x32xf32, #tpu.memory_space<vmem>>, vector<4x32xf32>
    %c0_1 = arith.constant 0 : index
    %c0_2 = arith.constant 0 : index
    %c0_3 = arith.constant 0 : index
    %1 = vector.load %arg2[%c0_1, %c0_2, %c0_3] : memref<1x4x2048xf32, #tpu.memory_space<vmem>>, vector<1x4x256xf32>
    %2 = vector.shape_cast %1 : vector<1x4x256xf32> to vector<4x256xf32>
    %cst = arith.constant dense<0.000000e+00> : vector<256x32xf32>
    %3 = tpu.matmul %2, %0, %cst {dimension_numbers = #tpu.dot_dimension_numbers<[0], [0], [1], [1], [0, 1, 1, 1], [], []>} : vector<4x256xf32>, vector<4x32xf32>, vector<256x32xf32> -> vector<256x32xf32>
    %4 = vector.shape_cast %3 : vector<256x32xf32> to vector<16x16x32xf32>
    %cst_4 = arith.constant dense<0xFF800000> : vector<16x32xf32>
    %5 = vector.multi_reduction <maximumf>, %4, %cst_4 [1] : vector<16x16x32xf32> to vector<16x32xf32>
    %c0_5 = arith.constant 0 : index
    %c0_6 = arith.constant 0 : index
    %6 = vector.load %arg6[%c0_5, %c0_6] : memref<128x32xf32, #tpu.memory_space<vmem>>, vector<16x32xf32>
    tpu.vector_store %arg6[%c0_5, %c0_6], %5 {strides = array<i32>} : memref<128x32xf32, #tpu.memory_space<vmem>>, vector<16x32xf32>,
    %c0_7 = arith.constant 0 : index
    %c0_8 = arith.constant 0 : index
    %c256 = arith.constant 256 : index
    %7 = vector.load %arg2[%c0_7, %c0_8, %c256] : memref<1x4x2048xf32, #tpu.memory_space<vmem>>, vector<1x4x256xf32>
    %8 = vector.shape_cast %7 : vector<1x4x256xf32> to vector<4x256xf32>
    %cst_9 = arith.constant dense<0.000000e+00> : vector<256x32xf32>
    %9 = tpu.matmul %8, %0, %cst_9 {dimension_numbers = #tpu.dot_dimension_numbers<[0], [0], [1], [1], [0, 1, 1, 1], [], []>} : vector<4x256xf32>, vector<4x32xf32>, vector<256x32xf32> -> vector<256x32xf32>
    %10 = vector.shape_cast %9 : vector<256x32xf32> to vector<16x16x32xf32>
    %cst_10 = arith.constant dense<0xFF800000> : vector<16x32xf32>
    %11 = vector.multi_reduction <maximumf>, %10, %cst_10 [1] : vector<16x16x32xf32> to vector<16x32xf32>
    %c16 = arith.constant 16 : index
    %c0_11 = arith.constant 0 : index
    %12 = vector.load %arg6[%c16, %c0_11] : memref<128x32xf32, #tpu.memory_space<vmem>>, vector<16x32xf32>
    tpu.vector_store %arg6[%c16, %c0_11], %11 {strides = array<i32>} : memref<128x32xf32, #tpu.memory_space<vmem>>, vector<16x32xf32>,
    %c0_12 = arith.constant 0 : index
    %c0_13 = arith.constant 0 : index
    %c512 = arith.constant 512 : index
    %13 = vector.load %arg2[%c0_12, %c0_13, %c512] : memref<1x4x2048xf32, #tpu.memory_space<vmem>>, vector<1x4x256xf32>
    %14 = vector.shape_cast %13 : vector<1x4x256xf32> to vector<4x256xf32>
    %cst_14 = arith.constant dense<0.000000e+00> : vector<256x32xf32>
    %15 = tpu.matmul %14, %0, %cst_14 {dimension_numbers = #tpu.dot_dimension_numbers<[0], [0], [1], [1], [0, 1, 1, 1], [], []>} : vector<4x256xf32>, vector<4x32xf32>, vector<256x32xf32> -> vector<256x32xf32>
    %16 = vector.shape_cast %15 : vector<256x32xf32> to vector<16x16x32xf32>
    %cst_15 = arith.constant dense<0xFF800000> : vector<16x32xf32>
    %17 = vector.multi_reduction <maximumf>, %16, %cst_15 [1] : vector<16x16x32xf32> to vector<16x32xf32>
    %c32 = arith.constant 32 : index
    %c0_16 = arith.constant 0 : index
    %18 = vector.load %arg6[%c32, %c0_16] : memref<128x32xf32, #tpu.memory_space<vmem>>, vector<16x32xf32>
    tpu.vector_store %arg6[%c32, %c0_16], %17 {strides = array<i32>} : memref<128x32xf32, #tpu.memory_space<vmem>>, vector<16x32xf32>,
    %c0_17 = arith.constant 0 : index
    %c0_18 = arith.constant 0 : index
    %c768 = arith.constant 768 : index
    %19 = vector.load %arg2[%c0_17, %c0_18, %c768] : memref<1x4x2048xf32, #tpu.memory_space<vmem>>, vector<1x4x256xf32>
    %20 = vector.shape_cast %19 : vector<1x4x256xf32> to vector<4x256xf32>
    %cst_19 = arith.constant dense<0.000000e+00> : vector<256x32xf32>
    %21 = tpu.matmul %20, %0, %cst_19 {dimension_numbers = #tpu.dot_dimension_numbers<[0], [0], [1], [1], [0, 1, 1, 1], [], []>} : vector<4x256xf32>, vector<4x32xf32>, vector<256x32xf32> -> vector<256x32xf32>
    %22 = vector.shape_cast %21 : vector<256x32xf32> to vector<16x16x32xf32>
    %cst_20 = arith.constant dense<0xFF800000> : vector<16x32xf32>
    %23 = vector.multi_reduction <maximumf>, %22, %cst_20 [1] : vector<16x16x32xf32> to vector<16x32xf32>
    %c48 = arith.constant 48 : index
    %c0_21 = arith.constant 0 : index
    %24 = vector.load %arg6[%c48, %c0_21] : memref<128x32xf32, #tpu.memory_space<vmem>>, vector<16x32xf32>
    tpu.vector_store %arg6[%c48, %c0_21], %23 {strides = array<i32>} : memref<128x32xf32, #tpu.memory_space<vmem>>, vector<16x32xf32>,
    %c0_22 = arith.constant 0 : index
    %c0_23 = arith.constant 0 : index
    %c1024 = arith.constant 1024 : index
    %25 = vector.load %arg2[%c0_22, %c0_23, %c1024] : memref<1x4x2048xf32, #tpu.memory_space<vmem>>, vector<1x4x256xf32>
    %26 = vector.shape_cast %25 : vector<1x4x256xf32> to vector<4x256xf32>
    %cst_24 = arith.constant dense<0.000000e+00> : vector<256x32xf32>
    %27 = tpu.matmul %26, %0, %cst_24 {dimension_numbers = #tpu.dot_dimension_numbers<[0], [0], [1], [1], [0, 1, 1, 1], [], []>} : vector<4x256xf32>, vector<4x32xf32>, vector<256x32xf32> -> vector<256x32xf32>
    %28 = vector.shape_cast %27 : vector<256x32xf32> to vector<16x16x32xf32>
    %cst_25 = arith.constant dense<0xFF800000> : vector<16x32xf32>
    %29 = vector.multi_reduction <maximumf>, %28, %cst_25 [1] : vector<16x16x32xf32> to vector<16x32xf32>
    %c64 = arith.constant 64 : index
    %c0_26 = arith.constant 0 : index
    %30 = vector.load %arg6[%c64, %c0_26] : memref<128x32xf32, #tpu.memory_space<vmem>>, vector<16x32xf32>
    tpu.vector_store %arg6[%c64, %c0_26], %29 {strides = array<i32>} : memref<128x32xf32, #tpu.memory_space<vmem>>, vector<16x32xf32>,
    %c0_27 = arith.constant 0 : index
    %c0_28 = arith.constant 0 : index
    %c1280 = arith.constant 1280 : index
    %31 = vector.load %arg2[%c0_27, %c0_28, %c1280] : memref<1x4x2048xf32, #tpu.memory_space<vmem>>, vector<1x4x256xf32>
    %32 = vector.shape_cast %31 : vector<1x4x256xf32> to vector<4x256xf32>
    %cst_29 = arith.constant dense<0.000000e+00> : vector<256x32xf32>
    %33 = tpu.matmul %32, %0, %cst_29 {dimension_numbers = #tpu.dot_dimension_numbers<[0], [0], [1], [1], [0, 1, 1, 1], [], []>} : vector<4x256xf32>, vector<4x32xf32>, vector<256x32xf32> -> vector<256x32xf32>
    %34 = vector.shape_cast %33 : vector<256x32xf32> to vector<16x16x32xf32>
    %cst_30 = arith.constant dense<0xFF800000> : vector<16x32xf32>
    %35 = vector.multi_reduction <maximumf>, %34, %cst_30 [1] : vector<16x16x32xf32> to vector<16x32xf32>
    %c80 = arith.constant 80 : index
    %c0_31 = arith.constant 0 : index
    %36 = vector.load %arg6[%c80, %c0_31] : memref<128x32xf32, #tpu.memory_space<vmem>>, vector<16x32xf32>
    tpu.vector_store %arg6[%c80, %c0_31], %35 {strides = array<i32>} : memref<128x32xf32, #tpu.memory_space<vmem>>, vector<16x32xf32>,
    %c0_32 = arith.constant 0 : index
    %c0_33 = arith.constant 0 : index
    %c1536 = arith.constant 1536 : index
    %37 = vector.load %arg2[%c0_32, %c0_33, %c1536] : memref<1x4x2048xf32, #tpu.memory_space<vmem>>, vector<1x4x256xf32>
    %38 = vector.shape_cast %37 : vector<1x4x256xf32> to vector<4x256xf32>
    %cst_34 = arith.constant dense<0.000000e+00> : vector<256x32xf32>
    %39 = tpu.matmul %38, %0, %cst_34 {dimension_numbers = #tpu.dot_dimension_numbers<[0], [0], [1], [1], [0, 1, 1, 1], [], []>} : vector<4x256xf32>, vector<4x32xf32>, vector<256x32xf32> -> vector<256x32xf32>
    %40 = vector.shape_cast %39 : vector<256x32xf32> to vector<16x16x32xf32>
    %cst_35 = arith.constant dense<0xFF800000> : vector<16x32xf32>
    %41 = vector.multi_reduction <maximumf>, %40, %cst_35 [1] : vector<16x16x32xf32> to vector<16x32xf32>
    %c96 = arith.constant 96 : index
    %c0_36 = arith.constant 0 : index
    %42 = vector.load %arg6[%c96, %c0_36] : memref<128x32xf32, #tpu.memory_space<vmem>>, vector<16x32xf32>
    tpu.vector_store %arg6[%c96, %c0_36], %41 {strides = array<i32>} : memref<128x32xf32, #tpu.memory_space<vmem>>, vector<16x32xf32>,
    %c0_37 = arith.constant 0 : index
    %c0_38 = arith.constant 0 : index
    %c1792 = arith.constant 1792 : index
    %43 = vector.load %arg2[%c0_37, %c0_38, %c1792] : memref<1x4x2048xf32, #tpu.memory_space<vmem>>, vector<1x4x256xf32>
    %44 = vector.shape_cast %43 : vector<1x4x256xf32> to vector<4x256xf32>
    %cst_39 = arith.constant dense<0.000000e+00> : vector<256x32xf32>
    %45 = tpu.matmul %44, %0, %cst_39 {dimension_numbers = #tpu.dot_dimension_numbers<[0], [0], [1], [1], [0, 1, 1, 1], [], []>} : vector<4x256xf32>, vector<4x32xf32>, vector<256x32xf32> -> vector<256x32xf32>
    %46 = vector.shape_cast %45 : vector<256x32xf32> to vector<16x16x32xf32>
    %cst_40 = arith.constant dense<0xFF800000> : vector<16x32xf32>
    %47 = vector.multi_reduction <maximumf>, %46, %cst_40 [1] : vector<16x16x32xf32> to vector<16x32xf32>
    %c112 = arith.constant 112 : index
    %c0_41 = arith.constant 0 : index
    %48 = vector.load %arg6[%c112, %c0_41] : memref<128x32xf32, #tpu.memory_space<vmem>>, vector<16x32xf32>
    tpu.vector_store %arg6[%c112, %c0_41], %47 {strides = array<i32>} : memref<128x32xf32, #tpu.memory_space<vmem>>, vector<16x32xf32>,
    %c0_42 = arith.constant 0 : index
    %c0_43 = arith.constant 0 : index
    %49 = vector.load %arg6[%c0_42, %c0_43] : memref<128x32xf32, #tpu.memory_space<vmem>>, vector<128x32xf32>
    %c0_44 = arith.constant 0 : index
    %c0_45 = arith.constant 0 : index
    %50 = vector.load %arg4[%c0_44, %c0_45] : memref<1x32xf32, #tpu.memory_space<vmem>>, vector<1x32xf32>
    %51 = vector.broadcast %50 : vector<1x32xf32> to vector<128x32xf32>
    %52 = arith.addf %49, %51 : vector<128x32xf32>
    %cst_46 = arith.constant 0.000000e+00 : f32
    %53 = vector.broadcast %cst_46 : f32 to vector<128x32xf32>
    %54 = arith.maximumf %52, %53 : vector<128x32xf32>
    %55 = tpu.transpose %54, [1, 0] : vector<128x32xf32> -> vector<32x128xf32>
    %c0_47 = arith.constant 0 : index
    %c0_48 = arith.constant 0 : index
    %c0_49 = arith.constant 0 : index
    %56 = vector.load %arg5[%c0_47, %c0_48, %c0_49] : memref<1x32x128xf32, #tpu.memory_space<vmem>>, vector<1x32x128xf32>
    %57 = vector.shape_cast %56 : vector<1x32x128xf32> to vector<32x128xf32>
    %58 = vector.shape_cast %55 : vector<32x128xf32> to vector<1x32x128xf32>
    tpu.vector_store %arg5[%c0_47, %c0_48, %c0_49], %58 {strides = array<i32>} : memref<1x32x128xf32, #tpu.memory_space<vmem>>, vector<1x32x128xf32>,
    return
  }
  func.func @transform_0(%arg0: i32, %arg1: i32) -> (i32, i32, i32) {
    %c0_i32 = arith.constant 0 : i32
    %c0_i32_0 = arith.constant 0 : i32
    return %arg0, %c0_i32, %arg1 : i32, i32, i32
  }
  func.func @transform_1(%arg0: i32, %arg1: i32) -> (i32, i32) {
    %c0_i32 = arith.constant 0 : i32
    %c0_i32_0 = arith.constant 0 : i32
    %c0_i32_1 = arith.constant 0 : i32
    return %c0_i32, %c0_i32_0 : i32, i32
  }
  func.func @transform_2(%arg0: i32, %arg1: i32) -> (i32, i32) {
    %c0_i32 = arith.constant 0 : i32
    %c0_i32_0 = arith.constant 0 : i32
    %c0_i32_1 = arith.constant 0 : i32
    return %c0_i32, %c0_i32_0 : i32, i32
  }
  func.func @transform_3(%arg0: i32, %arg1: i32) -> (i32, i32, i32) {
    %c0_i32 = arith.constant 0 : i32
    %c0_i32_0 = arith.constant 0 : i32
    return %arg0, %c0_i32, %arg1 : i32, i32, i32
  }
}

</mosaic_0001>

<llo_original>
// kernel: tpu_custom_call.1
$region0: #{tpu_custom_call.1}
  #allocation0 [shape = 'u32[]', space=smem, size = 0x4, offset = 0x4, fixed_abs, tag = 'smem constant byte address 0x4 - core index']
  #allocation1 [shape = 'u32[144,128]{1,0:T(1,128)}', space=vmem, size = 0x12000, scoped, tag = 'internal scratch']
  #allocation2 [shape = 'f32[128,32]{1,0:T(8,128)}', space=vmem, size = 0x10000, scoped, tag = 'scratch operand']
  %s0 = inlined_call_operand.hbm [shape: f32[2,4,4096], index: 0, kind: input, shape index: {}]
  %s1 = inlined_call_operand.hbm [shape: f32[4,32], index: 1, kind: input, shape index: {}]
  %s2 = inlined_call_operand.vmem [shape: f32[1,32], index: 2, kind: input, shape index: {}]
  %s3 = inlined_call_operand.hbm [shape: f32[2,32,256], index: 3, kind: output, shape index: {}]
  %s4 = sld [smem:[#allocation0]]
  $region53: #{tpu_custom_call.1} parent=0
    _
  %s6 = ssub.s32 1, %s4
  %s7 = scalar_select 0, %s6, %s4
  $region1: #{tpu_custom_call.1} parent=0
    #allocation3 [shape = 'u8[65536]{0}', space=vmem, size = 0x10000, scoped, tag = 'input window, operand 0']
    #allocation4 [shape = 's32[2]{0}', space=sflag, size = 0x8, scoped, tag = 'scoped memory for tpu_custom_call.1']
    #allocation5 [shape = 's32[2]{0}', space=sflag, size = 0x8, scoped, tag = 'scoped memory for tpu_custom_call.1']
    #allocation6 [shape = 'u8[2048]{0}', space=vmem, size = 0x800, scoped, tag = 'input window, operand 1, single buffered']
    #allocation7 [shape = 's32[1]{0}', space=sflag, size = 0x4, scoped, tag = 'scoped memory for tpu_custom_call.1']
    #allocation8 [shape = 'u8[32768]{0}', space=vmem, size = 0x8000, scoped, tag = 'output window, operand 0']
    %8 = vsyncpa [#allocation4], 0
    %s9 = scalar_lea.sflag [#allocation4], 1
    %10 = vsyncpa %s9, 0
    %11 = vsyncpa [#allocation7], 0
    %12 = vsyncpa [#allocation5], 0
    %s13 = scalar_lea.sflag [#allocation5], 1
    %14 = vsyncpa %s13, 0
    loop: start=0, step=1, limit=6
    $region2: #{tpu_custom_call.1} parent=1 // loop_pre_header
      _
    $region3: #{tpu_custom_call.1} parent=1 // loop_header
      %s16 = sphi 0, %s20
      %p17 = scmp.ge.s32.totalorder %s16, 6
      %s23 = sphi 0, %s35
      %s24 = sphi 0, %s31
      %s25 = sphi 0, %s23
      %s26 = sphi 0, %s24
      %s27 = sphi 0, %s25
      %s28 = sphi 0, %s26
      %s40 = sphi 0, %s42
      %s43 = sphi 0, %s40
      %s44 = sphi 0, %s43
      %s60 = sphi 0, %s44
      %s64 = sphi 0, %s64
      %s66 = sphi 0, %s64
      %s67 = sphi 0, %s66
      %s81 = sphi 0, %s67
      %s85 = sphi 0, %s85
      %s87 = sphi 0, %s85
      %s88 = sphi 0, %s87
      %s102 = sphi 0, %s88
      %s110 = sphi 0, %s112
      %s113 = sphi 0, %s110
      %s114 = sphi 0, %s113
      %s130 = sphi 0, %s114
    $region4: #{tpu_custom_call.1} parent=1 // loop_header_branch
      %19 = sbr.rel (%p17) target = $region8
    $region5: #{tpu_custom_call.1} parent=1 // loop_body
      %s21 = ssub.s32 %s16, 1
      %s22 = ssub.s32 %s16, 2
      %s29 = sadd.s32 1, %s24
      %p30 = scmp.ge.s32.totalorder %s29, 2
      %s31 = scalar_select %p30, 0, %s29
      %s32 = sadd.s32 1, %s23
      %s33 = scalar_select %p30, %s32, %s23
      %p34 = scmp.ge.s32.totalorder %s33, 2
      %s35 = scalar_select %p34, 0, %s33
      %s36 = ssub.s32 %s23, %s35
      %s37 = ssub.s32 %s24, %s31
      %s38 = sor.u32 %s36, %s37
      %p39 = scmp.eq.s32.totalorder %s38, 0
      %s41 = sadd.s32 %s40, 1
      %s42 = scalar_select %p39, %s40, %s41
      %p45 = pneg %p39
      %p46 = scmp.eq.s32.totalorder %s16, 3
      %p47 = por %p45, %p46
      %p48 = scmp.ne.s32.totalorder %s40, %s43
      %p49 = scmp.eq.s32.totalorder %s16, 0
      %p50 = por %p48, %p49
      %p51 = scmp.ne.s32.totalorder %s40, %s43
      %p52 = scmp.eq.s32.totalorder %s21, 3
      %p53 = por %p51, %p52
      %p54 = scmp.ne.s32.totalorder %s43, %s44
      %p55 = scmp.eq.s32.totalorder %s21, 0
      %p56 = por %p54, %p55
      %p57 = scmp.ne.s32.totalorder %s43, %s44
      %p58 = scmp.eq.s32.totalorder %s22, 3
      %p59 = por %p57, %p58
      %p61 = scmp.ne.s32.totalorder %s44, %s60
      %p62 = scmp.eq.s32.totalorder %s22, 0
      %p63 = por %p61, %p62
      %s65 = sadd.s32 %s64, 1
      %p68 = scmp.eq.s32.totalorder %s16, 3
      %p69 = scmp.ne.s32.totalorder %s64, %s66
      %p70 = scmp.eq.s32.totalorder %s16, 0
      %p71 = por %p69, %p70
      %p72 = scmp.ne.s32.totalorder %s64, %s66
      %p73 = scmp.eq.s32.totalorder %s21, 3
      %p74 = por %p72, %p73
      %p75 = scmp.ne.s32.totalorder %s66, %s67
      %p76 = scmp.eq.s32.totalorder %s21, 0
      %p77 = por %p75, %p76
      %p78 = scmp.ne.s32.totalorder %s66, %s67
      %p79 = scmp.eq.s32.totalorder %s22, 3
      %p80 = por %p78, %p79
      %p82 = scmp.ne.s32.totalorder %s67, %s81
      %p83 = scmp.eq.s32.totalorder %s22, 0
      %p84 = por %p82, %p83
      %s86 = sadd.s32 %s85, 1
      %p89 = scmp.eq.s32.totalorder %s16, 3
      %p90 = scmp.ne.s32.totalorder %s85, %s87
      %p91 = scmp.eq.s32.totalorder %s16, 0
      %p92 = por %p90, %p91
      %p93 = scmp.ne.s32.totalorder %s85, %s87
      %p94 = scmp.eq.s32.totalorder %s21, 3
      %p95 = por %p93, %p94
      %p96 = scmp.ne.s32.totalorder %s87, %s88
      %p97 = scmp.eq.s32.totalorder %s21, 0
      %p98 = por %p96, %p97
      %p99 = scmp.ne.s32.totalorder %s87, %s88
      %p100 = scmp.eq.s32.totalorder %s22, 3
      %p101 = por %p99, %p100
      %p103 = scmp.ne.s32.totalorder %s88, %s102
      %p104 = scmp.eq.s32.totalorder %s22, 0
      %p105 = por %p103, %p104
      %s106 = ssub.s32 %s23, %s35
      %s107 = ssub.s32 %s24, %s31
      %s108 = sor.u32 %s106, %s107
      %p109 = scmp.eq.s32.totalorder %s108, 0
      %s111 = sadd.s32 %s110, 1
      %s112 = scalar_select %p109, %s110, %s111
      %p115 = pneg %p109
      %p116 = scmp.eq.s32.totalorder %s16, 3
      %p117 = por %p115, %p116
      %p118 = scmp.ne.s32.totalorder %s110, %s113
      %p119 = scmp.eq.s32.totalorder %s16, 0
      %p120 = por %p118, %p119
      %p121 = scmp.ne.s32.totalorder %s110, %s113
      %p122 = scmp.eq.s32.totalorder %s21, 3
      %p123 = por %p121, %p122
      %p124 = scmp.ne.s32.totalorder %s113, %s114
      %p125 = scmp.eq.s32.totalorder %s21, 0
      %p126 = por %p124, %p125
      %p127 = scmp.ne.s32.totalorder %s113, %s114
      %p128 = scmp.eq.s32.totalorder %s22, 3
      %p129 = por %p127, %p128
      %p131 = scmp.ne.s32.totalorder %s114, %s130
      %p132 = scmp.eq.s32.totalorder %s22, 0
      %p133 = por %p131, %p132
      %p134 = scmp.le.s32.totalorder 1, %s16
      %p135 = scmp.lt.s32.totalorder %s16, 5
      %p136 = pnand %p134, %p135
      %p137 = pneg %p136
      // Predicated region
      $region9: #{tpu_custom_call.1} parent=5 // pred_check
        _
      $region10: #{tpu_custom_call.1} parent=5 // pred_check_branch
        %139 = sbr.rel (%p136) target = $region12
      $region11: #{tpu_custom_call.1} parent=5 // pred_region
        %s140 = ssub.s32 %s16, 1
        // Predicated region
        $region13: #{tpu_custom_call.1} parent=11 // pred_check
          %p141 = pneg %p77
        $region14: #{tpu_custom_call.1} parent=11 // pred_check_branch
          %143 = sbr.rel (%p141) target = $region16
        $region15: #{tpu_custom_call.1} parent=11 // pred_region
          %s145 = ssub.s32 64, 64
          %146 = vsyncadd [#allocation7], %s145
          %s148 = sshll.u32 [#allocation6], 4
          %s149 = int_to_ptr.vmem [resolvable:$true] %s148
          %151 = dma.hbm_to_vmem [thread:$0]  %s1, 64, %s149, [#allocation7]
        $region16: #{tpu_custom_call.1} parent=11 // pred_fallthru
          _
        // Predicated region
        $region17: #{tpu_custom_call.1} parent=11 // pred_check
          %p152 = pneg %p98
        $region18: #{tpu_custom_call.1} parent=11 // pred_check_branch
          %154 = sbr.rel (%p152) target = $region20
        $region19: #{tpu_custom_call.1} parent=11 // pred_region
          _
        $region20: #{tpu_custom_call.1} parent=11 // pred_fallthru
          _
      $region12: #{tpu_custom_call.1} parent=5 // pred_fallthru
        _
      %p155 = scmp.lt.s32.totalorder %s16, 4
      // Predicated region
      $region21: #{tpu_custom_call.1} parent=5 // pred_check
        %p156 = pneg %p155
      $region22: #{tpu_custom_call.1} parent=5 // pred_check_branch
        %158 = sbr.rel (%p156) target = $region24
      $region23: #{tpu_custom_call.1} parent=5 // pred_region
        // Predicated region
        $region25: #{tpu_custom_call.1} parent=23 // pred_check
          %p159 = pneg %p50
        $region26: #{tpu_custom_call.1} parent=23 // pred_check_branch
          %161 = sbr.rel (%p159) target = $region28
        $region27: #{tpu_custom_call.1} parent=23 // pred_region
          %s162 = sand.u32 %s40, 1
          %s163 = scalar_lea.sflag [#allocation4], %s162
          %s164 = sand.u32 %s40, 1
          %s165 = smul.addr %s164, 64
          %s166 = scalar_lea.vmem [#allocation3], %s165
          %s167 = smul.u32 16, %s24
          %s169 = ssub.s32 1024, 1024
          %170 = vsyncadd %s163, %s169
          %s171 = smul.addr %s23, 32
          %s172 = sadd.s32 %s167, %s171
          %s173 = smul.addr %s172, 64
          %s174 = scalar_lea.hbm %s0, %s173
          %s176 = sshll.u32 %s166, 4
          %s177 = int_to_ptr.vmem [resolvable:$true] %s176
          %179 = dma.hbm_to_vmem [thread:$0]  %s174, 1024, %s177, %s163
        $region28: #{tpu_custom_call.1} parent=23 // pred_fallthru
          _
      $region24: #{tpu_custom_call.1} parent=5 // pred_fallthru
        _
      %p180 = scmp.le.s32.totalorder 1, %s16
      %p181 = scmp.lt.s32.totalorder %s16, 5
      %p182 = pnand %p180, %p181
      %p183 = pneg %p182
      // Predicated region
      $region29: #{tpu_custom_call.1} parent=5 // pred_check
        _
      $region30: #{tpu_custom_call.1} parent=5 // pred_check_branch
        %185 = sbr.rel (%p182) target = $region32
      $region31: #{tpu_custom_call.1} parent=5 // pred_region
        %s186 = ssub.s32 %s16, 1
        %s187 = sand.u32 %s43, 1
        %s188 = scalar_lea.sflag [#allocation4], %s187
        %s189 = sand.u32 %s43, 1
        %s190 = smul.addr %s189, 64
        %s191 = scalar_lea.vmem [#allocation3], %s190
        // Predicated region
        $region33: #{tpu_custom_call.1} parent=31 // pred_check
          %p192 = pneg %p56
        $region34: #{tpu_custom_call.1} parent=31 // pred_check_branch
          %194 = sbr.rel (%p192) target = $region36
        $region35: #{tpu_custom_call.1} parent=31 // pred_region
          %195 = dma.done %s188, 1024
        $region36: #{tpu_custom_call.1} parent=31 // pred_fallthru
          _
        // Predicated region
        $region37: #{tpu_custom_call.1} parent=31 // pred_check
          %p196 = pneg %p77
        $region38: #{tpu_custom_call.1} parent=31 // pred_check_branch
          %198 = sbr.rel (%p196) target = $region40
        $region39: #{tpu_custom_call.1} parent=31 // pred_region
          %199 = dma.done [#allocation7], 64
        $region40: #{tpu_custom_call.1} parent=31 // pred_fallthru
          _
        %s200 = sand.u32 %s43, 1
        %s201 = scalar_lea.sflag [#allocation4], %s200
        %s202 = sand.u32 %s43, 1
        %s203 = smul.addr %s202, 64
        %s204 = scalar_lea.vmem [#allocation3], %s203
        %p205 = pneg %p56
        %p206 = pneg %p53
        %p207 = pneg %p77
        %p208 = pneg %p74
        %p209 = pneg %p98
        %p210 = pneg %p95
        %p211 = pneg %p126
        %p212 = pneg %p123
        %s213 = sand.u32 %s113, 1
        %s214 = scalar_lea.sflag [#allocation5], %s213
        %s215 = sand.u32 %s113, 1
        %s216 = smul.addr %s215, 32
        %s217 = scalar_lea.vmem [#allocation8], %s216
        %s218 = smul.u32 16, %s26
        %v219 = vld [vmem:[#allocation6] sm:$0xf]
        %v220 = vld [vmem:[%s191] sm:$0xff]
        %v222 = vcombine.high %v220, %v220
        %224 = vxpose.xlu0.b32.start [1/16] %v220, 128
        %225 = vxpose.xlu0.b32.cont [2/16] 0.0, 128
        %226 = vxpose.xlu0.b32.cont [3/16] 0.0, 128
        %227 = vxpose.xlu0.b32.cont [4/16] 0.0, 128
        %228 = vxpose.xlu0.b32.cont [5/16] 0.0, 128
        %229 = vxpose.xlu0.b32.cont [6/16] 0.0, 128
        %230 = vxpose.xlu0.b32.cont [7/16] 0.0, 128
        %231 = vxpose.xlu0.b32.cont [8/16] 0.0, 128
        %232 = vxpose.xlu0.b32.cont [9/16] 0.0, 128
        %233 = vxpose.xlu0.b32.cont [10/16] 0.0, 128
        %234 = vxpose.xlu0.b32.cont [11/16] 0.0, 128
        %235 = vxpose.xlu0.b32.cont [12/16] 0.0, 128
        %236 = vxpose.xlu0.b32.cont [13/16] 0.0, 128
        %237 = vxpose.xlu0.b32.cont [14/16] 0.0, 128
        %238 = vxpose.xlu0.b32.cont [15/16] 0.0, 128
        %239 = vxpose.xlu0.b32.end [16/16] 0.0, 128
        %v240 = vpop.trf.xlu0
        %v241 = vpop.trf.xlu0
        %v242 = vpop.trf.xlu0
        %v243 = vpop.trf.xlu0
        %v244 = vpop.trf.xlu0
        %v245 = vpop.trf.xlu0
        %v246 = vpop.trf.xlu0
        %v247 = vpop.trf.xlu0
        %v248 = vpop.trf.xlu0
        %v249 = vpop.trf.xlu0
        %v250 = vpop.trf.xlu0
        %v251 = vpop.trf.xlu0
        %v252 = vpop.trf.xlu0
        %v253 = vpop.trf.xlu0
        %v254 = vpop.trf.xlu0
        %v255 = vpop.trf.xlu0
        %256 = vxpose.xlu0.b32.start [1/16] %v222, 128
        %257 = vxpose.xlu0.b32.cont [2/16] 0.0, 128
        %258 = vxpose.xlu0.b32.cont [3/16] 0.0, 128
        %259 = vxpose.xlu0.b32.cont [4/16] 0.0, 128
        %260 = vxpose.xlu0.b32.cont [5/16] 0.0, 128
        %261 = vxpose.xlu0.b32.cont [6/16] 0.0, 128
        %262 = vxpose.xlu0.b32.cont [7/16] 0.0, 128
        %263 = vxpose.xlu0.b32.cont [8/16] 0.0, 128
        %264 = vxpose.xlu0.b32.cont [9/16] 0.0, 128
        %265 = vxpose.xlu0.b32.cont [10/16] 0.0, 128
        %266 = vxpose.xlu0.b32.cont [11/16] 0.0, 128
        %267 = vxpose.xlu0.b32.cont [12/16] 0.0, 128
        %268 = vxpose.xlu0.b32.cont [13/16] 0.0, 128
        %269 = vxpose.xlu0.b32.cont [14/16] 0.0, 128
        %270 = vxpose.xlu0.b32.cont [15/16] 0.0, 128
        %271 = vxpose.xlu0.b32.end [16/16] 0.0, 128
        %v272 = vpop.trf.xlu0
        %v273 = vpop.trf.xlu0
        %v274 = vpop.trf.xlu0
        %v275 = vpop.trf.xlu0
        %v276 = vpop.trf.xlu0
        %v277 = vpop.trf.xlu0
        %v278 = vpop.trf.xlu0
        %v279 = vpop.trf.xlu0
        %v280 = vpop.trf.xlu0
        %v281 = vpop.trf.xlu0
        %v282 = vpop.trf.xlu0
        %v283 = vpop.trf.xlu0
        %v284 = vpop.trf.xlu0
        %v285 = vpop.trf.xlu0
        %v286 = vpop.trf.xlu0
        %v287 = vpop.trf.xlu0
        %vm288 = vcmask 31744
        %v290 = vsel %vm288, %v240, 0
        %v293 = vsel %vm288, %v241, 0
        %v296 = vsel %vm288, %v242, 0
        %v299 = vsel %vm288, %v243, 0
        %v302 = vsel %vm288, %v244, 0
        %v305 = vsel %vm288, %v245, 0
        %v308 = vsel %vm288, %v246, 0
        %v311 = vsel %vm288, %v247, 0
        %v314 = vsel %vm288, %v248, 0
        %v317 = vsel %vm288, %v249, 0
        %v320 = vsel %vm288, %v250, 0
        %v323 = vsel %vm288, %v251, 0
        %v326 = vsel %vm288, %v252, 0
        %v329 = vsel %vm288, %v253, 0
        %v332 = vsel %vm288, %v254, 0
        %v335 = vsel %vm288, %v255, 0
        %v338 = vsel %vm288, %v272, 0
        %v341 = vsel %vm288, %v273, 0
        %v344 = vsel %vm288, %v274, 0
        %v347 = vsel %vm288, %v275, 0
        %v350 = vsel %vm288, %v276, 0
        %v353 = vsel %vm288, %v277, 0
        %v356 = vsel %vm288, %v278, 0
        %v359 = vsel %vm288, %v279, 0
        %v362 = vsel %vm288, %v280, 0
        %v365 = vsel %vm288, %v281, 0
        %v368 = vsel %vm288, %v282, 0
        %v371 = vsel %vm288, %v283, 0
        %v374 = vsel %vm288, %v284, 0
        %v377 = vsel %vm288, %v285, 0
        %v380 = vsel %vm288, %v286, 0
        %v383 = vsel %vm288, %v287, 0
        %vm385 = vcmask 1043456
        %v387 = vsel %vm385, %v219, 0
        %389 = vmatprep.subr.mxu0 0.0
        %390 = vmatpush1.msra.mxu0 %v387
        %391 = vmatprep.subr.mxu0 0.0
        %392 = vmatpush1.msra.mxu0 0.0
        %393 = vmatprep.subr.mxu0 0.0
        %394 = vmatpush1.msra.mxu0 0.0
        %395 = vmatprep.subr.mxu0 0.0
        %396 = vmatpush1.msra.mxu0 0.0
        %397 = vmatprep.subr.mxu0 0.0
        %398 = vmatpush1.msra.mxu0 0.0
        %399 = vmatprep.subr.mxu0 0.0
        %400 = vmatpush1.msra.mxu0 0.0
        %401 = vmatprep.subr.mxu0 0.0
        %402 = vmatpush1.msra.mxu0 0.0
        %403 = vmatprep.subr.mxu0 0.0
        %404 = vmatpush1.msra.mxu0 0.0
        %405 = vmatprep.subr.mxu0 0.0
        %406 = vmatpush1.msra.mxu0 0.0
        %407 = vmatprep.subr.mxu0 0.0
        %408 = vmatpush1.msra.mxu0 0.0
        %409 = vmatprep.subr.mxu0 0.0
        %410 = vmatpush1.msra.mxu0 0.0
        %411 = vmatprep.subr.mxu0 0.0
        %412 = vmatpush1.msra.mxu0 0.0
        %413 = vmatprep.subr.mxu0 0.0
        %414 = vmatpush1.msra.mxu0 0.0
        %415 = vmatprep.subr.mxu0 0.0
        %416 = vmatpush1.msra.mxu0 0.0
        %417 = vmatprep.subr.mxu0 0.0
        %418 = vmatpush1.msra.mxu0 0.0
        %419 = vmatprep.subr.mxu0 0.0
        %420 = vmatpush1.msra.mxu0 0.0
        %421 = vmatprep.subr.mxu0 0.0
        %422 = vmatpush1.msra.mxu0 0.0
        %423 = vmatprep.subr.mxu0 0.0
        %424 = vmatpush1.msra.mxu0 0.0
        %425 = vmatprep.subr.mxu0 0.0
        %426 = vmatpush1.msra.mxu0 0.0
        %427 = vmatprep.subr.mxu0 0.0
        %428 = vmatpush1.msra.mxu0 0.0
        %429 = vmatprep.subr.mxu0 0.0
        %430 = vmatpush1.msra.mxu0 0.0
        %431 = vmatprep.subr.mxu0 0.0
        %432 = vmatpush1.msra.mxu0 0.0
        %433 = vmatprep.subr.mxu0 0.0
        %434 = vmatpush1.msra.mxu0 0.0
        %435 = vmatprep.subr.mxu0 0.0
        %436 = vmatpush1.msra.mxu0 0.0
        %437 = vmatprep.subr.mxu0 0.0
        %438 = vmatpush1.msra.mxu0 0.0
        %439 = vmatprep.subr.mxu0 0.0
        %440 = vmatpush1.msra.mxu0 0.0
        %441 = vmatprep.subr.mxu0 0.0
        %442 = vmatpush1.msra.mxu0 0.0
        %443 = vmatprep.subr.mxu0 0.0
        %444 = vmatpush1.msra.mxu0 0.0
        %445 = vmatprep.subr.mxu0 0.0
        %446 = vmatpush1.msra.mxu0 0.0
        %447 = vmatprep.subr.mxu0 0.0
        %448 = vmatpush1.msra.mxu0 0.0
        %449 = vmatprep.subr.mxu0 0.0
        %450 = vmatpush1.msra.mxu0 0.0
        %451 = vmatprep.subr.mxu0 0.0
        %452 = vmatpush1.msra.mxu0 0.0
        %453 = vmatprep.mubr.f32.mxu0 0.0
        %454 = vmatmul.mubr.f32.gmra.mrb[0].mxu0 %v290
        %v455 = vpop.f32.mrb[0].mxu0
        %v456 = vadd.f32 0.0, %v455
        %v457 = vpop.f32.mrb[0].mxu0
        %458 = vmatprep.mubr.f32.mxu0 0.0
        %459 = vmatmul.mubr.f32.gmra.mrb[0].mxu0 %v293
        %v460 = vpop.f32.mrb[0].mxu0
        %v461 = vadd.f32 0.0, %v460
        %v462 = vpop.f32.mrb[0].mxu0
        %463 = vmatprep.mubr.f32.mxu0 0.0
        %464 = vmatmul.mubr.f32.gmra.mrb[0].mxu0 %v296
        %v465 = vpop.f32.mrb[0].mxu0
        %v466 = vadd.f32 0.0, %v465
        %v467 = vpop.f32.mrb[0].mxu0
        %468 = vmatprep.mubr.f32.mxu0 0.0
        %469 = vmatmul.mubr.f32.gmra.mrb[0].mxu0 %v299
        %v470 = vpop.f32.mrb[0].mxu0
        %v471 = vadd.f32 0.0, %v470
        %v472 = vpop.f32.mrb[0].mxu0
        %473 = vmatprep.mubr.f32.mxu0 0.0
        %474 = vmatmul.mubr.f32.gmra.mrb[0].mxu0 %v302
        %v475 = vpop.f32.mrb[0].mxu0
        %v476 = vadd.f32 0.0, %v475
        %v477 = vpop.f32.mrb[0].mxu0
        %478 = vmatprep.mubr.f32.mxu0 0.0
        %479 = vmatmul.mubr.f32.gmra.mrb[0].mxu0 %v305
        %v480 = vpop.f32.mrb[0].mxu0
        %v481 = vadd.f32 0.0, %v480
        %v482 = vpop.f32.mrb[0].mxu0
        %483 = vmatprep.mubr.f32.mxu0 0.0
        %484 = vmatmul.mubr.f32.gmra.mrb[0].mxu0 %v308
        %v485 = vpop.f32.mrb[0].mxu0
        %v486 = vadd.f32 0.0, %v485
        %v487 = vpop.f32.mrb[0].mxu0
        %488 = vmatprep.mubr.f32.mxu0 0.0
        %489 = vmatmul.mubr.f32.gmra.mrb[0].mxu0 %v311
        %v490 = vpop.f32.mrb[0].mxu0
        %v491 = vadd.f32 0.0, %v490
        %v492 = vpop.f32.mrb[0].mxu0
        %493 = vmatprep.mubr.f32.mxu0 0.0
        %494 = vmatmul.mubr.f32.gmra.mrb[0].mxu0 %v314
        %v495 = vpop.f32.mrb[0].mxu0
        %v496 = vadd.f32 0.0, %v495
        %v497 = vpop.f32.mrb[0].mxu0
        %498 = vmatprep.mubr.f32.mxu0 0.0
        %499 = vmatmul.mubr.f32.gmra.mrb[0].mxu0 %v317
        %v500 = vpop.f32.mrb[0].mxu0
        %v501 = vadd.f32 0.0, %v500
        %v502 = vpop.f32.mrb[0].mxu0
        %503 = vmatprep.mubr.f32.mxu0 0.0
        %504 = vmatmul.mubr.f32.gmra.mrb[0].mxu0 %v320
        %v505 = vpop.f32.mrb[0].mxu0
        %v506 = vadd.f32 0.0, %v505
        %v507 = vpop.f32.mrb[0].mxu0
        %508 = vmatprep.mubr.f32.mxu0 0.0
        %509 = vmatmul.mubr.f32.gmra.mrb[0].mxu0 %v323
        %v510 = vpop.f32.mrb[0].mxu0
        %v511 = vadd.f32 0.0, %v510
        %v512 = vpop.f32.mrb[0].mxu0
        %513 = vmatprep.mubr.f32.mxu0 0.0
        %514 = vmatmul.mubr.f32.gmra.mrb[0].mxu0 %v326
        %v515 = vpop.f32.mrb[0].mxu0
        %v516 = vadd.f32 0.0, %v515
        %v517 = vpop.f32.mrb[0].mxu0
        %518 = vmatprep.mubr.f32.mxu0 0.0
        %519 = vmatmul.mubr.f32.gmra.mrb[0].mxu0 %v329
        %v520 = vpop.f32.mrb[0].mxu0
        %v521 = vadd.f32 0.0, %v520
        %v522 = vpop.f32.mrb[0].mxu0
        %523 = vmatprep.mubr.f32.mxu0 0.0
        %524 = vmatmul.mubr.f32.gmra.mrb[0].mxu0 %v332
        %v525 = vpop.f32.mrb[0].mxu0
        %v526 = vadd.f32 0.0, %v525
        %v527 = vpop.f32.mrb[0].mxu0
        %528 = vmatprep.mubr.f32.mxu0 0.0
        %529 = vmatmul.mubr.f32.gmra.mrb[0].mxu0 %v335
        %v530 = vpop.f32.mrb[0].mxu0
        %v531 = vadd.f32 0.0, %v530
        %v532 = vpop.f32.mrb[0].mxu0
        %533 = vmatprep.mubr.f32.mxu0 0.0
        %534 = vmatmul.mubr.f32.gmra.mrb[0].mxu0 %v338
        %v535 = vpop.f32.mrb[0].mxu0
        %v536 = vadd.f32 0.0, %v535
        %v537 = vpop.f32.mrb[0].mxu0
        %538 = vmatprep.mubr.f32.mxu0 0.0
        %539 = vmatmul.mubr.f32.gmra.mrb[0].mxu0 %v341
        %v540 = vpop.f32.mrb[0].mxu0
        %v541 = vadd.f32 0.0, %v540
        %v542 = vpop.f32.mrb[0].mxu0
        %543 = vmatprep.mubr.f32.mxu0 0.0
        %544 = vmatmul.mubr.f32.gmra.mrb[0].mxu0 %v344
        %v545 = vpop.f32.mrb[0].mxu0
        %v546 = vadd.f32 0.0, %v545
        %v547 = vpop.f32.mrb[0].mxu0
        %548 = vmatprep.mubr.f32.mxu0 0.0
        %549 = vmatmul.mubr.f32.gmra.mrb[0].mxu0 %v347
        %v550 = vpop.f32.mrb[0].mxu0
        %v551 = vadd.f32 0.0, %v550
        %v552 = vpop.f32.mrb[0].mxu0
        %553 = vmatprep.mubr.f32.mxu0 0.0
        %554 = vmatmul.mubr.f32.gmra.mrb[0].mxu0 %v350
        %v555 = vpop.f32.mrb[0].mxu0
        %v556 = vadd.f32 0.0, %v555
        %v557 = vpop.f32.mrb[0].mxu0
        %558 = vmatprep.mubr.f32.mxu0 0.0
        %559 = vmatmul.mubr.f32.gmra.mrb[0].mxu0 %v353
        %v560 = vpop.f32.mrb[0].mxu0
        %v561 = vadd.f32 0.0, %v560
        %v562 = vpop.f32.mrb[0].mxu0
        %563 = vmatprep.mubr.f32.mxu0 0.0
        %564 = vmatmul.mubr.f32.gmra.mrb[0].mxu0 %v356
        %v565 = vpop.f32.mrb[0].mxu0
        %v566 = vadd.f32 0.0, %v565
        %v567 = vpop.f32.mrb[0].mxu0
        %568 = vmatprep.mubr.f32.mxu0 0.0
        %569 = vmatmul.mubr.f32.gmra.mrb[0].mxu0 %v359
        %v570 = vpop.f32.mrb[0].mxu0
        %v571 = vadd.f32 0.0, %v570
        %v572 = vpop.f32.mrb[0].mxu0
        %573 = vmatprep.mubr.f32.mxu0 0.0
        %574 = vmatmul.mubr.f32.gmra.mrb[0].mxu0 %v362
        %v575 = vpop.f32.mrb[0].mxu0
        %v576 = vadd.f32 0.0, %v575
        %v577 = vpop.f32.mrb[0].mxu0
        %578 = vmatprep.mubr.f32.mxu0 0.0
        %579 = vmatmul.mubr.f32.gmra.mrb[0].mxu0 %v365
        %v580 = vpop.f32.mrb[0].mxu0
        %v581 = vadd.f32 0.0, %v580
        %v582 = vpop.f32.mrb[0].mxu0
        %583 = vmatprep.mubr.f32.mxu0 0.0
        %584 = vmatmul.mubr.f32.gmra.mrb[0].mxu0 %v368
        %v585 = vpop.f32.mrb[0].mxu0
        %v586 = vadd.f32 0.0, %v585
        %v587 = vpop.f32.mrb[0].mxu0
        %588 = vmatprep.mubr.f32.mxu0 0.0
        %589 = vmatmul.mubr.f32.gmra.mrb[0].mxu0 %v371
        %v590 = vpop.f32.mrb[0].mxu0
        %v591 = vadd.f32 0.0, %v590
        %v592 = vpop.f32.mrb[0].mxu0
        %593 = vmatprep.mubr.f32.mxu0 0.0
        %594 = vmatmul.mubr.f32.gmra.mrb[0].mxu0 %v374
        %v595 = vpop.f32.mrb[0].mxu0
        %v596 = vadd.f32 0.0, %v595
        %v597 = vpop.f32.mrb[0].mxu0
        %598 = vmatprep.mubr.f32.mxu0 0.0
        %599 = vmatmul.mubr.f32.gmra.mrb[0].mxu0 %v377
        %v600 = vpop.f32.mrb[0].mxu0
        %v601 = vadd.f32 0.0, %v600
        %v602 = vpop.f32.mrb[0].mxu0
        %603 = vmatprep.mubr.f32.mxu0 0.0
        %604 = vmatmul.mubr.f32.gmra.mrb[0].mxu0 %v380
        %v605 = vpop.f32.mrb[0].mxu0
        %v606 = vadd.f32 0.0, %v605
        %v607 = vpop.f32.mrb[0].mxu0
        %608 = vmatprep.mubr.f32.mxu0 0.0
        %609 = vmatmul.mubr.f32.gmra.mrb[0].mxu0 %v383
        %v610 = vpop.f32.mrb[0].mxu0
        %v611 = vadd.f32 0.0, %v610
        %v612 = vpop.f32.mrb[0].mxu0
        %613 = vdwg.mxu0
        %vm614 = vcmask 261120
        %v615 = vsel %vm614, %v456, -inf
        %v616 = vsel %vm614, %v461, -inf
        %v617 = vmax.f32 %v615, %v616
        %v618 = vrot.slane %v617, 4
        %v619 = vmax.f32 %v617, %v618
        %v620 = vrot.slane %v619, 2
        %v621 = vmax.f32 %v619, %v620
        %v622 = vrot.slane %v621, 1
        %v623 = vmax.f32 %v621, %v622
        %v624 = vsel %vm614, %v466, -inf
        %v625 = vsel %vm614, %v471, -inf
        %v626 = vmax.f32 %v624, %v625
        %v627 = vrot.slane %v626, 4
        %v628 = vmax.f32 %v626, %v627
        %v629 = vrot.slane %v628, 2
        %v630 = vmax.f32 %v628, %v629
        %v631 = vrot.slane %v630, 1
        %v632 = vmax.f32 %v630, %v631
        %v633 = vsel %vm614, %v476, -inf
        %v634 = vsel %vm614, %v481, -inf
        %v635 = vmax.f32 %v633, %v634
        %v636 = vrot.slane %v635, 4
        %v637 = vmax.f32 %v635, %v636
        %v638 = vrot.slane %v637, 2
        %v639 = vmax.f32 %v637, %v638
        %v640 = vrot.slane %v639, 1
        %v641 = vmax.f32 %v639, %v640
        %v642 = vsel %vm614, %v486, -inf
        %v643 = vsel %vm614, %v491, -inf
        %v644 = vmax.f32 %v642, %v643
        %v645 = vrot.slane %v644, 4
        %v646 = vmax.f32 %v644, %v645
        %v647 = vrot.slane %v646, 2
        %v648 = vmax.f32 %v646, %v647
        %v649 = vrot.slane %v648, 1
        %v650 = vmax.f32 %v648, %v649
        %v651 = vsel %vm614, %v496, -inf
        %v652 = vsel %vm614, %v501, -inf
        %v653 = vmax.f32 %v651, %v652
        %v654 = vrot.slane %v653, 4
        %v655 = vmax.f32 %v653, %v654
        %v656 = vrot.slane %v655, 2
        %v657 = vmax.f32 %v655, %v656
        %v658 = vrot.slane %v657, 1
        %v659 = vmax.f32 %v657, %v658
        %v660 = vsel %vm614, %v506, -inf
        %v661 = vsel %vm614, %v511, -inf
        %v662 = vmax.f32 %v660, %v661
        %v663 = vrot.slane %v662, 4
        %v664 = vmax.f32 %v662, %v663
        %v665 = vrot.slane %v664, 2
        %v666 = vmax.f32 %v664, %v665
        %v667 = vrot.slane %v666, 1
        %v668 = vmax.f32 %v666, %v667
        %v669 = vsel %vm614, %v516, -inf
        %v670 = vsel %vm614, %v521, -inf
        %v671 = vmax.f32 %v669, %v670
        %v672 = vrot.slane %v671, 4
        %v673 = vmax.f32 %v671, %v672
        %v674 = vrot.slane %v673, 2
        %v675 = vmax.f32 %v673, %v674
        %v676 = vrot.slane %v675, 1
        %v677 = vmax.f32 %v675, %v676
        %v678 = vsel %vm614, %v526, -inf
        %v679 = vsel %vm614, %v531, -inf
        %v680 = vmax.f32 %v678, %v679
        %v681 = vrot.slane %v680, 4
        %v682 = vmax.f32 %v680, %v681
        %v683 = vrot.slane %v682, 2
        %v684 = vmax.f32 %v682, %v683
        %v685 = vrot.slane %v684, 1
        %v686 = vmax.f32 %v684, %v685
        %v687 = vsel %vm614, %v536, -inf
        %v688 = vsel %vm614, %v541, -inf
        %v689 = vmax.f32 %v687, %v688
        %v690 = vrot.slane %v689, 4
        %v691 = vmax.f32 %v689, %v690
        %v692 = vrot.slane %v691, 2
        %v693 = vmax.f32 %v691, %v692
        %v694 = vrot.slane %v693, 1
        %v695 = vmax.f32 %v693, %v694
        %v696 = vsel %vm614, %v546, -inf
        %v697 = vsel %vm614, %v551, -inf
        %v698 = vmax.f32 %v696, %v697
        %v699 = vrot.slane %v698, 4
        %v700 = vmax.f32 %v698, %v699
        %v701 = vrot.slane %v700, 2
        %v702 = vmax.f32 %v700, %v701
        %v703 = vrot.slane %v702, 1
        %v704 = vmax.f32 %v702, %v703
        %v705 = vsel %vm614, %v556, -inf
        %v706 = vsel %vm614, %v561, -inf
        %v707 = vmax.f32 %v705, %v706
        %v708 = vrot.slane %v707, 4
        %v709 = vmax.f32 %v707, %v708
        %v710 = vrot.slane %v709, 2
        %v711 = vmax.f32 %v709, %v710
        %v712 = vrot.slane %v711, 1
        %v713 = vmax.f32 %v711, %v712
        %v714 = vsel %vm614, %v566, -inf
        %v715 = vsel %vm614, %v571, -inf
        %v716 = vmax.f32 %v714, %v715
        %v717 = vrot.slane %v716, 4
        %v718 = vmax.f32 %v716, %v717
        %v719 = vrot.slane %v718, 2
        %v720 = vmax.f32 %v718, %v719
        %v721 = vrot.slane %v720, 1
        %v722 = vmax.f32 %v720, %v721
        %v723 = vsel %vm614, %v576, -inf
        %v724 = vsel %vm614, %v581, -inf
        %v725 = vmax.f32 %v723, %v724
        %v726 = vrot.slane %v725, 4
        %v727 = vmax.f32 %v725, %v726
        %v728 = vrot.slane %v727, 2
        %v729 = vmax.f32 %v727, %v728
        %v730 = vrot.slane %v729, 1
        %v731 = vmax.f32 %v729, %v730
        %v732 = vsel %vm614, %v586, -inf
        %v733 = vsel %vm614, %v591, -inf
        %v734 = vmax.f32 %v732, %v733
        %v735 = vrot.slane %v734, 4
        %v736 = vmax.f32 %v734, %v735
        %v737 = vrot.slane %v736, 2
        %v738 = vmax.f32 %v736, %v737
        %v739 = vrot.slane %v738, 1
        %v740 = vmax.f32 %v738, %v739
        %v741 = vsel %vm614, %v596, -inf
        %v742 = vsel %vm614, %v601, -inf
        %v743 = vmax.f32 %v741, %v742
        %v744 = vrot.slane %v743, 4
        %v745 = vmax.f32 %v743, %v744
        %v746 = vrot.slane %v745, 2
        %v747 = vmax.f32 %v745, %v746
        %v748 = vrot.slane %v747, 1
        %v749 = vmax.f32 %v747, %v748
        %v750 = vsel %vm614, %v606, -inf
        %v751 = vsel %vm614, %v611, -inf
        %v752 = vmax.f32 %v750, %v751
        %v753 = vrot.slane %v752, 4
        %v754 = vmax.f32 %v752, %v753
        %v755 = vrot.slane %v754, 2
        %v756 = vmax.f32 %v754, %v755
        %v757 = vrot.slane %v756, 1
        %v758 = vmax.f32 %v756, %v757
        %vm775 = vcmask 1041409
        %v776 = vsel %vm775, %v632, %v623
        %vm777 = vcmask 1042434
        %v778 = vsel %vm777, %v641, %v776
        %vm779 = vcmask 1043459
        %v780 = vsel %vm779, %v650, %v778
        %vm781 = vcmask 1044484
        %v782 = vsel %vm781, %v659, %v780
        %vm783 = vcmask 1045509
        %v784 = vsel %vm783, %v668, %v782
        %vm785 = vcmask 1046534
        %v786 = vsel %vm785, %v677, %v784
        %vm787 = vcmask 1047559
        %v788 = vsel %vm787, %v686, %v786
        %v789 = vsel %vm775, %v704, %v695
        %v790 = vsel %vm777, %v713, %v789
        %v791 = vsel %vm779, %v722, %v790
        %v792 = vsel %vm781, %v731, %v791
        %v793 = vsel %vm783, %v740, %v792
        %v794 = vsel %vm785, %v749, %v793
        %v795 = vsel %vm787, %v758, %v794
        %798 = vst.msk [vmem:[#allocation2] sm:$0xff] %vm614, %v788
        %799 = vst.msk [vmem:[#allocation2 + $0x8] sm:$0xff] %vm614, %v795
        %v800 = vld [vmem:[%s191 + $0x8] sm:$0xff]
        %v802 = vcombine.high %v800, %v800
        %804 = vxpose.xlu0.b32.start [1/16] %v800, 128
        %805 = vxpose.xlu0.b32.cont [2/16] 0.0, 128
        %806 = vxpose.xlu0.b32.cont [3/16] 0.0, 128
        %807 = vxpose.xlu0.b32.cont [4/16] 0.0, 128
        %808 = vxpose.xlu0.b32.cont [5/16] 0.0, 128
        %809 = vxpose.xlu0.b32.cont [6/16] 0.0, 128
        %810 = vxpose.xlu0.b32.cont [7/16] 0.0, 128
        %811 = vxpose.xlu0.b32.cont [8/16] 0.0, 128
        %812 = vxpose.xlu0.b32.cont [9/16] 0.0, 128
        %813 = vxpose.xlu0.b32.cont [10/16] 0.0, 128
        %814 = vxpose.xlu0.b32.cont [11/16] 0.0, 128
        %815 = vxpose.xlu0.b32.cont [12/16] 0.0, 128
        %816 = vxpose.xlu0.b32.cont [13/16] 0.0, 128
        %817 = vxpose.xlu0.b32.cont [14/16] 0.0, 128
        %818 = vxpose.xlu0.b32.cont [15/16] 0.0, 128
        %819 = vxpose.xlu0.b32.end [16/16] 0.0, 128
        %v820 = vpop.trf.xlu0
        %v821 = vpop.trf.xlu0
        %v822 = vpop.trf.xlu0
        %v823 = vpop.trf.xlu0
        %v824 = vpop.trf.xlu0
        %v825 = vpop.trf.xlu0
        %v826 = vpop.trf.xlu0
        %v827 = vpop.trf.xlu0
        %v828 = vpop.trf.xlu0
        %v829 = vpop.trf.xlu0
        %v830 = vpop.trf.xlu0
        %v831 = vpop.trf.xlu0
        %v832 = vpop.trf.xlu0
        %v833 = vpop.trf.xlu0
        %v834 = vpop.trf.xlu0
        %v835 = vpop.trf.xlu0
        %836 = vxpose.xlu0.b32.start [1/16] %v802, 128
        %837 = vxpose.xlu0.b32.cont [2/16] 0.0, 128
        %838 = vxpose.xlu0.b32.cont [3/16] 0.0, 128
        %839 = vxpose.xlu0.b32.cont [4/16] 0.0, 128
        %840 = vxpose.xlu0.b32.cont [5/16] 0.0, 128
        %841 = vxpose.xlu0.b32.cont [6/16] 0.0, 128
        %842 = vxpose.xlu0.b32.cont [7/16] 0.0, 128
        %843 = vxpose.xlu0.b32.cont [8/16] 0.0, 128
        %844 = vxpose.xlu0.b32.cont [9/16] 0.0, 128
        %845 = vxpose.xlu0.b32.cont [10/16] 0.0, 128
        %846 = vxpose.xlu0.b32.cont [11/16] 0.0, 128
        %847 = vxpose.xlu0.b32.cont [12/16] 0.0, 128
        %848 = vxpose.xlu0.b32.cont [13/16] 0.0, 128
        %849 = vxpose.xlu0.b32.cont [14/16] 0.0, 128
        %850 = vxpose.xlu0.b32.cont [15/16] 0.0, 128
        %851 = vxpose.xlu0.b32.end [16/16] 0.0, 128
        %v852 = vpop.trf.xlu0
        %v853 = vpop.trf.xlu0
        %v854 = vpop.trf.xlu0
        %v855 = vpop.trf.xlu0
        %v856 = vpop.trf.xlu0
        %v857 = vpop.trf.xlu0
        %v858 = vpop.trf.xlu0
        %v859 = vpop.trf.xlu0
        %v860 = vpop.trf.xlu0
        %v861 = vpop.trf.xlu0
        %v862 = vpop.trf.xlu0
        %v863 = vpop.trf.xlu0
        %v864 = vpop.trf.xlu0
        %v865 = vpop.trf.xlu0
        %v866 = vpop.trf.xlu0
        %v867 = vpop.trf.xlu0
        %v869 = vsel %vm288, %v820, 0
        %v872 = vsel %vm288, %v821, 0
        %v875 = vsel %vm288, %v822, 0
        %v878 = vsel %vm288, %v823, 0
        %v881 = vsel %vm288, %v824, 0
        %v884 = vsel %vm288, %v825, 0
        %v887 = vsel %vm288, %v826, 0
        %v890 = vsel %vm288, %v827, 0
        %v893 = vsel %vm288, %v828, 0
        %v896 = vsel %vm288, %v829, 0
        %v899 = vsel %vm288, %v830, 0
        %v902 = vsel %vm288, %v831, 0
        %v905 = vsel %vm288, %v832, 0
        %v908 = vsel %vm288, %v833, 0
        %v911 = vsel %vm288, %v834, 0
        %v914 = vsel %vm288, %v835, 0
        %v917 = vsel %vm288, %v852, 0
        %v920 = vsel %vm288, %v853, 0
        %v923 = vsel %vm288, %v854, 0
        %v926 = vsel %vm288, %v855, 0
        %v929 = vsel %vm288, %v856, 0
        %v932 = vsel %vm288, %v857, 0
        %v935 = vsel %vm288, %v858, 0
        %v938 = vsel %vm288, %v859, 0
        %v941 = vsel %vm288, %v860, 0
        %v944 = vsel %vm288, %v861, 0
        %v947 = vsel %vm288, %v862, 0
        %v950 = vsel %vm288, %v863, 0
        %v953 = vsel %vm288, %v864, 0
        %v956 = vsel %vm288, %v865, 0
        %v959 = vsel %vm288, %v866, 0
        %v962 = vsel %vm288, %v867, 0
        %964 = vmatprep.subr.mxu0 0.0
        %965 = vmatpush1.msra.mxu0 %v387
        %966 = vmatprep.subr.mxu0 0.0
        %967 = vmatpush1.msra.mxu0 0.0
        %968 = vmatprep.subr.mxu0 0.0
        %969 = vmatpush1.msra.mxu0 0.0
        %970 = vmatprep.subr.mxu0 0.0
        %971 = vmatpush1.msra.mxu0 0.0
        %972 = vmatprep.subr.mxu0 0.0
        %973 = vmatpush1.msra.mxu0 0.0
        %974 = vmatprep.subr.mxu0 0.0
        %975 = vmatpush1.msra.mxu0 0.0
        %976 = vmatprep.subr.mxu0 0.0
        %977 = vmatpush1.msra.mxu0 0.0
        %978 = vmatprep.subr.mxu0 0.0
        %979 = vmatpush1.msra.mxu0 0.0
        %980 = vmatprep.subr.mxu0 0.0
        %981 = vmatpush1.msra.mxu0 0.0
        %982 = vmatprep.subr.mxu0 0.0
        %983 = vmatpush1.msra.mxu0 0.0
        %984 = vmatprep.subr.mxu0 0.0
        %985 = vmatpush1.msra.mxu0 0.0
        %986 = vmatprep.subr.mxu0 0.0
        %987 = vmatpush1.msra.mxu0 0.0
        %988 = vmatprep.subr.mxu0 0.0
        %989 = vmatpush1.msra.mxu0 0.0
        %990 = vmatprep.subr.mxu0 0.0
        %991 = vmatpush1.msra.mxu0 0.0
        %992 = vmatprep.subr.mxu0 0.0
        %993 = vmatpush1.msra.mxu0 0.0
        %994 = vmatprep.subr.mxu0 0.0
        %995 = vmatpush1.msra.mxu0 0.0
        %996 = vmatprep.subr.mxu0 0.0
        %997 = vmatpush1.msra.mxu0 0.0
        %998 = vmatprep.subr.mxu0 0.0
        %999 = vmatpush1.msra.mxu0 0.0
        %1000 = vmatprep.subr.mxu0 0.0
        %1001 = vmatpush1.msra.mxu0 0.0
        %1002 = vmatprep.subr.mxu0 0.0
        %1003 = vmatpush1.msra.mxu0 0.0
        %1004 = vmatprep.subr.mxu0 0.0
        %1005 = vmatpush1.msra.mxu0 0.0
        %1006 = vmatprep.subr.mxu0 0.0
        %1007 = vmatpush1.msra.mxu0 0.0
        %1008 = vmatprep.subr.mxu0 0.0
        %1009 = vmatpush1.msra.mxu0 0.0
        %1010 = vmatprep.subr.mxu0 0.0
        %1011 = vmatpush1.msra.mxu0 0.0
        %1012 = vmatprep.subr.mxu0 0.0
        %1013 = vmatpush1.msra.mxu0 0.0
        %1014 = vmatprep.subr.mxu0 0.0
        %1015 = vmatpush1.msra.mxu0 0.0
        %1016 = vmatprep.subr.mxu0 0.0
        %1017 = vmatpush1.msra.mxu0 0.0
        %1018 = vmatprep.subr.mxu0 0.0
        %1019 = vmatpush1.msra.mxu0 0.0
        %1020 = vmatprep.subr.mxu0 0.0
        %1021 = vmatpush1.msra.mxu0 0.0
        %1022 = vmatprep.subr.mxu0 0.0
        %1023 = vmatpush1.msra.mxu0 0.0
        %1024 = vmatprep.subr.mxu0 0.0
        %1025 = vmatpush1.msra.mxu0 0.0
        %1026 = vmatprep.subr.mxu0 0.0
        %1027 = vmatpush1.msra.mxu0 0.0
        %1028 = vmatprep.mubr.f32.mxu0 0.0
        %1029 = vmatmul.mubr.f32.gmra.mrb[0].mxu0 %v869
        %v1030 = vpop.f32.mrb[0].mxu0
        %v1031 = vadd.f32 0.0, %v1030
        %v1032 = vpop.f32.mrb[0].mxu0
        %1033 = vmatprep.mubr.f32.mxu0 0.0
        %1034 = vmatmul.mubr.f32.gmra.mrb[0].mxu0 %v872
        %v1035 = vpop.f32.mrb[0].mxu0
        %v1036 = vadd.f32 0.0, %v1035
        %v1037 = vpop.f32.mrb[0].mxu0
        %1038 = vmatprep.mubr.f32.mxu0 0.0
        %1039 = vmatmul.mubr.f32.gmra.mrb[0].mxu0 %v875
        %v1040 = vpop.f32.mrb[0].mxu0
        %v1041 = vadd.f32 0.0, %v1040
        %v1042 = vpop.f32.mrb[0].mxu0
        %1043 = vmatprep.mubr.f32.mxu0 0.0
        %1044 = vmatmul.mubr.f32.gmra.mrb[0].mxu0 %v878
        %v1045 = vpop.f32.mrb[0].mxu0
        %v1046 = vadd.f32 0.0, %v1045
        %v1047 = vpop.f32.mrb[0].mxu0
        %1048 = vmatprep.mubr.f32.mxu0 0.0
        %1049 = vmatmul.mubr.f32.gmra.mrb[0].mxu0 %v881
        %v1050 = vpop.f32.mrb[0].mxu0
        %v1051 = vadd.f32 0.0, %v1050
        %v1052 = vpop.f32.mrb[0].mxu0
        %1053 = vmatprep.mubr.f32.mxu0 0.0
        %1054 = vmatmul.mubr.f32.gmra.mrb[0].mxu0 %v884
        %v1055 = vpop.f32.mrb[0].mxu0
        %v1056 = vadd.f32 0.0, %v1055
        %v1057 = vpop.f32.mrb[0].mxu0
        %1058 = vmatprep.mubr.f32.mxu0 0.0
        %1059 = vmatmul.mubr.f32.gmra.mrb[0].mxu0 %v887
        %v1060 = vpop.f32.mrb[0].mxu0
        %v1061 = vadd.f32 0.0, %v1060
        %v1062 = vpop.f32.mrb[0].mxu0
        %1063 = vmatprep.mubr.f32.mxu0 0.0
        %1064 = vmatmul.mubr.f32.gmra.mrb[0].mxu0 %v890
        %v1065 = vpop.f32.mrb[0].mxu0
        %v1066 = vadd.f32 0.0, %v1065
        %v1067 = vpop.f32.mrb[0].mxu0
        %1068 = vmatprep.mubr.f32.mxu0 0.0
        %1069 = vmatmul.mubr.f32.gmra.mrb[0].mxu0 %v893
        %v1070 = vpop.f32.mrb[0].mxu0
        %v1071 = vadd.f32 0.0, %v1070
        %v1072 = vpop.f32.mrb[0].mxu0
        %1073 = vmatprep.mubr.f32.mxu0 0.0
        %1074 = vmatmul.mubr.f32.gmra.mrb[0].mxu0 %v896
        %v1075 = vpop.f32.mrb[0].mxu0
        %v1076 = vadd.f32 0.0, %v1075
        %v1077 = vpop.f32.mrb[0].mxu0
        %1078 = vmatprep.mubr.f32.mxu0 0.0
        %1079 = vmatmul.mubr.f32.gmra.mrb[0].mxu0 %v899
        %v1080 = vpop.f32.mrb[0].mxu0
        %v1081 = vadd.f32 0.0, %v1080
        %v1082 = vpop.f32.mrb[0].mxu0
        %1083 = vmatprep.mubr.f32.mxu0 0.0
        %1084 = vmatmul.mubr.f32.gmra.mrb[0].mxu0 %v902
        %v1085 = vpop.f32.mrb[0].mxu0
        %v1086 = vadd.f32 0.0, %v1085
        %v1087 = vpop.f32.mrb[0].mxu0
        %1088 = vmatprep.mubr.f32.mxu0 0.0
        %1089 = vmatmul.mubr.f32.gmra.mrb[0].mxu0 %v905
        %v1090 = vpop.f32.mrb[0].mxu0
        %v1091 = vadd.f32 0.0, %v1090
        %v1092 = vpop.f32.mrb[0].mxu0
        %1093 = vmatprep.mubr.f32.mxu0 0.0
        %1094 = vmatmul.mubr.f32.gmra.mrb[0].mxu0 %v908
        %v1095 = vpop.f32.mrb[0].mxu0
        %v1096 = vadd.f32 0.0, %v1095
        %v1097 = vpop.f32.mrb[0].mxu0
        %1098 = vmatprep.mubr.f32.mxu0 0.0
        %1099 = vmatmul.mubr.f32.gmra.mrb[0].mxu0 %v911
        %v1100 = vpop.f32.mrb[0].mxu0
        %v1101 = vadd.f32 0.0, %v1100
        %v1102 = vpop.f32.mrb[0].mxu0
        %1103 = vmatprep.mubr.f32.mxu0 0.0
        %1104 = vmatmul.mubr.f32.gmra.mrb[0].mxu0 %v914
        %v1105 = vpop.f32.mrb[0].mxu0
        %v1106 = vadd.f32 0.0, %v1105
        %v1107 = vpop.f32.mrb[0].mxu0
        %1108 = vmatprep.mubr.f32.mxu0 0.0
        %1109 = vmatmul.mubr.f32.gmra.mrb[0].mxu0 %v917
        %v1110 = vpop.f32.mrb[0].mxu0
        %v1111 = vadd.f32 0.0, %v1110
        %v1112 = vpop.f32.mrb[0].mxu0
        %1113 = vmatprep.mubr.f32.mxu0 0.0
        %1114 = vmatmul.mubr.f32.gmra.mrb[0].mxu0 %v920
        %v1115 = vpop.f32.mrb[0].mxu0
        %v1116 = vadd.f32 0.0, %v1115
        %v1117 = vpop.f32.mrb[0].mxu0
        %1118 = vmatprep.mubr.f32.mxu0 0.0
        %1119 = vmatmul.mubr.f32.gmra.mrb[0].mxu0 %v923
        %v1120 = vpop.f32.mrb[0].mxu0
        %v1121 = vadd.f32 0.0, %v1120
        %v1122 = vpop.f32.mrb[0].mxu0
        %1123 = vmatprep.mubr.f32.mxu0 0.0
        %1124 = vmatmul.mubr.f32.gmra.mrb[0].mxu0 %v926
        %v1125 = vpop.f32.mrb[0].mxu0
        %v1126 = vadd.f32 0.0, %v1125
        %v1127 = vpop.f32.mrb[0].mxu0
        %1128 = vmatprep.mubr.f32.mxu0 0.0
        %1129 = vmatmul.mubr.f32.gmra.mrb[0].mxu0 %v929
        %v1130 = vpop.f32.mrb[0].mxu0
        %v1131 = vadd.f32 0.0, %v1130
        %v1132 = vpop.f32.mrb[0].mxu0
        %1133 = vmatprep.mubr.f32.mxu0 0.0
        %1134 = vmatmul.mubr.f32.gmra.mrb[0].mxu0 %v932
        %v1135 = vpop.f32.mrb[0].mxu0
        %v1136 = vadd.f32 0.0, %v1135
        %v1137 = vpop.f32.mrb[0].mxu0
        %1138 = vmatprep.mubr.f32.mxu0 0.0
        %1139 = vmatmul.mubr.f32.gmra.mrb[0].mxu0 %v935
        %v1140 = vpop.f32.mrb[0].mxu0
        %v1141 = vadd.f32 0.0, %v1140
        %v1142 = vpop.f32.mrb[0].mxu0
        %1143 = vmatprep.mubr.f32.mxu0 0.0
        %1144 = vmatmul.mubr.f32.gmra.mrb[0].mxu0 %v938
        %v1145 = vpop.f32.mrb[0].mxu0
        %v1146 = vadd.f32 0.0, %v1145
        %v1147 = vpop.f32.mrb[0].mxu0
        %1148 = vmatprep.mubr.f32.mxu0 0.0
        %1149 = vmatmul.mubr.f32.gmra.mrb[0].mxu0 %v941
        %v1150 = vpop.f32.mrb[0].mxu0
        %v1151 = vadd.f32 0.0, %v1150
        %v1152 = vpop.f32.mrb[0].mxu0
        %1153 = vmatprep.mubr.f32.mxu0 0.0
        %1154 = vmatmul.mubr.f32.gmra.mrb[0].mxu0 %v944
        %v1155 = vpop.f32.mrb[0].mxu0
        %v1156 = vadd.f32 0.0, %v1155
        %v1157 = vpop.f32.mrb[0].mxu0
        %1158 = vmatprep.mubr.f32.mxu0 0.0
        %1159 = vmatmul.mubr.f32.gmra.mrb[0].mxu0 %v947
        %v1160 = vpop.f32.mrb[0].mxu0
        %v1161 = vadd.f32 0.0, %v1160
        %v1162 = vpop.f32.mrb[0].mxu0
        %1163 = vmatprep.mubr.f32.mxu0 0.0
        %1164 = vmatmul.mubr.f32.gmra.mrb[0].mxu0 %v950
        %v1165 = vpop.f32.mrb[0].mxu0
        %v1166 = vadd.f32 0.0, %v1165
        %v1167 = vpop.f32.mrb[0].mxu0
        %1168 = vmatprep.mubr.f32.mxu0 0.0
        %1169 = vmatmul.mubr.f32.gmra.mrb[0].mxu0 %v953
        %v1170 = vpop.f32.mrb[0].mxu0
        %v1171 = vadd.f32 0.0, %v1170
        %v1172 = vpop.f32.mrb[0].mxu0
        %1173 = vmatprep.mubr.f32.mxu0 0.0
        %1174 = vmatmul.mubr.f32.gmra.mrb[0].mxu0 %v956
        %v1175 = vpop.f32.mrb[0].mxu0
        %v1176 = vadd.f32 0.0, %v1175
        %v1177 = vpop.f32.mrb[0].mxu0
        %1178 = vmatprep.mubr.f32.mxu0 0.0
        %1179 = vmatmul.mubr.f32.gmra.mrb[0].mxu0 %v959
        %v1180 = vpop.f32.mrb[0].mxu0
        %v1181 = vadd.f32 0.0, %v1180
        %v1182 = vpop.f32.mrb[0].mxu0
        %1183 = vmatprep.mubr.f32.mxu0 0.0
        %1184 = vmatmul.mubr.f32.gmra.mrb[0].mxu0 %v962
        %v1185 = vpop.f32.mrb[0].mxu0
        %v1186 = vadd.f32 0.0, %v1185
        %v1187 = vpop.f32.mrb[0].mxu0
        %1188 = vdwg.mxu0
        %v1189 = vsel %vm614, %v1031, -inf
        %v1190 = vsel %vm614, %v1036, -inf
        %v1191 = vmax.f32 %v1189, %v1190
        %v1192 = vrot.slane %v1191, 4
        %v1193 = vmax.f32 %v1191, %v1192
        %v1194 = vrot.slane %v1193, 2
        %v1195 = vmax.f32 %v1193, %v1194
        %v1196 = vrot.slane %v1195, 1
        %v1197 = vmax.f32 %v1195, %v1196
        %v1198 = vsel %vm614, %v1041, -inf
        %v1199 = vsel %vm614, %v1046, -inf
        %v1200 = vmax.f32 %v1198, %v1199
        %v1201 = vrot.slane %v1200, 4
        %v1202 = vmax.f32 %v1200, %v1201
        %v1203 = vrot.slane %v1202, 2
        %v1204 = vmax.f32 %v1202, %v1203
        %v1205 = vrot.slane %v1204, 1
        %v1206 = vmax.f32 %v1204, %v1205
        %v1207 = vsel %vm614, %v1051, -inf
        %v1208 = vsel %vm614, %v1056, -inf
        %v1209 = vmax.f32 %v1207, %v1208
        %v1210 = vrot.slane %v1209, 4
        %v1211 = vmax.f32 %v1209, %v1210
        %v1212 = vrot.slane %v1211, 2
        %v1213 = vmax.f32 %v1211, %v1212
        %v1214 = vrot.slane %v1213, 1
        %v1215 = vmax.f32 %v1213, %v1214
        %v1216 = vsel %vm614, %v1061, -inf
        %v1217 = vsel %vm614, %v1066, -inf
        %v1218 = vmax.f32 %v1216, %v1217
        %v1219 = vrot.slane %v1218, 4
        %v1220 = vmax.f32 %v1218, %v1219
        %v1221 = vrot.slane %v1220, 2
        %v1222 = vmax.f32 %v1220, %v1221
        %v1223 = vrot.slane %v1222, 1
        %v1224 = vmax.f32 %v1222, %v1223
        %v1225 = vsel %vm614, %v1071, -inf
        %v1226 = vsel %vm614, %v1076, -inf
        %v1227 = vmax.f32 %v1225, %v1226
        %v1228 = vrot.slane %v1227, 4
        %v1229 = vmax.f32 %v1227, %v1228
        %v1230 = vrot.slane %v1229, 2
        %v1231 = vmax.f32 %v1229, %v1230
        %v1232 = vrot.slane %v1231, 1
        %v1233 = vmax.f32 %v1231, %v1232
        %v1234 = vsel %vm614, %v1081, -inf
        %v1235 = vsel %vm614, %v1086, -inf
        %v1236 = vmax.f32 %v1234, %v1235
        %v1237 = vrot.slane %v1236, 4
        %v1238 = vmax.f32 %v1236, %v1237
        %v1239 = vrot.slane %v1238, 2
        %v1240 = vmax.f32 %v1238, %v1239
        %v1241 = vrot.slane %v1240, 1
        %v1242 = vmax.f32 %v1240, %v1241
        %v1243 = vsel %vm614, %v1091, -inf
        %v1244 = vsel %vm614, %v1096, -inf
        %v1245 = vmax.f32 %v1243, %v1244
        %v1246 = vrot.slane %v1245, 4
        %v1247 = vmax.f32 %v1245, %v1246
        %v1248 = vrot.slane %v1247, 2
        %v1249 = vmax.f32 %v1247, %v1248
        %v1250 = vrot.slane %v1249, 1
        %v1251 = vmax.f32 %v1249, %v1250
        %v1252 = vsel %vm614, %v1101, -inf
        %v1253 = vsel %vm614, %v1106, -inf
        %v1254 = vmax.f32 %v1252, %v1253
        %v1255 = vrot.slane %v1254, 4
        %v1256 = vmax.f32 %v1254, %v1255
        %v1257 = vrot.slane %v1256, 2
        %v1258 = vmax.f32 %v1256, %v1257
        %v1259 = vrot.slane %v1258, 1
        %v1260 = vmax.f32 %v1258, %v1259
        %v1261 = vsel %vm614, %v1111, -inf
        %v1262 = vsel %vm614, %v1116, -inf
        %v1263 = vmax.f32 %v1261, %v1262
        %v1264 = vrot.slane %v1263, 4
        %v1265 = vmax.f32 %v1263, %v1264
        %v1266 = vrot.slane %v1265, 2
        %v1267 = vmax.f32 %v1265, %v1266
        %v1268 = vrot.slane %v1267, 1
        %v1269 = vmax.f32 %v1267, %v1268
        %v1270 = vsel %vm614, %v1121, -inf
        %v1271 = vsel %vm614, %v1126, -inf
        %v1272 = vmax.f32 %v1270, %v1271
        %v1273 = vrot.slane %v1272, 4
        %v1274 = vmax.f32 %v1272, %v1273
        %v1275 = vrot.slane %v1274, 2
        %v1276 = vmax.f32 %v1274, %v1275
        %v1277 = vrot.slane %v1276, 1
        %v1278 = vmax.f32 %v1276, %v1277
        %v1279 = vsel %vm614, %v1131, -inf
        %v1280 = vsel %vm614, %v1136, -inf
        %v1281 = vmax.f32 %v1279, %v1280
        %v1282 = vrot.slane %v1281, 4
        %v1283 = vmax.f32 %v1281, %v1282
        %v1284 = vrot.slane %v1283, 2
        %v1285 = vmax.f32 %v1283, %v1284
        %v1286 = vrot.slane %v1285, 1
        %v1287 = vmax.f32 %v1285, %v1286
        %v1288 = vsel %vm614, %v1141, -inf
        %v1289 = vsel %vm614, %v1146, -inf
        %v1290 = vmax.f32 %v1288, %v1289
        %v1291 = vrot.slane %v1290, 4
        %v1292 = vmax.f32 %v1290, %v1291
        %v1293 = vrot.slane %v1292, 2
        %v1294 = vmax.f32 %v1292, %v1293
        %v1295 = vrot.slane %v1294, 1
        %v1296 = vmax.f32 %v1294, %v1295
        %v1297 = vsel %vm614, %v1151, -inf
        %v1298 = vsel %vm614, %v1156, -inf
        %v1299 = vmax.f32 %v1297, %v1298
        %v1300 = vrot.slane %v1299, 4
        %v1301 = vmax.f32 %v1299, %v1300
        %v1302 = vrot.slane %v1301, 2
        %v1303 = vmax.f32 %v1301, %v1302
        %v1304 = vrot.slane %v1303, 1
        %v1305 = vmax.f32 %v1303, %v1304
        %v1306 = vsel %vm614, %v1161, -inf
        %v1307 = vsel %vm614, %v1166, -inf
        %v1308 = vmax.f32 %v1306, %v1307
        %v1309 = vrot.slane %v1308, 4
        %v1310 = vmax.f32 %v1308, %v1309
        %v1311 = vrot.slane %v1310, 2
        %v1312 = vmax.f32 %v1310, %v1311
        %v1313 = vrot.slane %v1312, 1
        %v1314 = vmax.f32 %v1312, %v1313
        %v1315 = vsel %vm614, %v1171, -inf
        %v1316 = vsel %vm614, %v1176, -inf
        %v1317 = vmax.f32 %v1315, %v1316
        %v1318 = vrot.slane %v1317, 4
        %v1319 = vmax.f32 %v1317, %v1318
        %v1320 = vrot.slane %v1319, 2
        %v1321 = vmax.f32 %v1319, %v1320
        %v1322 = vrot.slane %v1321, 1
        %v1323 = vmax.f32 %v1321, %v1322
        %v1324 = vsel %vm614, %v1181, -inf
        %v1325 = vsel %vm614, %v1186, -inf
        %v1326 = vmax.f32 %v1324, %v1325
        %v1327 = vrot.slane %v1326, 4
        %v1328 = vmax.f32 %v1326, %v1327
        %v1329 = vrot.slane %v1328, 2
        %v1330 = vmax.f32 %v1328, %v1329
        %v1331 = vrot.slane %v1330, 1
        %v1332 = vmax.f32 %v1330, %v1331
        %v1349 = vsel %vm775, %v1206, %v1197
        %v1350 = vsel %vm777, %v1215, %v1349
        %v1351 = vsel %vm779, %v1224, %v1350
        %v1352 = vsel %vm781, %v1233, %v1351
        %v1353 = vsel %vm783, %v1242, %v1352
        %v1354 = vsel %vm785, %v1251, %v1353
        %v1355 = vsel %vm787, %v1260, %v1354
        %v1356 = vsel %vm775, %v1278, %v1269
        %v1357 = vsel %vm777, %v1287, %v1356
        %v1358 = vsel %vm779, %v1296, %v1357
        %v1359 = vsel %vm781, %v1305, %v1358
        %v1360 = vsel %vm783, %v1314, %v1359
        %v1361 = vsel %vm785, %v1323, %v1360
        %v1362 = vsel %vm787, %v1332, %v1361
        %1365 = vst.msk [vmem:[#allocation2 + $0x10] sm:$0xff] %vm614, %v1355
        %1366 = vst.msk [vmem:[#allocation2 + $0x18] sm:$0xff] %vm614, %v1362
        %v1367 = vld [vmem:[%s191 + $0x10] sm:$0xff]
        %v1369 = vcombine.high %v1367, %v1367
        %1371 = vxpose.xlu0.b32.start [1/16] %v1367, 128
        %1372 = vxpose.xlu0.b32.cont [2/16] 0.0, 128
        %1373 = vxpose.xlu0.b32.cont [3/16] 0.0, 128
        %1374 = vxpose.xlu0.b32.cont [4/16] 0.0, 128
        %1375 = vxpose.xlu0.b32.cont [5/16] 0.0, 128
        %1376 = vxpose.xlu0.b32.cont [6/16] 0.0, 128
        %1377 = vxpose.xlu0.b32.cont [7/16] 0.0, 128
        %1378 = vxpose.xlu0.b32.cont [8/16] 0.0, 128
        %1379 = vxpose.xlu0.b32.cont [9/16] 0.0, 128
        %1380 = vxpose.xlu0.b32.cont [10/16] 0.0, 128
        %1381 = vxpose.xlu0.b32.cont [11/16] 0.0, 128
        %1382 = vxpose.xlu0.b32.cont [12/16] 0.0, 128
        %1383 = vxpose.xlu0.b32.cont [13/16] 0.0, 128
        %1384 = vxpose.xlu0.b32.cont [14/16] 0.0, 128
        %1385 = vxpose.xlu0.b32.cont [15/16] 0.0, 128
        %1386 = vxpose.xlu0.b32.end [16/16] 0.0, 128
        %v1387 = vpop.trf.xlu0
        %v1388 = vpop.trf.xlu0
        %v1389 = vpop.trf.xlu0
        %v1390 = vpop.trf.xlu0
        %v1391 = vpop.trf.xlu0
        %v1392 = vpop.trf.xlu0
        %v1393 = vpop.trf.xlu0
        %v1394 = vpop.trf.xlu0
        %v1395 = vpop.trf.xlu0
        %v1396 = vpop.trf.xlu0
        %v1397 = vpop.trf.xlu0
        %v1398 = vpop.trf.xlu0
        %v1399 = vpop.trf.xlu0
        %v1400 = vpop.trf.xlu0
        %v1401 = vpop.trf.xlu0
        %v1402 = vpop.trf.xlu0
        %1403 = vxpose.xlu0.b32.start [1/16] %v1369, 128
        %1404 = vxpose.xlu0.b32.cont [2/16] 0.0, 128
        %1405 = vxpose.xlu0.b32.cont [3/16] 0.0, 128
        %1406 = vxpose.xlu0.b32.cont [4/16] 0.0, 128
        %1407 = vxpose.xlu0.b32.cont [5/16] 0.0, 128
        %1408 = vxpose.xlu0.b32.cont [6/16] 0.0, 128
        %1409 = vxpose.xlu0.b32.cont [7/16] 0.0, 128
        %1410 = vxpose.xlu0.b32.cont [8/16] 0.0, 128
        %1411 = vxpose.xlu0.b32.cont [9/16] 0.0, 128
        %1412 = vxpose.xlu0.b32.cont [10/16] 0.0, 128
        %1413 = vxpose.xlu0.b32.cont [11/16] 0.0, 128
        %1414 = vxpose.xlu0.b32.cont [12/16] 0.0, 128
        %1415 = vxpose.xlu0.b32.cont [13/16] 0.0, 128
        %1416 = vxpose.xlu0.b32.cont [14/16] 0.0, 128
        %1417 = vxpose.xlu0.b32.cont [15/16] 0.0, 128
        %1418 = vxpose.xlu0.b32.end [16/16] 0.0, 128
        %v1419 = vpop.trf.xlu0
        %v1420 = vpop.trf.xlu0
        %v1421 = vpop.trf.xlu0
        %v1422 = vpop.trf.xlu0
        %v1423 = vpop.trf.xlu0
        %v1424 = vpop.trf.xlu0
        %v1425 = vpop.trf.xlu0
        %v1426 = vpop.trf.xlu0
        %v1427 = vpop.trf.xlu0
        %v1428 = vpop.trf.xlu0
        %v1429 = vpop.trf.xlu0
        %v1430 = vpop.trf.xlu0
        %v1431 = vpop.trf.xlu0
        %v1432 = vpop.trf.xlu0
        %v1433 = vpop.trf.xlu0
        %v1434 = vpop.trf.xlu0
        %v1436 = vsel %vm288, %v1387, 0
        %v1439 = vsel %vm288, %v1388, 0
        %v1442 = vsel %vm288, %v1389, 0
        %v1445 = vsel %vm288, %v1390, 0
        %v1448 = vsel %vm288, %v1391, 0
        %v1451 = vsel %vm288, %v1392, 0
        %v1454 = vsel %vm288, %v1393, 0
        %v1457 = vsel %vm288, %v1394, 0
        %v1460 = vsel %vm288, %v1395, 0
        %v1463 = vsel %vm288, %v1396, 0
        %v1466 = vsel %vm288, %v1397, 0
        %v1469 = vsel %vm288, %v1398, 0
        %v1472 = vsel %vm288, %v1399, 0
        %v1475 = vsel %vm288, %v1400, 0
        %v1478 = vsel %vm288, %v1401, 0
        %v1481 = vsel %vm288, %v1402, 0
        %v1484 = vsel %vm288, %v1419, 0
        %v1487 = vsel %vm288, %v1420, 0
        %v1490 = vsel %vm288, %v1421, 0
        %v1493 = vsel %vm288, %v1422, 0
        %v1496 = vsel %vm288, %v1423, 0
        %v1499 = vsel %vm288, %v1424, 0
        %v1502 = vsel %vm288, %v1425, 0
        %v1505 = vsel %vm288, %v1426, 0
        %v1508 = vsel %vm288, %v1427, 0
        %v1511 = vsel %vm288, %v1428, 0
        %v1514 = vsel %vm288, %v1429, 0
        %v1517 = vsel %vm288, %v1430, 0
        %v1520 = vsel %vm288, %v1431, 0
        %v1523 = vsel %vm288, %v1432, 0
        %v1526 = vsel %vm288, %v1433, 0
        %v1529 = vsel %vm288, %v1434, 0
        %1531 = vmatprep.subr.mxu0 0.0
        %1532 = vmatpush1.msra.mxu0 %v387
        %1533 = vmatprep.subr.mxu0 0.0
        %1534 = vmatpush1.msra.mxu0 0.0
        %1535 = vmatprep.subr.mxu0 0.0
        %1536 = vmatpush1.msra.mxu0 0.0
        %1537 = vmatprep.subr.mxu0 0.0
        %1538 = vmatpush1.msra.mxu0 0.0
        %1539 = vmatprep.subr.mxu0 0.0
        %1540 = vmatpush1.msra.mxu0 0.0
        %1541 = vmatprep.subr.mxu0 0.0
        %1542 = vmatpush1.msra.mxu0 0.0
        %1543 = vmatprep.subr.mxu0 0.0
        %1544 = vmatpush1.msra.mxu0 0.0
        %1545 = vmatprep.subr.mxu0 0.0
        %1546 = vmatpush1.msra.mxu0 0.0
        %1547 = vmatprep.subr.mxu0 0.0
        %1548 = vmatpush1.msra.mxu0 0.0
        %1549 = vmatprep.subr.mxu0 0.0
        %1550 = vmatpush1.msra.mxu0 0.0
        %1551 = vmatprep.subr.mxu0 0.0
        %1552 = vmatpush1.msra.mxu0 0.0
        %1553 = vmatprep.subr.mxu0 0.0
        %1554 = vmatpush1.msra.mxu0 0.0
        %1555 = vmatprep.subr.mxu0 0.0
        %1556 = vmatpush1.msra.mxu0 0.0
        %1557 = vmatprep.subr.mxu0 0.0
        %1558 = vmatpush1.msra.mxu0 0.0
        %1559 = vmatprep.subr.mxu0 0.0
        %1560 = vmatpush1.msra.mxu0 0.0
        %1561 = vmatprep.subr.mxu0 0.0
        %1562 = vmatpush1.msra.mxu0 0.0
        %1563 = vmatprep.subr.mxu0 0.0
        %1564 = vmatpush1.msra.mxu0 0.0
        %1565 = vmatprep.subr.mxu0 0.0
        %1566 = vmatpush1.msra.mxu0 0.0
        %1567 = vmatprep.subr.mxu0 0.0
        %1568 = vmatpush1.msra.mxu0 0.0
        %1569 = vmatprep.subr.mxu0 0.0
        %1570 = vmatpush1.msra.mxu0 0.0
        %1571 = vmatprep.subr.mxu0 0.0
        %1572 = vmatpush1.msra.mxu0 0.0
        %1573 = vmatprep.subr.mxu0 0.0
        %1574 = vmatpush1.msra.mxu0 0.0
        %1575 = vmatprep.subr.mxu0 0.0
        %1576 = vmatpush1.msra.mxu0 0.0
        %1577 = vmatprep.subr.mxu0 0.0
        %1578 = vmatpush1.msra.mxu0 0.0
        %1579 = vmatprep.subr.mxu0 0.0
        %1580 = vmatpush1.msra.mxu0 0.0
        %1581 = vmatprep.subr.mxu0 0.0
        %1582 = vmatpush1.msra.mxu0 0.0
        %1583 = vmatprep.subr.mxu0 0.0
        %1584 = vmatpush1.msra.mxu0 0.0
        %1585 = vmatprep.subr.mxu0 0.0
        %1586 = vmatpush1.msra.mxu0 0.0
        %1587 = vmatprep.subr.mxu0 0.0
        %1588 = vmatpush1.msra.mxu0 0.0
        %1589 = vmatprep.subr.mxu0 0.0
        %1590 = vmatpush1.msra.mxu0 0.0
        %1591 = vmatprep.subr.mxu0 0.0
        %1592 = vmatpush1.msra.mxu0 0.0
        %1593 = vmatprep.subr.mxu0 0.0
        %1594 = vmatpush1.msra.mxu0 0.0
        %1595 = vmatprep.mubr.f32.mxu0 0.0
        %1596 = vmatmul.mubr.f32.gmra.mrb[0].mxu0 %v1436
        %v1597 = vpop.f32.mrb[0].mxu0
        %v1598 = vadd.f32 0.0, %v1597
        %v1599 = vpop.f32.mrb[0].mxu0
        %1600 = vmatprep.mubr.f32.mxu0 0.0
        %1601 = vmatmul.mubr.f32.gmra.mrb[0].mxu0 %v1439
        %v1602 = vpop.f32.mrb[0].mxu0
        %v1603 = vadd.f32 0.0, %v1602
        %v1604 = vpop.f32.mrb[0].mxu0
        %1605 = vmatprep.mubr.f32.mxu0 0.0
        %1606 = vmatmul.mubr.f32.gmra.mrb[0].mxu0 %v1442
        %v1607 = vpop.f32.mrb[0].mxu0
        %v1608 = vadd.f32 0.0, %v1607
        %v1609 = vpop.f32.mrb[0].mxu0
        %1610 = vmatprep.mubr.f32.mxu0 0.0
        %1611 = vmatmul.mubr.f32.gmra.mrb[0].mxu0 %v1445
        %v1612 = vpop.f32.mrb[0].mxu0
        %v1613 = vadd.f32 0.0, %v1612
        %v1614 = vpop.f32.mrb[0].mxu0
        %1615 = vmatprep.mubr.f32.mxu0 0.0
        %1616 = vmatmul.mubr.f32.gmra.mrb[0].mxu0 %v1448
        %v1617 = vpop.f32.mrb[0].mxu0
        %v1618 = vadd.f32 0.0, %v1617
        %v1619 = vpop.f32.mrb[0].mxu0
        %1620 = vmatprep.mubr.f32.mxu0 0.0
        %1621 = vmatmul.mubr.f32.gmra.mrb[0].mxu0 %v1451
        %v1622 = vpop.f32.mrb[0].mxu0
        %v1623 = vadd.f32 0.0, %v1622
        %v1624 = vpop.f32.mrb[0].mxu0
        %1625 = vmatprep.mubr.f32.mxu0 0.0
        %1626 = vmatmul.mubr.f32.gmra.mrb[0].mxu0 %v1454
        %v1627 = vpop.f32.mrb[0].mxu0
        %v1628 = vadd.f32 0.0, %v1627
        %v1629 = vpop.f32.mrb[0].mxu0
        %1630 = vmatprep.mubr.f32.mxu0 0.0
        %1631 = vmatmul.mubr.f32.gmra.mrb[0].mxu0 %v1457
        %v1632 = vpop.f32.mrb[0].mxu0
        %v1633 = vadd.f32 0.0, %v1632
        %v1634 = vpop.f32.mrb[0].mxu0
        %1635 = vmatprep.mubr.f32.mxu0 0.0
        %1636 = vmatmul.mubr.f32.gmra.mrb[0].mxu0 %v1460
        %v1637 = vpop.f32.mrb[0].mxu0
        %v1638 = vadd.f32 0.0, %v1637
        %v1639 = vpop.f32.mrb[0].mxu0
        %1640 = vmatprep.mubr.f32.mxu0 0.0
        %1641 = vmatmul.mubr.f32.gmra.mrb[0].mxu0 %v1463
        %v1642 = vpop.f32.mrb[0].mxu0
        %v1643 = vadd.f32 0.0, %v1642
        %v1644 = vpop.f32.mrb[0].mxu0
        %1645 = vmatprep.mubr.f32.mxu0 0.0
        %1646 = vmatmul.mubr.f32.gmra.mrb[0].mxu0 %v1466
        %v1647 = vpop.f32.mrb[0].mxu0
        %v1648 = vadd.f32 0.0, %v1647
        %v1649 = vpop.f32.mrb[0].mxu0
        %1650 = vmatprep.mubr.f32.mxu0 0.0
        %1651 = vmatmul.mubr.f32.gmra.mrb[0].mxu0 %v1469
        %v1652 = vpop.f32.mrb[0].mxu0
        %v1653 = vadd.f32 0.0, %v1652
        %v1654 = vpop.f32.mrb[0].mxu0
        %1655 = vmatprep.mubr.f32.mxu0 0.0
        %1656 = vmatmul.mubr.f32.gmra.mrb[0].mxu0 %v1472
        %v1657 = vpop.f32.mrb[0].mxu0
        %v1658 = vadd.f32 0.0, %v1657
        %v1659 = vpop.f32.mrb[0].mxu0
        %1660 = vmatprep.mubr.f32.mxu0 0.0
        %1661 = vmatmul.mubr.f32.gmra.mrb[0].mxu0 %v1475
        %v1662 = vpop.f32.mrb[0].mxu0
        %v1663 = vadd.f32 0.0, %v1662
        %v1664 = vpop.f32.mrb[0].mxu0
        %1665 = vmatprep.mubr.f32.mxu0 0.0
        %1666 = vmatmul.mubr.f32.gmra.mrb[0].mxu0 %v1478
        %v1667 = vpop.f32.mrb[0].mxu0
        %v1668 = vadd.f32 0.0, %v1667
        %v1669 = vpop.f32.mrb[0].mxu0
        %1670 = vmatprep.mubr.f32.mxu0 0.0
        %1671 = vmatmul.mubr.f32.gmra.mrb[0].mxu0 %v1481
        %v1672 = vpop.f32.mrb[0].mxu0
        %v1673 = vadd.f32 0.0, %v1672
        %v1674 = vpop.f32.mrb[0].mxu0
        %1675 = vmatprep.mubr.f32.mxu0 0.0
        %1676 = vmatmul.mubr.f32.gmra.mrb[0].mxu0 %v1484
        %v1677 = vpop.f32.mrb[0].mxu0
        %v1678 = vadd.f32 0.0, %v1677
        %v1679 = vpop.f32.mrb[0].mxu0
        %1680 = vmatprep.mubr.f32.mxu0 0.0
        %1681 = vmatmul.mubr.f32.gmra.mrb[0].mxu0 %v1487
        %v1682 = vpop.f32.mrb[0].mxu0
        %v1683 = vadd.f32 0.0, %v1682
        %v1684 = vpop.f32.mrb[0].mxu0
        %1685 = vmatprep.mubr.f32.mxu0 0.0
        %1686 = vmatmul.mubr.f32.gmra.mrb[0].mxu0 %v1490
        %v1687 = vpop.f32.mrb[0].mxu0
        %v1688 = vadd.f32 0.0, %v1687
        %v1689 = vpop.f32.mrb[0].mxu0
        %1690 = vmatprep.mubr.f32.mxu0 0.0
        %1691 = vmatmul.mubr.f32.gmra.mrb[0].mxu0 %v1493
        %v1692 = vpop.f32.mrb[0].mxu0
        %v1693 = vadd.f32 0.0, %v1692
        %v1694 = vpop.f32.mrb[0].mxu0
        %1695 = vmatprep.mubr.f32.mxu0 0.0
        %1696 = vmatmul.mubr.f32.gmra.mrb[0].mxu0 %v1496
        %v1697 = vpop.f32.mrb[0].mxu0
        %v1698 = vadd.f32 0.0, %v1697
        %v1699 = vpop.f32.mrb[0].mxu0
        %1700 = vmatprep.mubr.f32.mxu0 0.0
        %1701 = vmatmul.mubr.f32.gmra.mrb[0].mxu0 %v1499
        %v1702 = vpop.f32.mrb[0].mxu0
        %v1703 = vadd.f32 0.0, %v1702
        %v1704 = vpop.f32.mrb[0].mxu0
        %1705 = vmatprep.mubr.f32.mxu0 0.0
        %1706 = vmatmul.mubr.f32.gmra.mrb[0].mxu0 %v1502
        %v1707 = vpop.f32.mrb[0].mxu0
        %v1708 = vadd.f32 0.0, %v1707
        %v1709 = vpop.f32.mrb[0].mxu0
        %1710 = vmatprep.mubr.f32.mxu0 0.0
        %1711 = vmatmul.mubr.f32.gmra.mrb[0].mxu0 %v1505
        %v1712 = vpop.f32.mrb[0].mxu0
        %v1713 = vadd.f32 0.0, %v1712
        %v1714 = vpop.f32.mrb[0].mxu0
        %1715 = vmatprep.mubr.f32.mxu0 0.0
        %1716 = vmatmul.mubr.f32.gmra.mrb[0].mxu0 %v1508
        %v1717 = vpop.f32.mrb[0].mxu0
        %v1718 = vadd.f32 0.0, %v1717
        %v1719 = vpop.f32.mrb[0].mxu0
        %1720 = vmatprep.mubr.f32.mxu0 0.0
        %1721 = vmatmul.mubr.f32.gmra.mrb[0].mxu0 %v1511
        %v1722 = vpop.f32.mrb[0].mxu0
        %v1723 = vadd.f32 0.0, %v1722
        %v1724 = vpop.f32.mrb[0].mxu0
        %1725 = vmatprep.mubr.f32.mxu0 0.0
        %1726 = vmatmul.mubr.f32.gmra.mrb[0].mxu0 %v1514
        %v1727 = vpop.f32.mrb[0].mxu0
        %v1728 = vadd.f32 0.0, %v1727
        %v1729 = vpop.f32.mrb[0].mxu0
        %1730 = vmatprep.mubr.f32.mxu0 0.0
        %1731 = vmatmul.mubr.f32.gmra.mrb[0].mxu0 %v1517
        %v1732 = vpop.f32.mrb[0].mxu0
        %v1733 = vadd.f32 0.0, %v1732
        %v1734 = vpop.f32.mrb[0].mxu0
        %1735 = vmatprep.mubr.f32.mxu0 0.0
        %1736 = vmatmul.mubr.f32.gmra.mrb[0].mxu0 %v1520
        %v1737 = vpop.f32.mrb[0].mxu0
        %v1738 = vadd.f32 0.0, %v1737
        %v1739 = vpop.f32.mrb[0].mxu0
        %1740 = vmatprep.mubr.f32.mxu0 0.0
        %1741 = vmatmul.mubr.f32.gmra.mrb[0].mxu0 %v1523
        %v1742 = vpop.f32.mrb[0].mxu0
        %v1743 = vadd.f32 0.0, %v1742
        %v1744 = vpop.f32.mrb[0].mxu0
        %1745 = vmatprep.mubr.f32.mxu0 0.0
        %1746 = vmatmul.mubr.f32.gmra.mrb[0].mxu0 %v1526
        %v1747 = vpop.f32.mrb[0].mxu0
        %v1748 = vadd.f32 0.0, %v1747
        %v1749 = vpop.f32.mrb[0].mxu0
        %1750 = vmatprep.mubr.f32.mxu0 0.0
        %1751 = vmatmul.mubr.f32.gmra.mrb[0].mxu0 %v1529
        %v1752 = vpop.f32.mrb[0].mxu0
        %v1753 = vadd.f32 0.0, %v1752
        %v1754 = vpop.f32.mrb[0].mxu0
        %1755 = vdwg.mxu0
        %v1756 = vsel %vm614, %v1598, -inf
        %v1757 = vsel %vm614, %v1603, -inf
        %v1758 = vmax.f32 %v1756, %v1757
        %v1759 = vrot.slane %v1758, 4
        %v1760 = vmax.f32 %v1758, %v1759
        %v1761 = vrot.slane %v1760, 2
        %v1762 = vmax.f32 %v1760, %v1761
        %v1763 = vrot.slane %v1762, 1
        %v1764 = vmax.f32 %v1762, %v1763
        %v1765 = vsel %vm614, %v1608, -inf
        %v1766 = vsel %vm614, %v1613, -inf
        %v1767 = vmax.f32 %v1765, %v1766
        %v1768 = vrot.slane %v1767, 4
        %v1769 = vmax.f32 %v1767, %v1768
        %v1770 = vrot.slane %v1769, 2
        %v1771 = vmax.f32 %v1769, %v1770
        %v1772 = vrot.slane %v1771, 1
        %v1773 = vmax.f32 %v1771, %v1772
        %v1774 = vsel %vm614, %v1618, -inf
        %v1775 = vsel %vm614, %v1623, -inf
        %v1776 = vmax.f32 %v1774, %v1775
        %v1777 = vrot.slane %v1776, 4
        %v1778 = vmax.f32 %v1776, %v1777
        %v1779 = vrot.slane %v1778, 2
        %v1780 = vmax.f32 %v1778, %v1779
        %v1781 = vrot.slane %v1780, 1
        %v1782 = vmax.f32 %v1780, %v1781
        %v1783 = vsel %vm614, %v1628, -inf
        %v1784 = vsel %vm614, %v1633, -inf
        %v1785 = vmax.f32 %v1783, %v1784
        %v1786 = vrot.slane %v1785, 4
        %v1787 = vmax.f32 %v1785, %v1786
        %v1788 = vrot.slane %v1787, 2
        %v1789 = vmax.f32 %v1787, %v1788
        %v1790 = vrot.slane %v1789, 1
        %v1791 = vmax.f32 %v1789, %v1790
        %v1792 = vsel %vm614, %v1638, -inf
        %v1793 = vsel %vm614, %v1643, -inf
        %v1794 = vmax.f32 %v1792, %v1793
        %v1795 = vrot.slane %v1794, 4
        %v1796 = vmax.f32 %v1794, %v1795
        %v1797 = vrot.slane %v1796, 2
        %v1798 = vmax.f32 %v1796, %v1797
        %v1799 = vrot.slane %v1798, 1
        %v1800 = vmax.f32 %v1798, %v1799
        %v1801 = vsel %vm614, %v1648, -inf
        %v1802 = vsel %vm614, %v1653, -inf
        %v1803 = vmax.f32 %v1801, %v1802
        %v1804 = vrot.slane %v1803, 4
        %v1805 = vmax.f32 %v1803, %v1804
        %v1806 = vrot.slane %v1805, 2
        %v1807 = vmax.f32 %v1805, %v1806
        %v1808 = vrot.slane %v1807, 1
        %v1809 = vmax.f32 %v1807, %v1808
        %v1810 = vsel %vm614, %v1658, -inf
        %v1811 = vsel %vm614, %v1663, -inf
        %v1812 = vmax.f32 %v1810, %v1811
        %v1813 = vrot.slane %v1812, 4
        %v1814 = vmax.f32 %v1812, %v1813
        %v1815 = vrot.slane %v1814, 2
        %v1816 = vmax.f32 %v1814, %v1815
        %v1817 = vrot.slane %v1816, 1
        %v1818 = vmax.f32 %v1816, %v1817
        %v1819 = vsel %vm614, %v1668, -inf
        %v1820 = vsel %vm614, %v1673, -inf
        %v1821 = vmax.f32 %v1819, %v1820
        %v1822 = vrot.slane %v1821, 4
        %v1823 = vmax.f32 %v1821, %v1822
        %v1824 = vrot.slane %v1823, 2
        %v1825 = vmax.f32 %v1823, %v1824
        %v1826 = vrot.slane %v1825, 1
        %v1827 = vmax.f32 %v1825, %v1826
        %v1828 = vsel %vm614, %v1678, -inf
        %v1829 = vsel %vm614, %v1683, -inf
        %v1830 = vmax.f32 %v1828, %v1829
        %v1831 = vrot.slane %v1830, 4
        %v1832 = vmax.f32 %v1830, %v1831
        %v1833 = vrot.slane %v1832, 2
        %v1834 = vmax.f32 %v1832, %v1833
        %v1835 = vrot.slane %v1834, 1
        %v1836 = vmax.f32 %v1834, %v1835
        %v1837 = vsel %vm614, %v1688, -inf
        %v1838 = vsel %vm614, %v1693, -inf
        %v1839 = vmax.f32 %v1837, %v1838
        %v1840 = vrot.slane %v1839, 4
        %v1841 = vmax.f32 %v1839, %v1840
        %v1842 = vrot.slane %v1841, 2
        %v1843 = vmax.f32 %v1841, %v1842
        %v1844 = vrot.slane %v1843, 1
        %v1845 = vmax.f32 %v1843, %v1844
        %v1846 = vsel %vm614, %v1698, -inf
        %v1847 = vsel %vm614, %v1703, -inf
        %v1848 = vmax.f32 %v1846, %v1847
        %v1849 = vrot.slane %v1848, 4
        %v1850 = vmax.f32 %v1848, %v1849
        %v1851 = vrot.slane %v1850, 2
        %v1852 = vmax.f32 %v1850, %v1851
        %v1853 = vrot.slane %v1852, 1
        %v1854 = vmax.f32 %v1852, %v1853
        %v1855 = vsel %vm614, %v1708, -inf
        %v1856 = vsel %vm614, %v1713, -inf
        %v1857 = vmax.f32 %v1855, %v1856
        %v1858 = vrot.slane %v1857, 4
        %v1859 = vmax.f32 %v1857, %v1858
        %v1860 = vrot.slane %v1859, 2
        %v1861 = vmax.f32 %v1859, %v1860
        %v1862 = vrot.slane %v1861, 1
        %v1863 = vmax.f32 %v1861, %v1862
        %v1864 = vsel %vm614, %v1718, -inf
        %v1865 = vsel %vm614, %v1723, -inf
        %v1866 = vmax.f32 %v1864, %v1865
        %v1867 = vrot.slane %v1866, 4
        %v1868 = vmax.f32 %v1866, %v1867
        %v1869 = vrot.slane %v1868, 2
        %v1870 = vmax.f32 %v1868, %v1869
        %v1871 = vrot.slane %v1870, 1
        %v1872 = vmax.f32 %v1870, %v1871
        %v1873 = vsel %vm614, %v1728, -inf
        %v1874 = vsel %vm614, %v1733, -inf
        %v1875 = vmax.f32 %v1873, %v1874
        %v1876 = vrot.slane %v1875, 4
        %v1877 = vmax.f32 %v1875, %v1876
        %v1878 = vrot.slane %v1877, 2
        %v1879 = vmax.f32 %v1877, %v1878
        %v1880 = vrot.slane %v1879, 1
        %v1881 = vmax.f32 %v1879, %v1880
        %v1882 = vsel %vm614, %v1738, -inf
        %v1883 = vsel %vm614, %v1743, -inf
        %v1884 = vmax.f32 %v1882, %v1883
        %v1885 = vrot.slane %v1884, 4
        %v1886 = vmax.f32 %v1884, %v1885
        %v1887 = vrot.slane %v1886, 2
        %v1888 = vmax.f32 %v1886, %v1887
        %v1889 = vrot.slane %v1888, 1
        %v1890 = vmax.f32 %v1888, %v1889
        %v1891 = vsel %vm614, %v1748, -inf
        %v1892 = vsel %vm614, %v1753, -inf
        %v1893 = vmax.f32 %v1891, %v1892
        %v1894 = vrot.slane %v1893, 4
        %v1895 = vmax.f32 %v1893, %v1894
        %v1896 = vrot.slane %v1895, 2
        %v1897 = vmax.f32 %v1895, %v1896
        %v1898 = vrot.slane %v1897, 1
        %v1899 = vmax.f32 %v1897, %v1898
        %v1916 = vsel %vm775, %v1773, %v1764
        %v1917 = vsel %vm777, %v1782, %v1916
        %v1918 = vsel %vm779, %v1791, %v1917
        %v1919 = vsel %vm781, %v1800, %v1918
        %v1920 = vsel %vm783, %v1809, %v1919
        %v1921 = vsel %vm785, %v1818, %v1920
        %v1922 = vsel %vm787, %v1827, %v1921
        %v1923 = vsel %vm775, %v1845, %v1836
        %v1924 = vsel %vm777, %v1854, %v1923
        %v1925 = vsel %vm779, %v1863, %v1924
        %v1926 = vsel %vm781, %v1872, %v1925
        %v1927 = vsel %vm783, %v1881, %v1926
        %v1928 = vsel %vm785, %v1890, %v1927
        %v1929 = vsel %vm787, %v1899, %v1928
        %1932 = vst.msk [vmem:[#allocation2 + $0x20] sm:$0xff] %vm614, %v1922
        %1933 = vst.msk [vmem:[#allocation2 + $0x28] sm:$0xff] %vm614, %v1929
        %v1934 = vld [vmem:[%s191 + $0x18] sm:$0xff]
        %v1936 = vcombine.high %v1934, %v1934
        %1938 = vxpose.xlu0.b32.start [1/16] %v1934, 128
        %1939 = vxpose.xlu0.b32.cont [2/16] 0.0, 128
        %1940 = vxpose.xlu0.b32.cont [3/16] 0.0, 128
        %1941 = vxpose.xlu0.b32.cont [4/16] 0.0, 128
        %1942 = vxpose.xlu0.b32.cont [5/16] 0.0, 128
        %1943 = vxpose.xlu0.b32.cont [6/16] 0.0, 128
        %1944 = vxpose.xlu0.b32.cont [7/16] 0.0, 128
        %1945 = vxpose.xlu0.b32.cont [8/16] 0.0, 128
        %1946 = vxpose.xlu0.b32.cont [9/16] 0.0, 128
        %1947 = vxpose.xlu0.b32.cont [10/16] 0.0, 128
        %1948 = vxpose.xlu0.b32.cont [11/16] 0.0, 128
        %1949 = vxpose.xlu0.b32.cont [12/16] 0.0, 128
        %1950 = vxpose.xlu0.b32.cont [13/16] 0.0, 128
        %1951 = vxpose.xlu0.b32.cont [14/16] 0.0, 128
        %1952 = vxpose.xlu0.b32.cont [15/16] 0.0, 128
        %1953 = vxpose.xlu0.b32.end [16/16] 0.0, 128
        %v1954 = vpop.trf.xlu0
        %v1955 = vpop.trf.xlu0
        %v1956 = vpop.trf.xlu0
        %v1957 = vpop.trf.xlu0
        %v1958 = vpop.trf.xlu0
        %v1959 = vpop.trf.xlu0
        %v1960 = vpop.trf.xlu0
        %v1961 = vpop.trf.xlu0
        %v1962 = vpop.trf.xlu0
        %v1963 = vpop.trf.xlu0
        %v1964 = vpop.trf.xlu0
        %v1965 = vpop.trf.xlu0
        %v1966 = vpop.trf.xlu0
        %v1967 = vpop.trf.xlu0
        %v1968 = vpop.trf.xlu0
        %v1969 = vpop.trf.xlu0
        %1970 = vxpose.xlu0.b32.start [1/16] %v1936, 128
        %1971 = vxpose.xlu0.b32.cont [2/16] 0.0, 128
        %1972 = vxpose.xlu0.b32.cont [3/16] 0.0, 128
        %1973 = vxpose.xlu0.b32.cont [4/16] 0.0, 128
        %1974 = vxpose.xlu0.b32.cont [5/16] 0.0, 128
        %1975 = vxpose.xlu0.b32.cont [6/16] 0.0, 128
        %1976 = vxpose.xlu0.b32.cont [7/16] 0.0, 128
        %1977 = vxpose.xlu0.b32.cont [8/16] 0.0, 128
        %1978 = vxpose.xlu0.b32.cont [9/16] 0.0, 128
        %1979 = vxpose.xlu0.b32.cont [10/16] 0.0, 128
        %1980 = vxpose.xlu0.b32.cont [11/16] 0.0, 128
        %1981 = vxpose.xlu0.b32.cont [12/16] 0.0, 128
        %1982 = vxpose.xlu0.b32.cont [13/16] 0.0, 128
        %1983 = vxpose.xlu0.b32.cont [14/16] 0.0, 128
        %1984 = vxpose.xlu0.b32.cont [15/16] 0.0, 128
        %1985 = vxpose.xlu0.b32.end [16/16] 0.0, 128
        %v1986 = vpop.trf.xlu0
        %v1987 = vpop.trf.xlu0
        %v1988 = vpop.trf.xlu0
        %v1989 = vpop.trf.xlu0
        %v1990 = vpop.trf.xlu0
        %v1991 = vpop.trf.xlu0
        %v1992 = vpop.trf.xlu0
        %v1993 = vpop.trf.xlu0
        %v1994 = vpop.trf.xlu0
        %v1995 = vpop.trf.xlu0
        %v1996 = vpop.trf.xlu0
        %v1997 = vpop.trf.xlu0
        %v1998 = vpop.trf.xlu0
        %v1999 = vpop.trf.xlu0
        %v2000 = vpop.trf.xlu0
        %v2001 = vpop.trf.xlu0
        %v2003 = vsel %vm288, %v1954, 0
        %v2006 = vsel %vm288, %v1955, 0
        %v2009 = vsel %vm288, %v1956, 0
        %v2012 = vsel %vm288, %v1957, 0
        %v2015 = vsel %vm288, %v1958, 0
        %v2018 = vsel %vm288, %v1959, 0
        %v2021 = vsel %vm288, %v1960, 0
        %v2024 = vsel %vm288, %v1961, 0
        %v2027 = vsel %vm288, %v1962, 0
        %v2030 = vsel %vm288, %v1963, 0
        %v2033 = vsel %vm288, %v1964, 0
        %v2036 = vsel %vm288, %v1965, 0
        %v2039 = vsel %vm288, %v1966, 0
        %v2042 = vsel %vm288, %v1967, 0
        %v2045 = vsel %vm288, %v1968, 0
        %v2048 = vsel %vm288, %v1969, 0
        %v2051 = vsel %vm288, %v1986, 0
        %v2054 = vsel %vm288, %v1987, 0
        %v2057 = vsel %vm288, %v1988, 0
        %v2060 = vsel %vm288, %v1989, 0
        %v2063 = vsel %vm288, %v1990, 0
        %v2066 = vsel %vm288, %v1991, 0
        %v2069 = vsel %vm288, %v1992, 0
        %v2072 = vsel %vm288, %v1993, 0
        %v2075 = vsel %vm288, %v1994, 0
        %v2078 = vsel %vm288, %v1995, 0
        %v2081 = vsel %vm288, %v1996, 0
        %v2084 = vsel %vm288, %v1997, 0
        %v2087 = vsel %vm288, %v1998, 0
        %v2090 = vsel %vm288, %v1999, 0
        %v2093 = vsel %vm288, %v2000, 0
        %v2096 = vsel %vm288, %v2001, 0
        %2098 = vmatprep.subr.mxu0 0.0
        %2099 = vmatpush1.msra.mxu0 %v387
        %2100 = vmatprep.subr.mxu0 0.0
        %2101 = vmatpush1.msra.mxu0 0.0
        %2102 = vmatprep.subr.mxu0 0.0
        %2103 = vmatpush1.msra.mxu0 0.0
        %2104 = vmatprep.subr.mxu0 0.0
        %2105 = vmatpush1.msra.mxu0 0.0
        %2106 = vmatprep.subr.mxu0 0.0
        %2107 = vmatpush1.msra.mxu0 0.0
        %2108 = vmatprep.subr.mxu0 0.0
        %2109 = vmatpush1.msra.mxu0 0.0
        %2110 = vmatprep.subr.mxu0 0.0
        %2111 = vmatpush1.msra.mxu0 0.0
        %2112 = vmatprep.subr.mxu0 0.0
        %2113 = vmatpush1.msra.mxu0 0.0
        %2114 = vmatprep.subr.mxu0 0.0
        %2115 = vmatpush1.msra.mxu0 0.0
        %2116 = vmatprep.subr.mxu0 0.0
        %2117 = vmatpush1.msra.mxu0 0.0
        %2118 = vmatprep.subr.mxu0 0.0
        %2119 = vmatpush1.msra.mxu0 0.0
        %2120 = vmatprep.subr.mxu0 0.0
        %2121 = vmatpush1.msra.mxu0 0.0
        %2122 = vmatprep.subr.mxu0 0.0
        %2123 = vmatpush1.msra.mxu0 0.0
        %2124 = vmatprep.subr.mxu0 0.0
        %2125 = vmatpush1.msra.mxu0 0.0
        %2126 = vmatprep.subr.mxu0 0.0
        %2127 = vmatpush1.msra.mxu0 0.0
        %2128 = vmatprep.subr.mxu0 0.0
        %2129 = vmatpush1.msra.mxu0 0.0
        %2130 = vmatprep.subr.mxu0 0.0
        %2131 = vmatpush1.msra.mxu0 0.0
        %2132 = vmatprep.subr.mxu0 0.0
        %2133 = vmatpush1.msra.mxu0 0.0
        %2134 = vmatprep.subr.mxu0 0.0
        %2135 = vmatpush1.msra.mxu0 0.0
        %2136 = vmatprep.subr.mxu0 0.0
        %2137 = vmatpush1.msra.mxu0 0.0
        %2138 = vmatprep.subr.mxu0 0.0
        %2139 = vmatpush1.msra.mxu0 0.0
        %2140 = vmatprep.subr.mxu0 0.0
        %2141 = vmatpush1.msra.mxu0 0.0
        %2142 = vmatprep.subr.mxu0 0.0
        %2143 = vmatpush1.msra.mxu0 0.0
        %2144 = vmatprep.subr.mxu0 0.0
        %2145 = vmatpush1.msra.mxu0 0.0
        %2146 = vmatprep.subr.mxu0 0.0
        %2147 = vmatpush1.msra.mxu0 0.0
        %2148 = vmatprep.subr.mxu0 0.0
        %2149 = vmatpush1.msra.mxu0 0.0
        %2150 = vmatprep.subr.mxu0 0.0
        %2151 = vmatpush1.msra.mxu0 0.0
        %2152 = vmatprep.subr.mxu0 0.0
        %2153 = vmatpush1.msra.mxu0 0.0
        %2154 = vmatprep.subr.mxu0 0.0
        %2155 = vmatpush1.msra.mxu0 0.0
        %2156 = vmatprep.subr.mxu0 0.0
        %2157 = vmatpush1.msra.mxu0 0.0
        %2158 = vmatprep.subr.mxu0 0.0
        %2159 = vmatpush1.msra.mxu0 0.0
        %2160 = vmatprep.subr.mxu0 0.0
        %2161 = vmatpush1.msra.mxu0 0.0
        %2162 = vmatprep.mubr.f32.mxu0 0.0
        %2163 = vmatmul.mubr.f32.gmra.mrb[0].mxu0 %v2003
        %v2164 = vpop.f32.mrb[0].mxu0
        %v2165 = vadd.f32 0.0, %v2164
        %v2166 = vpop.f32.mrb[0].mxu0
        %2167 = vmatprep.mubr.f32.mxu0 0.0
        %2168 = vmatmul.mubr.f32.gmra.mrb[0].mxu0 %v2006
        %v2169 = vpop.f32.mrb[0].mxu0
        %v2170 = vadd.f32 0.0, %v2169
        %v2171 = vpop.f32.mrb[0].mxu0
        %2172 = vmatprep.mubr.f32.mxu0 0.0
        %2173 = vmatmul.mubr.f32.gmra.mrb[0].mxu0 %v2009
        %v2174 = vpop.f32.mrb[0].mxu0
        %v2175 = vadd.f32 0.0, %v2174
        %v2176 = vpop.f32.mrb[0].mxu0
        %2177 = vmatprep.mubr.f32.mxu0 0.0
        %2178 = vmatmul.mubr.f32.gmra.mrb[0].mxu0 %v2012
        %v2179 = vpop.f32.mrb[0].mxu0
        %v2180 = vadd.f32 0.0, %v2179
        %v2181 = vpop.f32.mrb[0].mxu0
        %2182 = vmatprep.mubr.f32.mxu0 0.0
        %2183 = vmatmul.mubr.f32.gmra.mrb[0].mxu0 %v2015
        %v2184 = vpop.f32.mrb[0].mxu0
        %v2185 = vadd.f32 0.0, %v2184
        %v2186 = vpop.f32.mrb[0].mxu0
        %2187 = vmatprep.mubr.f32.mxu0 0.0
        %2188 = vmatmul.mubr.f32.gmra.mrb[0].mxu0 %v2018
        %v2189 = vpop.f32.mrb[0].mxu0
        %v2190 = vadd.f32 0.0, %v2189
        %v2191 = vpop.f32.mrb[0].mxu0
        %2192 = vmatprep.mubr.f32.mxu0 0.0
        %2193 = vmatmul.mubr.f32.gmra.mrb[0].mxu0 %v2021
        %v2194 = vpop.f32.mrb[0].mxu0
        %v2195 = vadd.f32 0.0, %v2194
        %v2196 = vpop.f32.mrb[0].mxu0
        %2197 = vmatprep.mubr.f32.mxu0 0.0
        %2198 = vmatmul.mubr.f32.gmra.mrb[0].mxu0 %v2024
        %v2199 = vpop.f32.mrb[0].mxu0
        %v2200 = vadd.f32 0.0, %v2199
        %v2201 = vpop.f32.mrb[0].mxu0
        %2202 = vmatprep.mubr.f32.mxu0 0.0
        %2203 = vmatmul.mubr.f32.gmra.mrb[0].mxu0 %v2027
        %v2204 = vpop.f32.mrb[0].mxu0
        %v2205 = vadd.f32 0.0, %v2204
        %v2206 = vpop.f32.mrb[0].mxu0
        %2207 = vmatprep.mubr.f32.mxu0 0.0
        %2208 = vmatmul.mubr.f32.gmra.mrb[0].mxu0 %v2030
        %v2209 = vpop.f32.mrb[0].mxu0
        %v2210 = vadd.f32 0.0, %v2209
        %v2211 = vpop.f32.mrb[0].mxu0
        %2212 = vmatprep.mubr.f32.mxu0 0.0
        %2213 = vmatmul.mubr.f32.gmra.mrb[0].mxu0 %v2033
        %v2214 = vpop.f32.mrb[0].mxu0
        %v2215 = vadd.f32 0.0, %v2214
        %v2216 = vpop.f32.mrb[0].mxu0
        %2217 = vmatprep.mubr.f32.mxu0 0.0
        %2218 = vmatmul.mubr.f32.gmra.mrb[0].mxu0 %v2036
        %v2219 = vpop.f32.mrb[0].mxu0
        %v2220 = vadd.f32 0.0, %v2219
        %v2221 = vpop.f32.mrb[0].mxu0
        %2222 = vmatprep.mubr.f32.mxu0 0.0
        %2223 = vmatmul.mubr.f32.gmra.mrb[0].mxu0 %v2039
        %v2224 = vpop.f32.mrb[0].mxu0
        %v2225 = vadd.f32 0.0, %v2224
        %v2226 = vpop.f32.mrb[0].mxu0
        %2227 = vmatprep.mubr.f32.mxu0 0.0
        %2228 = vmatmul.mubr.f32.gmra.mrb[0].mxu0 %v2042
        %v2229 = vpop.f32.mrb[0].mxu0
        %v2230 = vadd.f32 0.0, %v2229
        %v2231 = vpop.f32.mrb[0].mxu0
        %2232 = vmatprep.mubr.f32.mxu0 0.0
        %2233 = vmatmul.mubr.f32.gmra.mrb[0].mxu0 %v2045
        %v2234 = vpop.f32.mrb[0].mxu0
        %v2235 = vadd.f32 0.0, %v2234
        %v2236 = vpop.f32.mrb[0].mxu0
        %2237 = vmatprep.mubr.f32.mxu0 0.0
        %2238 = vmatmul.mubr.f32.gmra.mrb[0].mxu0 %v2048
        %v2239 = vpop.f32.mrb[0].mxu0
        %v2240 = vadd.f32 0.0, %v2239
        %v2241 = vpop.f32.mrb[0].mxu0
        %2242 = vmatprep.mubr.f32.mxu0 0.0
        %2243 = vmatmul.mubr.f32.gmra.mrb[0].mxu0 %v2051
        %v2244 = vpop.f32.mrb[0].mxu0
        %v2245 = vadd.f32 0.0, %v2244
        %v2246 = vpop.f32.mrb[0].mxu0
        %2247 = vmatprep.mubr.f32.mxu0 0.0
        %2248 = vmatmul.mubr.f32.gmra.mrb[0].mxu0 %v2054
        %v2249 = vpop.f32.mrb[0].mxu0
        %v2250 = vadd.f32 0.0, %v2249
        %v2251 = vpop.f32.mrb[0].mxu0
        %2252 = vmatprep.mubr.f32.mxu0 0.0
        %2253 = vmatmul.mubr.f32.gmra.mrb[0].mxu0 %v2057
        %v2254 = vpop.f32.mrb[0].mxu0
        %v2255 = vadd.f32 0.0, %v2254
        %v2256 = vpop.f32.mrb[0].mxu0
        %2257 = vmatprep.mubr.f32.mxu0 0.0
        %2258 = vmatmul.mubr.f32.gmra.mrb[0].mxu0 %v2060
        %v2259 = vpop.f32.mrb[0].mxu0
        %v2260 = vadd.f32 0.0, %v2259
        %v2261 = vpop.f32.mrb[0].mxu0
        %2262 = vmatprep.mubr.f32.mxu0 0.0
        %2263 = vmatmul.mubr.f32.gmra.mrb[0].mxu0 %v2063
        %v2264 = vpop.f32.mrb[0].mxu0
        %v2265 = vadd.f32 0.0, %v2264
        %v2266 = vpop.f32.mrb[0].mxu0
        %2267 = vmatprep.mubr.f32.mxu0 0.0
        %2268 = vmatmul.mubr.f32.gmra.mrb[0].mxu0 %v2066
        %v2269 = vpop.f32.mrb[0].mxu0
        %v2270 = vadd.f32 0.0, %v2269
        %v2271 = vpop.f32.mrb[0].mxu0
        %2272 = vmatprep.mubr.f32.mxu0 0.0
        %2273 = vmatmul.mubr.f32.gmra.mrb[0].mxu0 %v2069
        %v2274 = vpop.f32.mrb[0].mxu0
        %v2275 = vadd.f32 0.0, %v2274
        %v2276 = vpop.f32.mrb[0].mxu0
        %2277 = vmatprep.mubr.f32.mxu0 0.0
        %2278 = vmatmul.mubr.f32.gmra.mrb[0].mxu0 %v2072
        %v2279 = vpop.f32.mrb[0].mxu0
        %v2280 = vadd.f32 0.0, %v2279
        %v2281 = vpop.f32.mrb[0].mxu0
        %2282 = vmatprep.mubr.f32.mxu0 0.0
        %2283 = vmatmul.mubr.f32.gmra.mrb[0].mxu0 %v2075
        %v2284 = vpop.f32.mrb[0].mxu0
        %v2285 = vadd.f32 0.0, %v2284
        %v2286 = vpop.f32.mrb[0].mxu0
        %2287 = vmatprep.mubr.f32.mxu0 0.0
        %2288 = vmatmul.mubr.f32.gmra.mrb[0].mxu0 %v2078
        %v2289 = vpop.f32.mrb[0].mxu0
        %v2290 = vadd.f32 0.0, %v2289
        %v2291 = vpop.f32.mrb[0].mxu0
        %2292 = vmatprep.mubr.f32.mxu0 0.0
        %2293 = vmatmul.mubr.f32.gmra.mrb[0].mxu0 %v2081
        %v2294 = vpop.f32.mrb[0].mxu0
        %v2295 = vadd.f32 0.0, %v2294
        %v2296 = vpop.f32.mrb[0].mxu0
        %2297 = vmatprep.mubr.f32.mxu0 0.0
        %2298 = vmatmul.mubr.f32.gmra.mrb[0].mxu0 %v2084
        %v2299 = vpop.f32.mrb[0].mxu0
        %v2300 = vadd.f32 0.0, %v2299
        %v2301 = vpop.f32.mrb[0].mxu0
        %2302 = vmatprep.mubr.f32.mxu0 0.0
        %2303 = vmatmul.mubr.f32.gmra.mrb[0].mxu0 %v2087
        %v2304 = vpop.f32.mrb[0].mxu0
        %v2305 = vadd.f32 0.0, %v2304
        %v2306 = vpop.f32.mrb[0].mxu0
        %2307 = vmatprep.mubr.f32.mxu0 0.0
        %2308 = vmatmul.mubr.f32.gmra.mrb[0].mxu0 %v2090
        %v2309 = vpop.f32.mrb[0].mxu0
        %v2310 = vadd.f32 0.0, %v2309
        %v2311 = vpop.f32.mrb[0].mxu0
        %2312 = vmatprep.mubr.f32.mxu0 0.0
        %2313 = vmatmul.mubr.f32.gmra.mrb[0].mxu0 %v2093
        %v2314 = vpop.f32.mrb[0].mxu0
        %v2315 = vadd.f32 0.0, %v2314
        %v2316 = vpop.f32.mrb[0].mxu0
        %2317 = vmatprep.mubr.f32.mxu0 0.0
        %2318 = vmatmul.mubr.f32.gmra.mrb[0].mxu0 %v2096
        %v2319 = vpop.f32.mrb[0].mxu0
        %v2320 = vadd.f32 0.0, %v2319
        %v2321 = vpop.f32.mrb[0].mxu0
        %2322 = vdwg.mxu0
        %v2323 = vsel %vm614, %v2165, -inf
        %v2324 = vsel %vm614, %v2170, -inf
        %v2325 = vmax.f32 %v2323, %v2324
        %v2326 = vrot.slane %v2325, 4
        %v2327 = vmax.f32 %v2325, %v2326
        %v2328 = vrot.slane %v2327, 2
        %v2329 = vmax.f32 %v2327, %v2328
        %v2330 = vrot.slane %v2329, 1
        %v2331 = vmax.f32 %v2329, %v2330
        %v2332 = vsel %vm614, %v2175, -inf
        %v2333 = vsel %vm614, %v2180, -inf
        %v2334 = vmax.f32 %v2332, %v2333
        %v2335 = vrot.slane %v2334, 4
        %v2336 = vmax.f32 %v2334, %v2335
        %v2337 = vrot.slane %v2336, 2
        %v2338 = vmax.f32 %v2336, %v2337
        %v2339 = vrot.slane %v2338, 1
        %v2340 = vmax.f32 %v2338, %v2339
        %v2341 = vsel %vm614, %v2185, -inf
        %v2342 = vsel %vm614, %v2190, -inf
        %v2343 = vmax.f32 %v2341, %v2342
        %v2344 = vrot.slane %v2343, 4
        %v2345 = vmax.f32 %v2343, %v2344
        %v2346 = vrot.slane %v2345, 2
        %v2347 = vmax.f32 %v2345, %v2346
        %v2348 = vrot.slane %v2347, 1
        %v2349 = vmax.f32 %v2347, %v2348
        %v2350 = vsel %vm614, %v2195, -inf
        %v2351 = vsel %vm614, %v2200, -inf
        %v2352 = vmax.f32 %v2350, %v2351
        %v2353 = vrot.slane %v2352, 4
        %v2354 = vmax.f32 %v2352, %v2353
        %v2355 = vrot.slane %v2354, 2
        %v2356 = vmax.f32 %v2354, %v2355
        %v2357 = vrot.slane %v2356, 1
        %v2358 = vmax.f32 %v2356, %v2357
        %v2359 = vsel %vm614, %v2205, -inf
        %v2360 = vsel %vm614, %v2210, -inf
        %v2361 = vmax.f32 %v2359, %v2360
        %v2362 = vrot.slane %v2361, 4
        %v2363 = vmax.f32 %v2361, %v2362
        %v2364 = vrot.slane %v2363, 2
        %v2365 = vmax.f32 %v2363, %v2364
        %v2366 = vrot.slane %v2365, 1
        %v2367 = vmax.f32 %v2365, %v2366
        %v2368 = vsel %vm614, %v2215, -inf
        %v2369 = vsel %vm614, %v2220, -inf
        %v2370 = vmax.f32 %v2368, %v2369
        %v2371 = vrot.slane %v2370, 4
        %v2372 = vmax.f32 %v2370, %v2371
        %v2373 = vrot.slane %v2372, 2
        %v2374 = vmax.f32 %v2372, %v2373
        %v2375 = vrot.slane %v2374, 1
        %v2376 = vmax.f32 %v2374, %v2375
        %v2377 = vsel %vm614, %v2225, -inf
        %v2378 = vsel %vm614, %v2230, -inf
        %v2379 = vmax.f32 %v2377, %v2378
        %v2380 = vrot.slane %v2379, 4
        %v2381 = vmax.f32 %v2379, %v2380
        %v2382 = vrot.slane %v2381, 2
        %v2383 = vmax.f32 %v2381, %v2382
        %v2384 = vrot.slane %v2383, 1
        %v2385 = vmax.f32 %v2383, %v2384
        %v2386 = vsel %vm614, %v2235, -inf
        %v2387 = vsel %vm614, %v2240, -inf
        %v2388 = vmax.f32 %v2386, %v2387
        %v2389 = vrot.slane %v2388, 4
        %v2390 = vmax.f32 %v2388, %v2389
        %v2391 = vrot.slane %v2390, 2
        %v2392 = vmax.f32 %v2390, %v2391
        %v2393 = vrot.slane %v2392, 1
        %v2394 = vmax.f32 %v2392, %v2393
        %v2395 = vsel %vm614, %v2245, -inf
        %v2396 = vsel %vm614, %v2250, -inf
        %v2397 = vmax.f32 %v2395, %v2396
        %v2398 = vrot.slane %v2397, 4
        %v2399 = vmax.f32 %v2397, %v2398
        %v2400 = vrot.slane %v2399, 2
        %v2401 = vmax.f32 %v2399, %v2400
        %v2402 = vrot.slane %v2401, 1
        %v2403 = vmax.f32 %v2401, %v2402
        %v2404 = vsel %vm614, %v2255, -inf
        %v2405 = vsel %vm614, %v2260, -inf
        %v2406 = vmax.f32 %v2404, %v2405
        %v2407 = vrot.slane %v2406, 4
        %v2408 = vmax.f32 %v2406, %v2407
        %v2409 = vrot.slane %v2408, 2
        %v2410 = vmax.f32 %v2408, %v2409
        %v2411 = vrot.slane %v2410, 1
        %v2412 = vmax.f32 %v2410, %v2411
        %v2413 = vsel %vm614, %v2265, -inf
        %v2414 = vsel %vm614, %v2270, -inf
        %v2415 = vmax.f32 %v2413, %v2414
        %v2416 = vrot.slane %v2415, 4
        %v2417 = vmax.f32 %v2415, %v2416
        %v2418 = vrot.slane %v2417, 2
        %v2419 = vmax.f32 %v2417, %v2418
        %v2420 = vrot.slane %v2419, 1
        %v2421 = vmax.f32 %v2419, %v2420
        %v2422 = vsel %vm614, %v2275, -inf
        %v2423 = vsel %vm614, %v2280, -inf
        %v2424 = vmax.f32 %v2422, %v2423
        %v2425 = vrot.slane %v2424, 4
        %v2426 = vmax.f32 %v2424, %v2425
        %v2427 = vrot.slane %v2426, 2
        %v2428 = vmax.f32 %v2426, %v2427
        %v2429 = vrot.slane %v2428, 1
        %v2430 = vmax.f32 %v2428, %v2429
        %v2431 = vsel %vm614, %v2285, -inf
        %v2432 = vsel %vm614, %v2290, -inf
        %v2433 = vmax.f32 %v2431, %v2432
        %v2434 = vrot.slane %v2433, 4
        %v2435 = vmax.f32 %v2433, %v2434
        %v2436 = vrot.slane %v2435, 2
        %v2437 = vmax.f32 %v2435, %v2436
        %v2438 = vrot.slane %v2437, 1
        %v2439 = vmax.f32 %v2437, %v2438
        %v2440 = vsel %vm614, %v2295, -inf
        %v2441 = vsel %vm614, %v2300, -inf
        %v2442 = vmax.f32 %v2440, %v2441
        %v2443 = vrot.slane %v2442, 4
        %v2444 = vmax.f32 %v2442, %v2443
        %v2445 = vrot.slane %v2444, 2
        %v2446 = vmax.f32 %v2444, %v2445
        %v2447 = vrot.slane %v2446, 1
        %v2448 = vmax.f32 %v2446, %v2447
        %v2449 = vsel %vm614, %v2305, -inf
        %v2450 = vsel %vm614, %v2310, -inf
        %v2451 = vmax.f32 %v2449, %v2450
        %v2452 = vrot.slane %v2451, 4
        %v2453 = vmax.f32 %v2451, %v2452
        %v2454 = vrot.slane %v2453, 2
        %v2455 = vmax.f32 %v2453, %v2454
        %v2456 = vrot.slane %v2455, 1
        %v2457 = vmax.f32 %v2455, %v2456
        %v2458 = vsel %vm614, %v2315, -inf
        %v2459 = vsel %vm614, %v2320, -inf
        %v2460 = vmax.f32 %v2458, %v2459
        %v2461 = vrot.slane %v2460, 4
        %v2462 = vmax.f32 %v2460, %v2461
        %v2463 = vrot.slane %v2462, 2
        %v2464 = vmax.f32 %v2462, %v2463
        %v2465 = vrot.slane %v2464, 1
        %v2466 = vmax.f32 %v2464, %v2465
        %v2483 = vsel %vm775, %v2340, %v2331
        %v2484 = vsel %vm777, %v2349, %v2483
        %v2485 = vsel %vm779, %v2358, %v2484
        %v2486 = vsel %vm781, %v2367, %v2485
        %v2487 = vsel %vm783, %v2376, %v2486
        %v2488 = vsel %vm785, %v2385, %v2487
        %v2489 = vsel %vm787, %v2394, %v2488
        %v2490 = vsel %vm775, %v2412, %v2403
        %v2491 = vsel %vm777, %v2421, %v2490
        %v2492 = vsel %vm779, %v2430, %v2491
        %v2493 = vsel %vm781, %v2439, %v2492
        %v2494 = vsel %vm783, %v2448, %v2493
        %v2495 = vsel %vm785, %v2457, %v2494
        %v2496 = vsel %vm787, %v2466, %v2495
        %2499 = vst.msk [vmem:[#allocation2 + $0x30] sm:$0xff] %vm614, %v2489
        %2500 = vst.msk [vmem:[#allocation2 + $0x38] sm:$0xff] %vm614, %v2496
        %v2501 = vld [vmem:[%s191 + $0x20] sm:$0xff]
        %v2503 = vcombine.high %v2501, %v2501
        %2505 = vxpose.xlu0.b32.start [1/16] %v2501, 128
        %2506 = vxpose.xlu0.b32.cont [2/16] 0.0, 128
        %2507 = vxpose.xlu0.b32.cont [3/16] 0.0, 128
        %2508 = vxpose.xlu0.b32.cont [4/16] 0.0, 128
        %2509 = vxpose.xlu0.b32.cont [5/16] 0.0, 128
        %2510 = vxpose.xlu0.b32.cont [6/16] 0.0, 128
        %2511 = vxpose.xlu0.b32.cont [7/16] 0.0, 128
        %2512 = vxpose.xlu0.b32.cont [8/16] 0.0, 128
        %2513 = vxpose.xlu0.b32.cont [9/16] 0.0, 128
        %2514 = vxpose.xlu0.b32.cont [10/16] 0.0, 128
        %2515 = vxpose.xlu0.b32.cont [11/16] 0.0, 128
        %2516 = vxpose.xlu0.b32.cont [12/16] 0.0, 128
        %2517 = vxpose.xlu0.b32.cont [13/16] 0.0, 128
        %2518 = vxpose.xlu0.b32.cont [14/16] 0.0, 128
        %2519 = vxpose.xlu0.b32.cont [15/16] 0.0, 128
        %2520 = vxpose.xlu0.b32.end [16/16] 0.0, 128
        %v2521 = vpop.trf.xlu0
        %v2522 = vpop.trf.xlu0
        %v2523 = vpop.trf.xlu0
        %v2524 = vpop.trf.xlu0
        %v2525 = vpop.trf.xlu0
        %v2526 = vpop.trf.xlu0
        %v2527 = vpop.trf.xlu0
        %v2528 = vpop.trf.xlu0
        %v2529 = vpop.trf.xlu0
        %v2530 = vpop.trf.xlu0
        %v2531 = vpop.trf.xlu0
        %v2532 = vpop.trf.xlu0
        %v2533 = vpop.trf.xlu0
        %v2534 = vpop.trf.xlu0
        %v2535 = vpop.trf.xlu0
        %v2536 = vpop.trf.xlu0
        %2537 = vxpose.xlu0.b32.start [1/16] %v2503, 128
        %2538 = vxpose.xlu0.b32.cont [2/16] 0.0, 128
        %2539 = vxpose.xlu0.b32.cont [3/16] 0.0, 128
        %2540 = vxpose.xlu0.b32.cont [4/16] 0.0, 128
        %2541 = vxpose.xlu0.b32.cont [5/16] 0.0, 128
        %2542 = vxpose.xlu0.b32.cont [6/16] 0.0, 128
        %2543 = vxpose.xlu0.b32.cont [7/16] 0.0, 128
        %2544 = vxpose.xlu0.b32.cont [8/16] 0.0, 128
        %2545 = vxpose.xlu0.b32.cont [9/16] 0.0, 128
        %2546 = vxpose.xlu0.b32.cont [10/16] 0.0, 128
        %2547 = vxpose.xlu0.b32.cont [11/16] 0.0, 128
        %2548 = vxpose.xlu0.b32.cont [12/16] 0.0, 128
        %2549 = vxpose.xlu0.b32.cont [13/16] 0.0, 128
        %2550 = vxpose.xlu0.b32.cont [14/16] 0.0, 128
        %2551 = vxpose.xlu0.b32.cont [15/16] 0.0, 128
        %2552 = vxpose.xlu0.b32.end [16/16] 0.0, 128
        %v2553 = vpop.trf.xlu0
        %v2554 = vpop.trf.xlu0
        %v2555 = vpop.trf.xlu0
        %v2556 = vpop.trf.xlu0
        %v2557 = vpop.trf.xlu0
        %v2558 = vpop.trf.xlu0
        %v2559 = vpop.trf.xlu0
        %v2560 = vpop.trf.xlu0
        %v2561 = vpop.trf.xlu0
        %v2562 = vpop.trf.xlu0
        %v2563 = vpop.trf.xlu0
        %v2564 = vpop.trf.xlu0
        %v2565 = vpop.trf.xlu0
        %v2566 = vpop.trf.xlu0
        %v2567 = vpop.trf.xlu0
        %v2568 = vpop.trf.xlu0
        %v2570 = vsel %vm288, %v2521, 0
        %v2573 = vsel %vm288, %v2522, 0
        %v2576 = vsel %vm288, %v2523, 0
        %v2579 = vsel %vm288, %v2524, 0
        %v2582 = vsel %vm288, %v2525, 0
        %v2585 = vsel %vm288, %v2526, 0
        %v2588 = vsel %vm288, %v2527, 0
        %v2591 = vsel %vm288, %v2528, 0
        %v2594 = vsel %vm288, %v2529, 0
        %v2597 = vsel %vm288, %v2530, 0
        %v2600 = vsel %vm288, %v2531, 0
        %v2603 = vsel %vm288, %v2532, 0
        %v2606 = vsel %vm288, %v2533, 0
        %v2609 = vsel %vm288, %v2534, 0
        %v2612 = vsel %vm288, %v2535, 0
        %v2615 = vsel %vm288, %v2536, 0
        %v2618 = vsel %vm288, %v2553, 0
        %v2621 = vsel %vm288, %v2554, 0
        %v2624 = vsel %vm288, %v2555, 0
        %v2627 = vsel %vm288, %v2556, 0
        %v2630 = vsel %vm288, %v2557, 0
        %v2633 = vsel %vm288, %v2558, 0
        %v2636 = vsel %vm288, %v2559, 0
        %v2639 = vsel %vm288, %v2560, 0
        %v2642 = vsel %vm288, %v2561, 0
        %v2645 = vsel %vm288, %v2562, 0
        %v2648 = vsel %vm288, %v2563, 0
        %v2651 = vsel %vm288, %v2564, 0
        %v2654 = vsel %vm288, %v2565, 0
        %v2657 = vsel %vm288, %v2566, 0
        %v2660 = vsel %vm288, %v2567, 0
        %v2663 = vsel %vm288, %v2568, 0
        %2665 = vmatprep.subr.mxu0 0.0
        %2666 = vmatpush1.msra.mxu0 %v387
        %2667 = vmatprep.subr.mxu0 0.0
        %2668 = vmatpush1.msra.mxu0 0.0
        %2669 = vmatprep.subr.mxu0 0.0
        %2670 = vmatpush1.msra.mxu0 0.0
        %2671 = vmatprep.subr.mxu0 0.0
        %2672 = vmatpush1.msra.mxu0 0.0
        %2673 = vmatprep.subr.mxu0 0.0
        %2674 = vmatpush1.msra.mxu0 0.0
        %2675 = vmatprep.subr.mxu0 0.0
        %2676 = vmatpush1.msra.mxu0 0.0
        %2677 = vmatprep.subr.mxu0 0.0
        %2678 = vmatpush1.msra.mxu0 0.0
        %2679 = vmatprep.subr.mxu0 0.0
        %2680 = vmatpush1.msra.mxu0 0.0
        %2681 = vmatprep.subr.mxu0 0.0
        %2682 = vmatpush1.msra.mxu0 0.0
        %2683 = vmatprep.subr.mxu0 0.0
        %2684 = vmatpush1.msra.mxu0 0.0
        %2685 = vmatprep.subr.mxu0 0.0
        %2686 = vmatpush1.msra.mxu0 0.0
        %2687 = vmatprep.subr.mxu0 0.0
        %2688 = vmatpush1.msra.mxu0 0.0
        %2689 = vmatprep.subr.mxu0 0.0
        %2690 = vmatpush1.msra.mxu0 0.0
        %2691 = vmatprep.subr.mxu0 0.0
        %2692 = vmatpush1.msra.mxu0 0.0
        %2693 = vmatprep.subr.mxu0 0.0
        %2694 = vmatpush1.msra.mxu0 0.0
        %2695 = vmatprep.subr.mxu0 0.0
        %2696 = vmatpush1.msra.mxu0 0.0
        %2697 = vmatprep.subr.mxu0 0.0
        %2698 = vmatpush1.msra.mxu0 0.0
        %2699 = vmatprep.subr.mxu0 0.0
        %2700 = vmatpush1.msra.mxu0 0.0
        %2701 = vmatprep.subr.mxu0 0.0
        %2702 = vmatpush1.msra.mxu0 0.0
        %2703 = vmatprep.subr.mxu0 0.0
        %2704 = vmatpush1.msra.mxu0 0.0
        %2705 = vmatprep.subr.mxu0 0.0
        %2706 = vmatpush1.msra.mxu0 0.0
        %2707 = vmatprep.subr.mxu0 0.0
        %2708 = vmatpush1.msra.mxu0 0.0
        %2709 = vmatprep.subr.mxu0 0.0
        %2710 = vmatpush1.msra.mxu0 0.0
        %2711 = vmatprep.subr.mxu0 0.0
        %2712 = vmatpush1.msra.mxu0 0.0
        %2713 = vmatprep.subr.mxu0 0.0
        %2714 = vmatpush1.msra.mxu0 0.0
        %2715 = vmatprep.subr.mxu0 0.0
        %2716 = vmatpush1.msra.mxu0 0.0
        %2717 = vmatprep.subr.mxu0 0.0
        %2718 = vmatpush1.msra.mxu0 0.0
        %2719 = vmatprep.subr.mxu0 0.0
        %2720 = vmatpush1.msra.mxu0 0.0
        %2721 = vmatprep.subr.mxu0 0.0
        %2722 = vmatpush1.msra.mxu0 0.0
        %2723 = vmatprep.subr.mxu0 0.0
        %2724 = vmatpush1.msra.mxu0 0.0
        %2725 = vmatprep.subr.mxu0 0.0
        %2726 = vmatpush1.msra.mxu0 0.0
        %2727 = vmatprep.subr.mxu0 0.0
        %2728 = vmatpush1.msra.mxu0 0.0
        %2729 = vmatprep.mubr.f32.mxu0 0.0
        %2730 = vmatmul.mubr.f32.gmra.mrb[0].mxu0 %v2570
        %v2731 = vpop.f32.mrb[0].mxu0
        %v2732 = vadd.f32 0.0, %v2731
        %v2733 = vpop.f32.mrb[0].mxu0
        %2734 = vmatprep.mubr.f32.mxu0 0.0
        %2735 = vmatmul.mubr.f32.gmra.mrb[0].mxu0 %v2573
        %v2736 = vpop.f32.mrb[0].mxu0
        %v2737 = vadd.f32 0.0, %v2736
        %v2738 = vpop.f32.mrb[0].mxu0
        %2739 = vmatprep.mubr.f32.mxu0 0.0
        %2740 = vmatmul.mubr.f32.gmra.mrb[0].mxu0 %v2576
        %v2741 = vpop.f32.mrb[0].mxu0
        %v2742 = vadd.f32 0.0, %v2741
        %v2743 = vpop.f32.mrb[0].mxu0
        %2744 = vmatprep.mubr.f32.mxu0 0.0
        %2745 = vmatmul.mubr.f32.gmra.mrb[0].mxu0 %v2579
        %v2746 = vpop.f32.mrb[0].mxu0
        %v2747 = vadd.f32 0.0, %v2746
        %v2748 = vpop.f32.mrb[0].mxu0
        %2749 = vmatprep.mubr.f32.mxu0 0.0
        %2750 = vmatmul.mubr.f32.gmra.mrb[0].mxu0 %v2582
        %v2751 = vpop.f32.mrb[0].mxu0
        %v2752 = vadd.f32 0.0, %v2751
        %v2753 = vpop.f32.mrb[0].mxu0
        %2754 = vmatprep.mubr.f32.mxu0 0.0
        %2755 = vmatmul.mubr.f32.gmra.mrb[0].mxu0 %v2585
        %v2756 = vpop.f32.mrb[0].mxu0
        %v2757 = vadd.f32 0.0, %v2756
        %v2758 = vpop.f32.mrb[0].mxu0
        %2759 = vmatprep.mubr.f32.mxu0 0.0
        %2760 = vmatmul.mubr.f32.gmra.mrb[0].mxu0 %v2588
        %v2761 = vpop.f32.mrb[0].mxu0
        %v2762 = vadd.f32 0.0, %v2761
        %v2763 = vpop.f32.mrb[0].mxu0
        %2764 = vmatprep.mubr.f32.mxu0 0.0
        %2765 = vmatmul.mubr.f32.gmra.mrb[0].mxu0 %v2591
        %v2766 = vpop.f32.mrb[0].mxu0
        %v2767 = vadd.f32 0.0, %v2766
        %v2768 = vpop.f32.mrb[0].mxu0
        %2769 = vmatprep.mubr.f32.mxu0 0.0
        %2770 = vmatmul.mubr.f32.gmra.mrb[0].mxu0 %v2594
        %v2771 = vpop.f32.mrb[0].mxu0
        %v2772 = vadd.f32 0.0, %v2771
        %v2773 = vpop.f32.mrb[0].mxu0
        %2774 = vmatprep.mubr.f32.mxu0 0.0
        %2775 = vmatmul.mubr.f32.gmra.mrb[0].mxu0 %v2597
        %v2776 = vpop.f32.mrb[0].mxu0
        %v2777 = vadd.f32 0.0, %v2776
        %v2778 = vpop.f32.mrb[0].mxu0
        %2779 = vmatprep.mubr.f32.mxu0 0.0
        %2780 = vmatmul.mubr.f32.gmra.mrb[0].mxu0 %v2600
        %v2781 = vpop.f32.mrb[0].mxu0
        %v2782 = vadd.f32 0.0, %v2781
        %v2783 = vpop.f32.mrb[0].mxu0
        %2784 = vmatprep.mubr.f32.mxu0 0.0
        %2785 = vmatmul.mubr.f32.gmra.mrb[0].mxu0 %v2603
        %v2786 = vpop.f32.mrb[0].mxu0
        %v2787 = vadd.f32 0.0, %v2786
        %v2788 = vpop.f32.mrb[0].mxu0
        %2789 = vmatprep.mubr.f32.mxu0 0.0
        %2790 = vmatmul.mubr.f32.gmra.mrb[0].mxu0 %v2606
        %v2791 = vpop.f32.mrb[0].mxu0
        %v2792 = vadd.f32 0.0, %v2791
        %v2793 = vpop.f32.mrb[0].mxu0
        %2794 = vmatprep.mubr.f32.mxu0 0.0
        %2795 = vmatmul.mubr.f32.gmra.mrb[0].mxu0 %v2609
        %v2796 = vpop.f32.mrb[0].mxu0
        %v2797 = vadd.f32 0.0, %v2796
        %v2798 = vpop.f32.mrb[0].mxu0
        %2799 = vmatprep.mubr.f32.mxu0 0.0
        %2800 = vmatmul.mubr.f32.gmra.mrb[0].mxu0 %v2612
        %v2801 = vpop.f32.mrb[0].mxu0
        %v2802 = vadd.f32 0.0, %v2801
        %v2803 = vpop.f32.mrb[0].mxu0
        %2804 = vmatprep.mubr.f32.mxu0 0.0
        %2805 = vmatmul.mubr.f32.gmra.mrb[0].mxu0 %v2615
        %v2806 = vpop.f32.mrb[0].mxu0
        %v2807 = vadd.f32 0.0, %v2806
        %v2808 = vpop.f32.mrb[0].mxu0
        %2809 = vmatprep.mubr.f32.mxu0 0.0
        %2810 = vmatmul.mubr.f32.gmra.mrb[0].mxu0 %v2618
        %v2811 = vpop.f32.mrb[0].mxu0
        %v2812 = vadd.f32 0.0, %v2811
        %v2813 = vpop.f32.mrb[0].mxu0
        %2814 = vmatprep.mubr.f32.mxu0 0.0
        %2815 = vmatmul.mubr.f32.gmra.mrb[0].mxu0 %v2621
        %v2816 = vpop.f32.mrb[0].mxu0
        %v2817 = vadd.f32 0.0, %v2816
        %v2818 = vpop.f32.mrb[0].mxu0
        %2819 = vmatprep.mubr.f32.mxu0 0.0
        %2820 = vmatmul.mubr.f32.gmra.mrb[0].mxu0 %v2624
        %v2821 = vpop.f32.mrb[0].mxu0
        %v2822 = vadd.f32 0.0, %v2821
        %v2823 = vpop.f32.mrb[0].mxu0
        %2824 = vmatprep.mubr.f32.mxu0 0.0
        %2825 = vmatmul.mubr.f32.gmra.mrb[0].mxu0 %v2627
        %v2826 = vpop.f32.mrb[0].mxu0
        %v2827 = vadd.f32 0.0, %v2826
        %v2828 = vpop.f32.mrb[0].mxu0
        %2829 = vmatprep.mubr.f32.mxu0 0.0
        %2830 = vmatmul.mubr.f32.gmra.mrb[0].mxu0 %v2630
        %v2831 = vpop.f32.mrb[0].mxu0
        %v2832 = vadd.f32 0.0, %v2831
        %v2833 = vpop.f32.mrb[0].mxu0
        %2834 = vmatprep.mubr.f32.mxu0 0.0
        %2835 = vmatmul.mubr.f32.gmra.mrb[0].mxu0 %v2633
        %v2836 = vpop.f32.mrb[0].mxu0
        %v2837 = vadd.f32 0.0, %v2836
        %v2838 = vpop.f32.mrb[0].mxu0
        %2839 = vmatprep.mubr.f32.mxu0 0.0
        %2840 = vmatmul.mubr.f32.gmra.mrb[0].mxu0 %v2636
        %v2841 = vpop.f32.mrb[0].mxu0
        %v2842 = vadd.f32 0.0, %v2841
        %v2843 = vpop.f32.mrb[0].mxu0
        %2844 = vmatprep.mubr.f32.mxu0 0.0
        %2845 = vmatmul.mubr.f32.gmra.mrb[0].mxu0 %v2639
        %v2846 = vpop.f32.mrb[0].mxu0
        %v2847 = vadd.f32 0.0, %v2846
        %v2848 = vpop.f32.mrb[0].mxu0
        %2849 = vmatprep.mubr.f32.mxu0 0.0
        %2850 = vmatmul.mubr.f32.gmra.mrb[0].mxu0 %v2642
        %v2851 = vpop.f32.mrb[0].mxu0
        %v2852 = vadd.f32 0.0, %v2851
        %v2853 = vpop.f32.mrb[0].mxu0
        %2854 = vmatprep.mubr.f32.mxu0 0.0
        %2855 = vmatmul.mubr.f32.gmra.mrb[0].mxu0 %v2645
        %v2856 = vpop.f32.mrb[0].mxu0
        %v2857 = vadd.f32 0.0, %v2856
        %v2858 = vpop.f32.mrb[0].mxu0
        %2859 = vmatprep.mubr.f32.mxu0 0.0
        %2860 = vmatmul.mubr.f32.gmra.mrb[0].mxu0 %v2648
        %v2861 = vpop.f32.mrb[0].mxu0
        %v2862 = vadd.f32 0.0, %v2861
        %v2863 = vpop.f32.mrb[0].mxu0
        %2864 = vmatprep.mubr.f32.mxu0 0.0
        %2865 = vmatmul.mubr.f32.gmra.mrb[0].mxu0 %v2651
        %v2866 = vpop.f32.mrb[0].mxu0
        %v2867 = vadd.f32 0.0, %v2866
        %v2868 = vpop.f32.mrb[0].mxu0
        %2869 = vmatprep.mubr.f32.mxu0 0.0
        %2870 = vmatmul.mubr.f32.gmra.mrb[0].mxu0 %v2654
        %v2871 = vpop.f32.mrb[0].mxu0
        %v2872 = vadd.f32 0.0, %v2871
        %v2873 = vpop.f32.mrb[0].mxu0
        %2874 = vmatprep.mubr.f32.mxu0 0.0
        %2875 = vmatmul.mubr.f32.gmra.mrb[0].mxu0 %v2657
        %v2876 = vpop.f32.mrb[0].mxu0
        %v2877 = vadd.f32 0.0, %v2876
        %v2878 = vpop.f32.mrb[0].mxu0
        %2879 = vmatprep.mubr.f32.mxu0 0.0
        %2880 = vmatmul.mubr.f32.gmra.mrb[0].mxu0 %v2660
        %v2881 = vpop.f32.mrb[0].mxu0
        %v2882 = vadd.f32 0.0, %v2881
        %v2883 = vpop.f32.mrb[0].mxu0
        %2884 = vmatprep.mubr.f32.mxu0 0.0
        %2885 = vmatmul.mubr.f32.gmra.mrb[0].mxu0 %v2663
        %v2886 = vpop.f32.mrb[0].mxu0
        %v2887 = vadd.f32 0.0, %v2886
        %v2888 = vpop.f32.mrb[0].mxu0
        %2889 = vdwg.mxu0
        %v2890 = vsel %vm614, %v2732, -inf
        %v2891 = vsel %vm614, %v2737, -inf
        %v2892 = vmax.f32 %v2890, %v2891
        %v2893 = vrot.slane %v2892, 4
        %v2894 = vmax.f32 %v2892, %v2893
        %v2895 = vrot.slane %v2894, 2
        %v2896 = vmax.f32 %v2894, %v2895
        %v2897 = vrot.slane %v2896, 1
        %v2898 = vmax.f32 %v2896, %v2897
        %v2899 = vsel %vm614, %v2742, -inf
        %v2900 = vsel %vm614, %v2747, -inf
        %v2901 = vmax.f32 %v2899, %v2900
        %v2902 = vrot.slane %v2901, 4
        %v2903 = vmax.f32 %v2901, %v2902
        %v2904 = vrot.slane %v2903, 2
        %v2905 = vmax.f32 %v2903, %v2904
        %v2906 = vrot.slane %v2905, 1
        %v2907 = vmax.f32 %v2905, %v2906
        %v2908 = vsel %vm614, %v2752, -inf
        %v2909 = vsel %vm614, %v2757, -inf
        %v2910 = vmax.f32 %v2908, %v2909
        %v2911 = vrot.slane %v2910, 4
        %v2912 = vmax.f32 %v2910, %v2911
        %v2913 = vrot.slane %v2912, 2
        %v2914 = vmax.f32 %v2912, %v2913
        %v2915 = vrot.slane %v2914, 1
        %v2916 = vmax.f32 %v2914, %v2915
        %v2917 = vsel %vm614, %v2762, -inf
        %v2918 = vsel %vm614, %v2767, -inf
        %v2919 = vmax.f32 %v2917, %v2918
        %v2920 = vrot.slane %v2919, 4
        %v2921 = vmax.f32 %v2919, %v2920
        %v2922 = vrot.slane %v2921, 2
        %v2923 = vmax.f32 %v2921, %v2922
        %v2924 = vrot.slane %v2923, 1
        %v2925 = vmax.f32 %v2923, %v2924
        %v2926 = vsel %vm614, %v2772, -inf
        %v2927 = vsel %vm614, %v2777, -inf
        %v2928 = vmax.f32 %v2926, %v2927
        %v2929 = vrot.slane %v2928, 4
        %v2930 = vmax.f32 %v2928, %v2929
        %v2931 = vrot.slane %v2930, 2
        %v2932 = vmax.f32 %v2930, %v2931
        %v2933 = vrot.slane %v2932, 1
        %v2934 = vmax.f32 %v2932, %v2933
        %v2935 = vsel %vm614, %v2782, -inf
        %v2936 = vsel %vm614, %v2787, -inf
        %v2937 = vmax.f32 %v2935, %v2936
        %v2938 = vrot.slane %v2937, 4
        %v2939 = vmax.f32 %v2937, %v2938
        %v2940 = vrot.slane %v2939, 2
        %v2941 = vmax.f32 %v2939, %v2940
        %v2942 = vrot.slane %v2941, 1
        %v2943 = vmax.f32 %v2941, %v2942
        %v2944 = vsel %vm614, %v2792, -inf
        %v2945 = vsel %vm614, %v2797, -inf
        %v2946 = vmax.f32 %v2944, %v2945
        %v2947 = vrot.slane %v2946, 4
        %v2948 = vmax.f32 %v2946, %v2947
        %v2949 = vrot.slane %v2948, 2
        %v2950 = vmax.f32 %v2948, %v2949
        %v2951 = vrot.slane %v2950, 1
        %v2952 = vmax.f32 %v2950, %v2951
        %v2953 = vsel %vm614, %v2802, -inf
        %v2954 = vsel %vm614, %v2807, -inf
        %v2955 = vmax.f32 %v2953, %v2954
        %v2956 = vrot.slane %v2955, 4
        %v2957 = vmax.f32 %v2955, %v2956
        %v2958 = vrot.slane %v2957, 2
        %v2959 = vmax.f32 %v2957, %v2958
        %v2960 = vrot.slane %v2959, 1
        %v2961 = vmax.f32 %v2959, %v2960
        %v2962 = vsel %vm614, %v2812, -inf
        %v2963 = vsel %vm614, %v2817, -inf
        %v2964 = vmax.f32 %v2962, %v2963
        %v2965 = vrot.slane %v2964, 4
        %v2966 = vmax.f32 %v2964, %v2965
        %v2967 = vrot.slane %v2966, 2
        %v2968 = vmax.f32 %v2966, %v2967
        %v2969 = vrot.slane %v2968, 1
        %v2970 = vmax.f32 %v2968, %v2969
        %v2971 = vsel %vm614, %v2822, -inf
        %v2972 = vsel %vm614, %v2827, -inf
        %v2973 = vmax.f32 %v2971, %v2972
        %v2974 = vrot.slane %v2973, 4
        %v2975 = vmax.f32 %v2973, %v2974
        %v2976 = vrot.slane %v2975, 2
        %v2977 = vmax.f32 %v2975, %v2976
        %v2978 = vrot.slane %v2977, 1
        %v2979 = vmax.f32 %v2977, %v2978
        %v2980 = vsel %vm614, %v2832, -inf
        %v2981 = vsel %vm614, %v2837, -inf
        %v2982 = vmax.f32 %v2980, %v2981
        %v2983 = vrot.slane %v2982, 4
        %v2984 = vmax.f32 %v2982, %v2983
        %v2985 = vrot.slane %v2984, 2
        %v2986 = vmax.f32 %v2984, %v2985
        %v2987 = vrot.slane %v2986, 1
        %v2988 = vmax.f32 %v2986, %v2987
        %v2989 = vsel %vm614, %v2842, -inf
        %v2990 = vsel %vm614, %v2847, -inf
        %v2991 = vmax.f32 %v2989, %v2990
        %v2992 = vrot.slane %v2991, 4
        %v2993 = vmax.f32 %v2991, %v2992
        %v2994 = vrot.slane %v2993, 2
        %v2995 = vmax.f32 %v2993, %v2994
        %v2996 = vrot.slane %v2995, 1
        %v2997 = vmax.f32 %v2995, %v2996
        %v2998 = vsel %vm614, %v2852, -inf
        %v2999 = vsel %vm614, %v2857, -inf
        %v3000 = vmax.f32 %v2998, %v2999
        %v3001 = vrot.slane %v3000, 4
        %v3002 = vmax.f32 %v3000, %v3001
        %v3003 = vrot.slane %v3002, 2
        %v3004 = vmax.f32 %v3002, %v3003
        %v3005 = vrot.slane %v3004, 1
        %v3006 = vmax.f32 %v3004, %v3005
        %v3007 = vsel %vm614, %v2862, -inf
        %v3008 = vsel %vm614, %v2867, -inf
        %v3009 = vmax.f32 %v3007, %v3008
        %v3010 = vrot.slane %v3009, 4
        %v3011 = vmax.f32 %v3009, %v3010
        %v3012 = vrot.slane %v3011, 2
        %v3013 = vmax.f32 %v3011, %v3012
        %v3014 = vrot.slane %v3013, 1
        %v3015 = vmax.f32 %v3013, %v3014
        %v3016 = vsel %vm614, %v2872, -inf
        %v3017 = vsel %vm614, %v2877, -inf
        %v3018 = vmax.f32 %v3016, %v3017
        %v3019 = vrot.slane %v3018, 4
        %v3020 = vmax.f32 %v3018, %v3019
        %v3021 = vrot.slane %v3020, 2
        %v3022 = vmax.f32 %v3020, %v3021
        %v3023 = vrot.slane %v3022, 1
        %v3024 = vmax.f32 %v3022, %v3023
        %v3025 = vsel %vm614, %v2882, -inf
        %v3026 = vsel %vm614, %v2887, -inf
        %v3027 = vmax.f32 %v3025, %v3026
        %v3028 = vrot.slane %v3027, 4
        %v3029 = vmax.f32 %v3027, %v3028
        %v3030 = vrot.slane %v3029, 2
        %v3031 = vmax.f32 %v3029, %v3030
        %v3032 = vrot.slane %v3031, 1
        %v3033 = vmax.f32 %v3031, %v3032
        %v3050 = vsel %vm775, %v2907, %v2898
        %v3051 = vsel %vm777, %v2916, %v3050
        %v3052 = vsel %vm779, %v2925, %v3051
        %v3053 = vsel %vm781, %v2934, %v3052
        %v3054 = vsel %vm783, %v2943, %v3053
        %v3055 = vsel %vm785, %v2952, %v3054
        %v3056 = vsel %vm787, %v2961, %v3055
        %v3057 = vsel %vm775, %v2979, %v2970
        %v3058 = vsel %vm777, %v2988, %v3057
        %v3059 = vsel %vm779, %v2997, %v3058
        %v3060 = vsel %vm781, %v3006, %v3059
        %v3061 = vsel %vm783, %v3015, %v3060
        %v3062 = vsel %vm785, %v3024, %v3061
        %v3063 = vsel %vm787, %v3033, %v3062
        %3066 = vst.msk [vmem:[#allocation2 + $0x40] sm:$0xff] %vm614, %v3056
        %3067 = vst.msk [vmem:[#allocation2 + $0x48] sm:$0xff] %vm614, %v3063
        %v3068 = vld [vmem:[%s191 + $0x28] sm:$0xff]
        %v3070 = vcombine.high %v3068, %v3068
        %3072 = vxpose.xlu0.b32.start [1/16] %v3068, 128
        %3073 = vxpose.xlu0.b32.cont [2/16] 0.0, 128
        %3074 = vxpose.xlu0.b32.cont [3/16] 0.0, 128
        %3075 = vxpose.xlu0.b32.cont [4/16] 0.0, 128
        %3076 = vxpose.xlu0.b32.cont [5/16] 0.0, 128
        %3077 = vxpose.xlu0.b32.cont [6/16] 0.0, 128
        %3078 = vxpose.xlu0.b32.cont [7/16] 0.0, 128
        %3079 = vxpose.xlu0.b32.cont [8/16] 0.0, 128
        %3080 = vxpose.xlu0.b32.cont [9/16] 0.0, 128
        %3081 = vxpose.xlu0.b32.cont [10/16] 0.0, 128
        %3082 = vxpose.xlu0.b32.cont [11/16] 0.0, 128
        %3083 = vxpose.xlu0.b32.cont [12/16] 0.0, 128
        %3084 = vxpose.xlu0.b32.cont [13/16] 0.0, 128
        %3085 = vxpose.xlu0.b32.cont [14/16] 0.0, 128
        %3086 = vxpose.xlu0.b32.cont [15/16] 0.0, 128
        %3087 = vxpose.xlu0.b32.end [16/16] 0.0, 128
        %v3088 = vpop.trf.xlu0
        %v3089 = vpop.trf.xlu0
        %v3090 = vpop.trf.xlu0
        %v3091 = vpop.trf.xlu0
        %v3092 = vpop.trf.xlu0
        %v3093 = vpop.trf.xlu0
        %v3094 = vpop.trf.xlu0
        %v3095 = vpop.trf.xlu0
        %v3096 = vpop.trf.xlu0
        %v3097 = vpop.trf.xlu0
        %v3098 = vpop.trf.xlu0
        %v3099 = vpop.trf.xlu0
        %v3100 = vpop.trf.xlu0
        %v3101 = vpop.trf.xlu0
        %v3102 = vpop.trf.xlu0
        %v3103 = vpop.trf.xlu0
        %3104 = vxpose.xlu0.b32.start [1/16] %v3070, 128
        %3105 = vxpose.xlu0.b32.cont [2/16] 0.0, 128
        %3106 = vxpose.xlu0.b32.cont [3/16] 0.0, 128
        %3107 = vxpose.xlu0.b32.cont [4/16] 0.0, 128
        %3108 = vxpose.xlu0.b32.cont [5/16] 0.0, 128
        %3109 = vxpose.xlu0.b32.cont [6/16] 0.0, 128
        %3110 = vxpose.xlu0.b32.cont [7/16] 0.0, 128
        %3111 = vxpose.xlu0.b32.cont [8/16] 0.0, 128
        %3112 = vxpose.xlu0.b32.cont [9/16] 0.0, 128
        %3113 = vxpose.xlu0.b32.cont [10/16] 0.0, 128
        %3114 = vxpose.xlu0.b32.cont [11/16] 0.0, 128
        %3115 = vxpose.xlu0.b32.cont [12/16] 0.0, 128
        %3116 = vxpose.xlu0.b32.cont [13/16] 0.0, 128
        %3117 = vxpose.xlu0.b32.cont [14/16] 0.0, 128
        %3118 = vxpose.xlu0.b32.cont [15/16] 0.0, 128
        %3119 = vxpose.xlu0.b32.end [16/16] 0.0, 128
        %v3120 = vpop.trf.xlu0
        %v3121 = vpop.trf.xlu0
        %v3122 = vpop.trf.xlu0
        %v3123 = vpop.trf.xlu0
        %v3124 = vpop.trf.xlu0
        %v3125 = vpop.trf.xlu0
        %v3126 = vpop.trf.xlu0
        %v3127 = vpop.trf.xlu0
        %v3128 = vpop.trf.xlu0
        %v3129 = vpop.trf.xlu0
        %v3130 = vpop.trf.xlu0
        %v3131 = vpop.trf.xlu0
        %v3132 = vpop.trf.xlu0
        %v3133 = vpop.trf.xlu0
        %v3134 = vpop.trf.xlu0
        %v3135 = vpop.trf.xlu0
        %v3137 = vsel %vm288, %v3088, 0
        %v3140 = vsel %vm288, %v3089, 0
        %v3143 = vsel %vm288, %v3090, 0
        %v3146 = vsel %vm288, %v3091, 0
        %v3149 = vsel %vm288, %v3092, 0
        %v3152 = vsel %vm288, %v3093, 0
        %v3155 = vsel %vm288, %v3094, 0
        %v3158 = vsel %vm288, %v3095, 0
        %v3161 = vsel %vm288, %v3096, 0
        %v3164 = vsel %vm288, %v3097, 0
        %v3167 = vsel %vm288, %v3098, 0
        %v3170 = vsel %vm288, %v3099, 0
        %v3173 = vsel %vm288, %v3100, 0
        %v3176 = vsel %vm288, %v3101, 0
        %v3179 = vsel %vm288, %v3102, 0
        %v3182 = vsel %vm288, %v3103, 0
        %v3185 = vsel %vm288, %v3120, 0
        %v3188 = vsel %vm288, %v3121, 0
        %v3191 = vsel %vm288, %v3122, 0
        %v3194 = vsel %vm288, %v3123, 0
        %v3197 = vsel %vm288, %v3124, 0
        %v3200 = vsel %vm288, %v3125, 0
        %v3203 = vsel %vm288, %v3126, 0
        %v3206 = vsel %vm288, %v3127, 0
        %v3209 = vsel %vm288, %v3128, 0
        %v3212 = vsel %vm288, %v3129, 0
        %v3215 = vsel %vm288, %v3130, 0
        %v3218 = vsel %vm288, %v3131, 0
        %v3221 = vsel %vm288, %v3132, 0
        %v3224 = vsel %vm288, %v3133, 0
        %v3227 = vsel %vm288, %v3134, 0
        %v3230 = vsel %vm288, %v3135, 0
        %3232 = vmatprep.subr.mxu0 0.0
        %3233 = vmatpush1.msra.mxu0 %v387
        %3234 = vmatprep.subr.mxu0 0.0
        %3235 = vmatpush1.msra.mxu0 0.0
        %3236 = vmatprep.subr.mxu0 0.0
        %3237 = vmatpush1.msra.mxu0 0.0
        %3238 = vmatprep.subr.mxu0 0.0
        %3239 = vmatpush1.msra.mxu0 0.0
        %3240 = vmatprep.subr.mxu0 0.0
        %3241 = vmatpush1.msra.mxu0 0.0
        %3242 = vmatprep.subr.mxu0 0.0
        %3243 = vmatpush1.msra.mxu0 0.0
        %3244 = vmatprep.subr.mxu0 0.0
        %3245 = vmatpush1.msra.mxu0 0.0
        %3246 = vmatprep.subr.mxu0 0.0
        %3247 = vmatpush1.msra.mxu0 0.0
        %3248 = vmatprep.subr.mxu0 0.0
        %3249 = vmatpush1.msra.mxu0 0.0
        %3250 = vmatprep.subr.mxu0 0.0
        %3251 = vmatpush1.msra.mxu0 0.0
        %3252 = vmatprep.subr.mxu0 0.0
        %3253 = vmatpush1.msra.mxu0 0.0
        %3254 = vmatprep.subr.mxu0 0.0
        %3255 = vmatpush1.msra.mxu0 0.0
        %3256 = vmatprep.subr.mxu0 0.0
        %3257 = vmatpush1.msra.mxu0 0.0
        %3258 = vmatprep.subr.mxu0 0.0
        %3259 = vmatpush1.msra.mxu0 0.0
        %3260 = vmatprep.subr.mxu0 0.0
        %3261 = vmatpush1.msra.mxu0 0.0
        %3262 = vmatprep.subr.mxu0 0.0
        %3263 = vmatpush1.msra.mxu0 0.0
        %3264 = vmatprep.subr.mxu0 0.0
        %3265 = vmatpush1.msra.mxu0 0.0
        %3266 = vmatprep.subr.mxu0 0.0
        %3267 = vmatpush1.msra.mxu0 0.0
        %3268 = vmatprep.subr.mxu0 0.0
        %3269 = vmatpush1.msra.mxu0 0.0
        %3270 = vmatprep.subr.mxu0 0.0
        %3271 = vmatpush1.msra.mxu0 0.0
        %3272 = vmatprep.subr.mxu0 0.0
        %3273 = vmatpush1.msra.mxu0 0.0
        %3274 = vmatprep.subr.mxu0 0.0
        %3275 = vmatpush1.msra.mxu0 0.0
        %3276 = vmatprep.subr.mxu0 0.0
        %3277 = vmatpush1.msra.mxu0 0.0
        %3278 = vmatprep.subr.mxu0 0.0
        %3279 = vmatpush1.msra.mxu0 0.0
        %3280 = vmatprep.subr.mxu0 0.0
        %3281 = vmatpush1.msra.mxu0 0.0
        %3282 = vmatprep.subr.mxu0 0.0
        %3283 = vmatpush1.msra.mxu0 0.0
        %3284 = vmatprep.subr.mxu0 0.0
        %3285 = vmatpush1.msra.mxu0 0.0
        %3286 = vmatprep.subr.mxu0 0.0
        %3287 = vmatpush1.msra.mxu0 0.0
        %3288 = vmatprep.subr.mxu0 0.0
        %3289 = vmatpush1.msra.mxu0 0.0
        %3290 = vmatprep.subr.mxu0 0.0
        %3291 = vmatpush1.msra.mxu0 0.0
        %3292 = vmatprep.subr.mxu0 0.0
        %3293 = vmatpush1.msra.mxu0 0.0
        %3294 = vmatprep.subr.mxu0 0.0
        %3295 = vmatpush1.msra.mxu0 0.0
        %3296 = vmatprep.mubr.f32.mxu0 0.0
        %3297 = vmatmul.mubr.f32.gmra.mrb[0].mxu0 %v3137
        %v3298 = vpop.f32.mrb[0].mxu0
        %v3299 = vadd.f32 0.0, %v3298
        %v3300 = vpop.f32.mrb[0].mxu0
        %3301 = vmatprep.mubr.f32.mxu0 0.0
        %3302 = vmatmul.mubr.f32.gmra.mrb[0].mxu0 %v3140
        %v3303 = vpop.f32.mrb[0].mxu0
        %v3304 = vadd.f32 0.0, %v3303
        %v3305 = vpop.f32.mrb[0].mxu0
        %3306 = vmatprep.mubr.f32.mxu0 0.0
        %3307 = vmatmul.mubr.f32.gmra.mrb[0].mxu0 %v3143
        %v3308 = vpop.f32.mrb[0].mxu0
        %v3309 = vadd.f32 0.0, %v3308
        %v3310 = vpop.f32.mrb[0].mxu0
        %3311 = vmatprep.mubr.f32.mxu0 0.0
        %3312 = vmatmul.mubr.f32.gmra.mrb[0].mxu0 %v3146
        %v3313 = vpop.f32.mrb[0].mxu0
        %v3314 = vadd.f32 0.0, %v3313
        %v3315 = vpop.f32.mrb[0].mxu0
        %3316 = vmatprep.mubr.f32.mxu0 0.0
        %3317 = vmatmul.mubr.f32.gmra.mrb[0].mxu0 %v3149
        %v3318 = vpop.f32.mrb[0].mxu0
        %v3319 = vadd.f32 0.0, %v3318
        %v3320 = vpop.f32.mrb[0].mxu0
        %3321 = vmatprep.mubr.f32.mxu0 0.0
        %3322 = vmatmul.mubr.f32.gmra.mrb[0].mxu0 %v3152
        %v3323 = vpop.f32.mrb[0].mxu0
        %v3324 = vadd.f32 0.0, %v3323
        %v3325 = vpop.f32.mrb[0].mxu0
        %3326 = vmatprep.mubr.f32.mxu0 0.0
        %3327 = vmatmul.mubr.f32.gmra.mrb[0].mxu0 %v3155
        %v3328 = vpop.f32.mrb[0].mxu0
        %v3329 = vadd.f32 0.0, %v3328
        %v3330 = vpop.f32.mrb[0].mxu0
        %3331 = vmatprep.mubr.f32.mxu0 0.0
        %3332 = vmatmul.mubr.f32.gmra.mrb[0].mxu0 %v3158
        %v3333 = vpop.f32.mrb[0].mxu0
        %v3334 = vadd.f32 0.0, %v3333
        %v3335 = vpop.f32.mrb[0].mxu0
        %3336 = vmatprep.mubr.f32.mxu0 0.0
        %3337 = vmatmul.mubr.f32.gmra.mrb[0].mxu0 %v3161
        %v3338 = vpop.f32.mrb[0].mxu0
        %v3339 = vadd.f32 0.0, %v3338
        %v3340 = vpop.f32.mrb[0].mxu0
        %3341 = vmatprep.mubr.f32.mxu0 0.0
        %3342 = vmatmul.mubr.f32.gmra.mrb[0].mxu0 %v3164
        %v3343 = vpop.f32.mrb[0].mxu0
        %v3344 = vadd.f32 0.0, %v3343
        %v3345 = vpop.f32.mrb[0].mxu0
        %3346 = vmatprep.mubr.f32.mxu0 0.0
        %3347 = vmatmul.mubr.f32.gmra.mrb[0].mxu0 %v3167
        %v3348 = vpop.f32.mrb[0].mxu0
        %v3349 = vadd.f32 0.0, %v3348
        %v3350 = vpop.f32.mrb[0].mxu0
        %3351 = vmatprep.mubr.f32.mxu0 0.0
        %3352 = vmatmul.mubr.f32.gmra.mrb[0].mxu0 %v3170
        %v3353 = vpop.f32.mrb[0].mxu0
        %v3354 = vadd.f32 0.0, %v3353
        %v3355 = vpop.f32.mrb[0].mxu0
        %3356 = vmatprep.mubr.f32.mxu0 0.0
        %3357 = vmatmul.mubr.f32.gmra.mrb[0].mxu0 %v3173
        %v3358 = vpop.f32.mrb[0].mxu0
        %v3359 = vadd.f32 0.0, %v3358
        %v3360 = vpop.f32.mrb[0].mxu0
        %3361 = vmatprep.mubr.f32.mxu0 0.0
        %3362 = vmatmul.mubr.f32.gmra.mrb[0].mxu0 %v3176
        %v3363 = vpop.f32.mrb[0].mxu0
        %v3364 = vadd.f32 0.0, %v3363
        %v3365 = vpop.f32.mrb[0].mxu0
        %3366 = vmatprep.mubr.f32.mxu0 0.0
        %3367 = vmatmul.mubr.f32.gmra.mrb[0].mxu0 %v3179
        %v3368 = vpop.f32.mrb[0].mxu0
        %v3369 = vadd.f32 0.0, %v3368
        %v3370 = vpop.f32.mrb[0].mxu0
        %3371 = vmatprep.mubr.f32.mxu0 0.0
        %3372 = vmatmul.mubr.f32.gmra.mrb[0].mxu0 %v3182
        %v3373 = vpop.f32.mrb[0].mxu0
        %v3374 = vadd.f32 0.0, %v3373
        %v3375 = vpop.f32.mrb[0].mxu0
        %3376 = vmatprep.mubr.f32.mxu0 0.0
        %3377 = vmatmul.mubr.f32.gmra.mrb[0].mxu0 %v3185
        %v3378 = vpop.f32.mrb[0].mxu0
        %v3379 = vadd.f32 0.0, %v3378
        %v3380 = vpop.f32.mrb[0].mxu0
        %3381 = vmatprep.mubr.f32.mxu0 0.0
        %3382 = vmatmul.mubr.f32.gmra.mrb[0].mxu0 %v3188
        %v3383 = vpop.f32.mrb[0].mxu0
        %v3384 = vadd.f32 0.0, %v3383
        %v3385 = vpop.f32.mrb[0].mxu0
        %3386 = vmatprep.mubr.f32.mxu0 0.0
        %3387 = vmatmul.mubr.f32.gmra.mrb[0].mxu0 %v3191
        %v3388 = vpop.f32.mrb[0].mxu0
        %v3389 = vadd.f32 0.0, %v3388
        %v3390 = vpop.f32.mrb[0].mxu0
        %3391 = vmatprep.mubr.f32.mxu0 0.0
        %3392 = vmatmul.mubr.f32.gmra.mrb[0].mxu0 %v3194
        %v3393 = vpop.f32.mrb[0].mxu0
        %v3394 = vadd.f32 0.0, %v3393
        %v3395 = vpop.f32.mrb[0].mxu0
        %3396 = vmatprep.mubr.f32.mxu0 0.0
        %3397 = vmatmul.mubr.f32.gmra.mrb[0].mxu0 %v3197
        %v3398 = vpop.f32.mrb[0].mxu0
        %v3399 = vadd.f32 0.0, %v3398
        %v3400 = vpop.f32.mrb[0].mxu0
        %3401 = vmatprep.mubr.f32.mxu0 0.0
        %3402 = vmatmul.mubr.f32.gmra.mrb[0].mxu0 %v3200
        %v3403 = vpop.f32.mrb[0].mxu0
        %v3404 = vadd.f32 0.0, %v3403
        %v3405 = vpop.f32.mrb[0].mxu0
        %3406 = vmatprep.mubr.f32.mxu0 0.0
        %3407 = vmatmul.mubr.f32.gmra.mrb[0].mxu0 %v3203
        %v3408 = vpop.f32.mrb[0].mxu0
        %v3409 = vadd.f32 0.0, %v3408
        %v3410 = vpop.f32.mrb[0].mxu0
        %3411 = vmatprep.mubr.f32.mxu0 0.0
        %3412 = vmatmul.mubr.f32.gmra.mrb[0].mxu0 %v3206
        %v3413 = vpop.f32.mrb[0].mxu0
        %v3414 = vadd.f32 0.0, %v3413
        %v3415 = vpop.f32.mrb[0].mxu0
        %3416 = vmatprep.mubr.f32.mxu0 0.0
        %3417 = vmatmul.mubr.f32.gmra.mrb[0].mxu0 %v3209
        %v3418 = vpop.f32.mrb[0].mxu0
        %v3419 = vadd.f32 0.0, %v3418
        %v3420 = vpop.f32.mrb[0].mxu0
        %3421 = vmatprep.mubr.f32.mxu0 0.0
        %3422 = vmatmul.mubr.f32.gmra.mrb[0].mxu0 %v3212
        %v3423 = vpop.f32.mrb[0].mxu0
        %v3424 = vadd.f32 0.0, %v3423
        %v3425 = vpop.f32.mrb[0].mxu0
        %3426 = vmatprep.mubr.f32.mxu0 0.0
        %3427 = vmatmul.mubr.f32.gmra.mrb[0].mxu0 %v3215
        %v3428 = vpop.f32.mrb[0].mxu0
        %v3429 = vadd.f32 0.0, %v3428
        %v3430 = vpop.f32.mrb[0].mxu0
        %3431 = vmatprep.mubr.f32.mxu0 0.0
        %3432 = vmatmul.mubr.f32.gmra.mrb[0].mxu0 %v3218
        %v3433 = vpop.f32.mrb[0].mxu0
        %v3434 = vadd.f32 0.0, %v3433
        %v3435 = vpop.f32.mrb[0].mxu0
        %3436 = vmatprep.mubr.f32.mxu0 0.0
        %3437 = vmatmul.mubr.f32.gmra.mrb[0].mxu0 %v3221
        %v3438 = vpop.f32.mrb[0].mxu0
        %v3439 = vadd.f32 0.0, %v3438
        %v3440 = vpop.f32.mrb[0].mxu0
        %3441 = vmatprep.mubr.f32.mxu0 0.0
        %3442 = vmatmul.mubr.f32.gmra.mrb[0].mxu0 %v3224
        %v3443 = vpop.f32.mrb[0].mxu0
        %v3444 = vadd.f32 0.0, %v3443
        %v3445 = vpop.f32.mrb[0].mxu0
        %3446 = vmatprep.mubr.f32.mxu0 0.0
        %3447 = vmatmul.mubr.f32.gmra.mrb[0].mxu0 %v3227
        %v3448 = vpop.f32.mrb[0].mxu0
        %v3449 = vadd.f32 0.0, %v3448
        %v3450 = vpop.f32.mrb[0].mxu0
        %3451 = vmatprep.mubr.f32.mxu0 0.0
        %3452 = vmatmul.mubr.f32.gmra.mrb[0].mxu0 %v3230
        %v3453 = vpop.f32.mrb[0].mxu0
        %v3454 = vadd.f32 0.0, %v3453
        %v3455 = vpop.f32.mrb[0].mxu0
        %3456 = vdwg.mxu0
        %v3457 = vsel %vm614, %v3299, -inf
        %v3458 = vsel %vm614, %v3304, -inf
        %v3459 = vmax.f32 %v3457, %v3458
        %v3460 = vrot.slane %v3459, 4
        %v3461 = vmax.f32 %v3459, %v3460
        %v3462 = vrot.slane %v3461, 2
        %v3463 = vmax.f32 %v3461, %v3462
        %v3464 = vrot.slane %v3463, 1
        %v3465 = vmax.f32 %v3463, %v3464
        %v3466 = vsel %vm614, %v3309, -inf
        %v3467 = vsel %vm614, %v3314, -inf
        %v3468 = vmax.f32 %v3466, %v3467
        %v3469 = vrot.slane %v3468, 4
        %v3470 = vmax.f32 %v3468, %v3469
        %v3471 = vrot.slane %v3470, 2
        %v3472 = vmax.f32 %v3470, %v3471
        %v3473 = vrot.slane %v3472, 1
        %v3474 = vmax.f32 %v3472, %v3473
        %v3475 = vsel %vm614, %v3319, -inf
        %v3476 = vsel %vm614, %v3324, -inf
        %v3477 = vmax.f32 %v3475, %v3476
        %v3478 = vrot.slane %v3477, 4
        %v3479 = vmax.f32 %v3477, %v3478
        %v3480 = vrot.slane %v3479, 2
        %v3481 = vmax.f32 %v3479, %v3480
        %v3482 = vrot.slane %v3481, 1
        %v3483 = vmax.f32 %v3481, %v3482
        %v3484 = vsel %vm614, %v3329, -inf
        %v3485 = vsel %vm614, %v3334, -inf
        %v3486 = vmax.f32 %v3484, %v3485
        %v3487 = vrot.slane %v3486, 4
        %v3488 = vmax.f32 %v3486, %v3487
        %v3489 = vrot.slane %v3488, 2
        %v3490 = vmax.f32 %v3488, %v3489
        %v3491 = vrot.slane %v3490, 1
        %v3492 = vmax.f32 %v3490, %v3491
        %v3493 = vsel %vm614, %v3339, -inf
        %v3494 = vsel %vm614, %v3344, -inf
        %v3495 = vmax.f32 %v3493, %v3494
        %v3496 = vrot.slane %v3495, 4
        %v3497 = vmax.f32 %v3495, %v3496
        %v3498 = vrot.slane %v3497, 2
        %v3499 = vmax.f32 %v3497, %v3498
        %v3500 = vrot.slane %v3499, 1
        %v3501 = vmax.f32 %v3499, %v3500
        %v3502 = vsel %vm614, %v3349, -inf
        %v3503 = vsel %vm614, %v3354, -inf
        %v3504 = vmax.f32 %v3502, %v3503
        %v3505 = vrot.slane %v3504, 4
        %v3506 = vmax.f32 %v3504, %v3505
        %v3507 = vrot.slane %v3506, 2
        %v3508 = vmax.f32 %v3506, %v3507
        %v3509 = vrot.slane %v3508, 1
        %v3510 = vmax.f32 %v3508, %v3509
        %v3511 = vsel %vm614, %v3359, -inf
        %v3512 = vsel %vm614, %v3364, -inf
        %v3513 = vmax.f32 %v3511, %v3512
        %v3514 = vrot.slane %v3513, 4
        %v3515 = vmax.f32 %v3513, %v3514
        %v3516 = vrot.slane %v3515, 2
        %v3517 = vmax.f32 %v3515, %v3516
        %v3518 = vrot.slane %v3517, 1
        %v3519 = vmax.f32 %v3517, %v3518
        %v3520 = vsel %vm614, %v3369, -inf
        %v3521 = vsel %vm614, %v3374, -inf
        %v3522 = vmax.f32 %v3520, %v3521
        %v3523 = vrot.slane %v3522, 4
        %v3524 = vmax.f32 %v3522, %v3523
        %v3525 = vrot.slane %v3524, 2
        %v3526 = vmax.f32 %v3524, %v3525
        %v3527 = vrot.slane %v3526, 1
        %v3528 = vmax.f32 %v3526, %v3527
        %v3529 = vsel %vm614, %v3379, -inf
        %v3530 = vsel %vm614, %v3384, -inf
        %v3531 = vmax.f32 %v3529, %v3530
        %v3532 = vrot.slane %v3531, 4
        %v3533 = vmax.f32 %v3531, %v3532
        %v3534 = vrot.slane %v3533, 2
        %v3535 = vmax.f32 %v3533, %v3534
        %v3536 = vrot.slane %v3535, 1
        %v3537 = vmax.f32 %v3535, %v3536
        %v3538 = vsel %vm614, %v3389, -inf
        %v3539 = vsel %vm614, %v3394, -inf
        %v3540 = vmax.f32 %v3538, %v3539
        %v3541 = vrot.slane %v3540, 4
        %v3542 = vmax.f32 %v3540, %v3541
        %v3543 = vrot.slane %v3542, 2
        %v3544 = vmax.f32 %v3542, %v3543
        %v3545 = vrot.slane %v3544, 1
        %v3546 = vmax.f32 %v3544, %v3545
        %v3547 = vsel %vm614, %v3399, -inf
        %v3548 = vsel %vm614, %v3404, -inf
        %v3549 = vmax.f32 %v3547, %v3548
        %v3550 = vrot.slane %v3549, 4
        %v3551 = vmax.f32 %v3549, %v3550
        %v3552 = vrot.slane %v3551, 2
        %v3553 = vmax.f32 %v3551, %v3552
        %v3554 = vrot.slane %v3553, 1
        %v3555 = vmax.f32 %v3553, %v3554
        %v3556 = vsel %vm614, %v3409, -inf
        %v3557 = vsel %vm614, %v3414, -inf
        %v3558 = vmax.f32 %v3556, %v3557
        %v3559 = vrot.slane %v3558, 4
        %v3560 = vmax.f32 %v3558, %v3559
        %v3561 = vrot.slane %v3560, 2
        %v3562 = vmax.f32 %v3560, %v3561
        %v3563 = vrot.slane %v3562, 1
        %v3564 = vmax.f32 %v3562, %v3563
        %v3565 = vsel %vm614, %v3419, -inf
        %v3566 = vsel %vm614, %v3424, -inf
        %v3567 = vmax.f32 %v3565, %v3566
        %v3568 = vrot.slane %v3567, 4
        %v3569 = vmax.f32 %v3567, %v3568
        %v3570 = vrot.slane %v3569, 2
        %v3571 = vmax.f32 %v3569, %v3570
        %v3572 = vrot.slane %v3571, 1
        %v3573 = vmax.f32 %v3571, %v3572
        %v3574 = vsel %vm614, %v3429, -inf
        %v3575 = vsel %vm614, %v3434, -inf
        %v3576 = vmax.f32 %v3574, %v3575
        %v3577 = vrot.slane %v3576, 4
        %v3578 = vmax.f32 %v3576, %v3577
        %v3579 = vrot.slane %v3578, 2
        %v3580 = vmax.f32 %v3578, %v3579
        %v3581 = vrot.slane %v3580, 1
        %v3582 = vmax.f32 %v3580, %v3581
        %v3583 = vsel %vm614, %v3439, -inf
        %v3584 = vsel %vm614, %v3444, -inf
        %v3585 = vmax.f32 %v3583, %v3584
        %v3586 = vrot.slane %v3585, 4
        %v3587 = vmax.f32 %v3585, %v3586
        %v3588 = vrot.slane %v3587, 2
        %v3589 = vmax.f32 %v3587, %v3588
        %v3590 = vrot.slane %v3589, 1
        %v3591 = vmax.f32 %v3589, %v3590
        %v3592 = vsel %vm614, %v3449, -inf
        %v3593 = vsel %vm614, %v3454, -inf
        %v3594 = vmax.f32 %v3592, %v3593
        %v3595 = vrot.slane %v3594, 4
        %v3596 = vmax.f32 %v3594, %v3595
        %v3597 = vrot.slane %v3596, 2
        %v3598 = vmax.f32 %v3596, %v3597
        %v3599 = vrot.slane %v3598, 1
        %v3600 = vmax.f32 %v3598, %v3599
        %v3617 = vsel %vm775, %v3474, %v3465
        %v3618 = vsel %vm777, %v3483, %v3617
        %v3619 = vsel %vm779, %v3492, %v3618
        %v3620 = vsel %vm781, %v3501, %v3619
        %v3621 = vsel %vm783, %v3510, %v3620
        %v3622 = vsel %vm785, %v3519, %v3621
        %v3623 = vsel %vm787, %v3528, %v3622
        %v3624 = vsel %vm775, %v3546, %v3537
        %v3625 = vsel %vm777, %v3555, %v3624
        %v3626 = vsel %vm779, %v3564, %v3625
        %v3627 = vsel %vm781, %v3573, %v3626
        %v3628 = vsel %vm783, %v3582, %v3627
        %v3629 = vsel %vm785, %v3591, %v3628
        %v3630 = vsel %vm787, %v3600, %v3629
        %3633 = vst.msk [vmem:[#allocation2 + $0x50] sm:$0xff] %vm614, %v3623
        %3634 = vst.msk [vmem:[#allocation2 + $0x58] sm:$0xff] %vm614, %v3630
        %v3635 = vld [vmem:[%s191 + $0x30] sm:$0xff]
        %v3637 = vcombine.high %v3635, %v3635
        %3639 = vxpose.xlu0.b32.start [1/16] %v3635, 128
        %3640 = vxpose.xlu0.b32.cont [2/16] 0.0, 128
        %3641 = vxpose.xlu0.b32.cont [3/16] 0.0, 128
        %3642 = vxpose.xlu0.b32.cont [4/16] 0.0, 128
        %3643 = vxpose.xlu0.b32.cont [5/16] 0.0, 128
        %3644 = vxpose.xlu0.b32.cont [6/16] 0.0, 128
        %3645 = vxpose.xlu0.b32.cont [7/16] 0.0, 128
        %3646 = vxpose.xlu0.b32.cont [8/16] 0.0, 128
        %3647 = vxpose.xlu0.b32.cont [9/16] 0.0, 128
        %3648 = vxpose.xlu0.b32.cont [10/16] 0.0, 128
        %3649 = vxpose.xlu0.b32.cont [11/16] 0.0, 128
        %3650 = vxpose.xlu0.b32.cont [12/16] 0.0, 128
        %3651 = vxpose.xlu0.b32.cont [13/16] 0.0, 128
        %3652 = vxpose.xlu0.b32.cont [14/16] 0.0, 128
        %3653 = vxpose.xlu0.b32.cont [15/16] 0.0, 128
        %3654 = vxpose.xlu0.b32.end [16/16] 0.0, 128
        %v3655 = vpop.trf.xlu0
        %v3656 = vpop.trf.xlu0
        %v3657 = vpop.trf.xlu0
        %v3658 = vpop.trf.xlu0
        %v3659 = vpop.trf.xlu0
        %v3660 = vpop.trf.xlu0
        %v3661 = vpop.trf.xlu0
        %v3662 = vpop.trf.xlu0
        %v3663 = vpop.trf.xlu0
        %v3664 = vpop.trf.xlu0
        %v3665 = vpop.trf.xlu0
        %v3666 = vpop.trf.xlu0
        %v3667 = vpop.trf.xlu0
        %v3668 = vpop.trf.xlu0
        %v3669 = vpop.trf.xlu0
        %v3670 = vpop.trf.xlu0
        %3671 = vxpose.xlu0.b32.start [1/16] %v3637, 128
        %3672 = vxpose.xlu0.b32.cont [2/16] 0.0, 128
        %3673 = vxpose.xlu0.b32.cont [3/16] 0.0, 128
        %3674 = vxpose.xlu0.b32.cont [4/16] 0.0, 128
        %3675 = vxpose.xlu0.b32.cont [5/16] 0.0, 128
        %3676 = vxpose.xlu0.b32.cont [6/16] 0.0, 128
        %3677 = vxpose.xlu0.b32.cont [7/16] 0.0, 128
        %3678 = vxpose.xlu0.b32.cont [8/16] 0.0, 128
        %3679 = vxpose.xlu0.b32.cont [9/16] 0.0, 128
        %3680 = vxpose.xlu0.b32.cont [10/16] 0.0, 128
        %3681 = vxpose.xlu0.b32.cont [11/16] 0.0, 128
        %3682 = vxpose.xlu0.b32.cont [12/16] 0.0, 128
        %3683 = vxpose.xlu0.b32.cont [13/16] 0.0, 128
        %3684 = vxpose.xlu0.b32.cont [14/16] 0.0, 128
        %3685 = vxpose.xlu0.b32.cont [15/16] 0.0, 128
        %3686 = vxpose.xlu0.b32.end [16/16] 0.0, 128
        %v3687 = vpop.trf.xlu0
        %v3688 = vpop.trf.xlu0
        %v3689 = vpop.trf.xlu0
        %v3690 = vpop.trf.xlu0
        %v3691 = vpop.trf.xlu0
        %v3692 = vpop.trf.xlu0
        %v3693 = vpop.trf.xlu0
        %v3694 = vpop.trf.xlu0
        %v3695 = vpop.trf.xlu0
        %v3696 = vpop.trf.xlu0
        %v3697 = vpop.trf.xlu0
        %v3698 = vpop.trf.xlu0
        %v3699 = vpop.trf.xlu0
        %v3700 = vpop.trf.xlu0
        %v3701 = vpop.trf.xlu0
        %v3702 = vpop.trf.xlu0
        %v3704 = vsel %vm288, %v3655, 0
        %v3707 = vsel %vm288, %v3656, 0
        %v3710 = vsel %vm288, %v3657, 0
        %v3713 = vsel %vm288, %v3658, 0
        %v3716 = vsel %vm288, %v3659, 0
        %v3719 = vsel %vm288, %v3660, 0
        %v3722 = vsel %vm288, %v3661, 0
        %v3725 = vsel %vm288, %v3662, 0
        %v3728 = vsel %vm288, %v3663, 0
        %v3731 = vsel %vm288, %v3664, 0
        %v3734 = vsel %vm288, %v3665, 0
        %v3737 = vsel %vm288, %v3666, 0
        %v3740 = vsel %vm288, %v3667, 0
        %v3743 = vsel %vm288, %v3668, 0
        %v3746 = vsel %vm288, %v3669, 0
        %v3749 = vsel %vm288, %v3670, 0
        %v3752 = vsel %vm288, %v3687, 0
        %v3755 = vsel %vm288, %v3688, 0
        %v3758 = vsel %vm288, %v3689, 0
        %v3761 = vsel %vm288, %v3690, 0
        %v3764 = vsel %vm288, %v3691, 0
        %v3767 = vsel %vm288, %v3692, 0
        %v3770 = vsel %vm288, %v3693, 0
        %v3773 = vsel %vm288, %v3694, 0
        %v3776 = vsel %vm288, %v3695, 0
        %v3779 = vsel %vm288, %v3696, 0
        %v3782 = vsel %vm288, %v3697, 0
        %v3785 = vsel %vm288, %v3698, 0
        %v3788 = vsel %vm288, %v3699, 0
        %v3791 = vsel %vm288, %v3700, 0
        %v3794 = vsel %vm288, %v3701, 0
        %v3797 = vsel %vm288, %v3702, 0
        %3799 = vmatprep.subr.mxu0 0.0
        %3800 = vmatpush1.msra.mxu0 %v387
        %3801 = vmatprep.subr.mxu0 0.0
        %3802 = vmatpush1.msra.mxu0 0.0
        %3803 = vmatprep.subr.mxu0 0.0
        %3804 = vmatpush1.msra.mxu0 0.0
        %3805 = vmatprep.subr.mxu0 0.0
        %3806 = vmatpush1.msra.mxu0 0.0
        %3807 = vmatprep.subr.mxu0 0.0
        %3808 = vmatpush1.msra.mxu0 0.0
        %3809 = vmatprep.subr.mxu0 0.0
        %3810 = vmatpush1.msra.mxu0 0.0
        %3811 = vmatprep.subr.mxu0 0.0
        %3812 = vmatpush1.msra.mxu0 0.0
        %3813 = vmatprep.subr.mxu0 0.0
        %3814 = vmatpush1.msra.mxu0 0.0
        %3815 = vmatprep.subr.mxu0 0.0
        %3816 = vmatpush1.msra.mxu0 0.0
        %3817 = vmatprep.subr.mxu0 0.0
        %3818 = vmatpush1.msra.mxu0 0.0
        %3819 = vmatprep.subr.mxu0 0.0
        %3820 = vmatpush1.msra.mxu0 0.0
        %3821 = vmatprep.subr.mxu0 0.0
        %3822 = vmatpush1.msra.mxu0 0.0
        %3823 = vmatprep.subr.mxu0 0.0
        %3824 = vmatpush1.msra.mxu0 0.0
        %3825 = vmatprep.subr.mxu0 0.0
        %3826 = vmatpush1.msra.mxu0 0.0
        %3827 = vmatprep.subr.mxu0 0.0
        %3828 = vmatpush1.msra.mxu0 0.0
        %3829 = vmatprep.subr.mxu0 0.0
        %3830 = vmatpush1.msra.mxu0 0.0
        %3831 = vmatprep.subr.mxu0 0.0
        %3832 = vmatpush1.msra.mxu0 0.0
        %3833 = vmatprep.subr.mxu0 0.0
        %3834 = vmatpush1.msra.mxu0 0.0
        %3835 = vmatprep.subr.mxu0 0.0
        %3836 = vmatpush1.msra.mxu0 0.0
        %3837 = vmatprep.subr.mxu0 0.0
        %3838 = vmatpush1.msra.mxu0 0.0
        %3839 = vmatprep.subr.mxu0 0.0
        %3840 = vmatpush1.msra.mxu0 0.0
        %3841 = vmatprep.subr.mxu0 0.0
        %3842 = vmatpush1.msra.mxu0 0.0
        %3843 = vmatprep.subr.mxu0 0.0
        %3844 = vmatpush1.msra.mxu0 0.0
        %3845 = vmatprep.subr.mxu0 0.0
        %3846 = vmatpush1.msra.mxu0 0.0
        %3847 = vmatprep.subr.mxu0 0.0
        %3848 = vmatpush1.msra.mxu0 0.0
        %3849 = vmatprep.subr.mxu0 0.0
        %3850 = vmatpush1.msra.mxu0 0.0
        %3851 = vmatprep.subr.mxu0 0.0
        %3852 = vmatpush1.msra.mxu0 0.0
        %3853 = vmatprep.subr.mxu0 0.0
        %3854 = vmatpush1.msra.mxu0 0.0
        %3855 = vmatprep.subr.mxu0 0.0
        %3856 = vmatpush1.msra.mxu0 0.0
        %3857 = vmatprep.subr.mxu0 0.0
        %3858 = vmatpush1.msra.mxu0 0.0
        %3859 = vmatprep.subr.mxu0 0.0
        %3860 = vmatpush1.msra.mxu0 0.0
        %3861 = vmatprep.subr.mxu0 0.0
        %3862 = vmatpush1.msra.mxu0 0.0
        %3863 = vmatprep.mubr.f32.mxu0 0.0
        %3864 = vmatmul.mubr.f32.gmra.mrb[0].mxu0 %v3704
        %v3865 = vpop.f32.mrb[0].mxu0
        %v3866 = vadd.f32 0.0, %v3865
        %v3867 = vpop.f32.mrb[0].mxu0
        %3868 = vmatprep.mubr.f32.mxu0 0.0
        %3869 = vmatmul.mubr.f32.gmra.mrb[0].mxu0 %v3707
        %v3870 = vpop.f32.mrb[0].mxu0
        %v3871 = vadd.f32 0.0, %v3870
        %v3872 = vpop.f32.mrb[0].mxu0
        %3873 = vmatprep.mubr.f32.mxu0 0.0
        %3874 = vmatmul.mubr.f32.gmra.mrb[0].mxu0 %v3710
        %v3875 = vpop.f32.mrb[0].mxu0
        %v3876 = vadd.f32 0.0, %v3875
        %v3877 = vpop.f32.mrb[0].mxu0
        %3878 = vmatprep.mubr.f32.mxu0 0.0
        %3879 = vmatmul.mubr.f32.gmra.mrb[0].mxu0 %v3713
        %v3880 = vpop.f32.mrb[0].mxu0
        %v3881 = vadd.f32 0.0, %v3880
        %v3882 = vpop.f32.mrb[0].mxu0
        %3883 = vmatprep.mubr.f32.mxu0 0.0
        %3884 = vmatmul.mubr.f32.gmra.mrb[0].mxu0 %v3716
        %v3885 = vpop.f32.mrb[0].mxu0
        %v3886 = vadd.f32 0.0, %v3885
        %v3887 = vpop.f32.mrb[0].mxu0
        %3888 = vmatprep.mubr.f32.mxu0 0.0
        %3889 = vmatmul.mubr.f32.gmra.mrb[0].mxu0 %v3719
        %v3890 = vpop.f32.mrb[0].mxu0
        %v3891 = vadd.f32 0.0, %v3890
        %v3892 = vpop.f32.mrb[0].mxu0
        %3893 = vmatprep.mubr.f32.mxu0 0.0
        %3894 = vmatmul.mubr.f32.gmra.mrb[0].mxu0 %v3722
        %v3895 = vpop.f32.mrb[0].mxu0
        %v3896 = vadd.f32 0.0, %v3895
        %v3897 = vpop.f32.mrb[0].mxu0
        %3898 = vmatprep.mubr.f32.mxu0 0.0
        %3899 = vmatmul.mubr.f32.gmra.mrb[0].mxu0 %v3725
        %v3900 = vpop.f32.mrb[0].mxu0
        %v3901 = vadd.f32 0.0, %v3900
        %v3902 = vpop.f32.mrb[0].mxu0
        %3903 = vmatprep.mubr.f32.mxu0 0.0
        %3904 = vmatmul.mubr.f32.gmra.mrb[0].mxu0 %v3728
        %v3905 = vpop.f32.mrb[0].mxu0
        %v3906 = vadd.f32 0.0, %v3905
        %v3907 = vpop.f32.mrb[0].mxu0
        %3908 = vmatprep.mubr.f32.mxu0 0.0
        %3909 = vmatmul.mubr.f32.gmra.mrb[0].mxu0 %v3731
        %v3910 = vpop.f32.mrb[0].mxu0
        %v3911 = vadd.f32 0.0, %v3910
        %v3912 = vpop.f32.mrb[0].mxu0
        %3913 = vmatprep.mubr.f32.mxu0 0.0
        %3914 = vmatmul.mubr.f32.gmra.mrb[0].mxu0 %v3734
        %v3915 = vpop.f32.mrb[0].mxu0
        %v3916 = vadd.f32 0.0, %v3915
        %v3917 = vpop.f32.mrb[0].mxu0
        %3918 = vmatprep.mubr.f32.mxu0 0.0
        %3919 = vmatmul.mubr.f32.gmra.mrb[0].mxu0 %v3737
        %v3920 = vpop.f32.mrb[0].mxu0
        %v3921 = vadd.f32 0.0, %v3920
        %v3922 = vpop.f32.mrb[0].mxu0
        %3923 = vmatprep.mubr.f32.mxu0 0.0
        %3924 = vmatmul.mubr.f32.gmra.mrb[0].mxu0 %v3740
        %v3925 = vpop.f32.mrb[0].mxu0
        %v3926 = vadd.f32 0.0, %v3925
        %v3927 = vpop.f32.mrb[0].mxu0
        %3928 = vmatprep.mubr.f32.mxu0 0.0
        %3929 = vmatmul.mubr.f32.gmra.mrb[0].mxu0 %v3743
        %v3930 = vpop.f32.mrb[0].mxu0
        %v3931 = vadd.f32 0.0, %v3930
        %v3932 = vpop.f32.mrb[0].mxu0
        %3933 = vmatprep.mubr.f32.mxu0 0.0
        %3934 = vmatmul.mubr.f32.gmra.mrb[0].mxu0 %v3746
        %v3935 = vpop.f32.mrb[0].mxu0
        %v3936 = vadd.f32 0.0, %v3935
        %v3937 = vpop.f32.mrb[0].mxu0
        %3938 = vmatprep.mubr.f32.mxu0 0.0
        %3939 = vmatmul.mubr.f32.gmra.mrb[0].mxu0 %v3749
        %v3940 = vpop.f32.mrb[0].mxu0
        %v3941 = vadd.f32 0.0, %v3940
        %v3942 = vpop.f32.mrb[0].mxu0
        %3943 = vmatprep.mubr.f32.mxu0 0.0
        %3944 = vmatmul.mubr.f32.gmra.mrb[0].mxu0 %v3752
        %v3945 = vpop.f32.mrb[0].mxu0
        %v3946 = vadd.f32 0.0, %v3945
        %v3947 = vpop.f32.mrb[0].mxu0
        %3948 = vmatprep.mubr.f32.mxu0 0.0
        %3949 = vmatmul.mubr.f32.gmra.mrb[0].mxu0 %v3755
        %v3950 = vpop.f32.mrb[0].mxu0
        %v3951 = vadd.f32 0.0, %v3950
        %v3952 = vpop.f32.mrb[0].mxu0
        %3953 = vmatprep.mubr.f32.mxu0 0.0
        %3954 = vmatmul.mubr.f32.gmra.mrb[0].mxu0 %v3758
        %v3955 = vpop.f32.mrb[0].mxu0
        %v3956 = vadd.f32 0.0, %v3955
        %v3957 = vpop.f32.mrb[0].mxu0
        %3958 = vmatprep.mubr.f32.mxu0 0.0
        %3959 = vmatmul.mubr.f32.gmra.mrb[0].mxu0 %v3761
        %v3960 = vpop.f32.mrb[0].mxu0
        %v3961 = vadd.f32 0.0, %v3960
        %v3962 = vpop.f32.mrb[0].mxu0
        %3963 = vmatprep.mubr.f32.mxu0 0.0
        %3964 = vmatmul.mubr.f32.gmra.mrb[0].mxu0 %v3764
        %v3965 = vpop.f32.mrb[0].mxu0
        %v3966 = vadd.f32 0.0, %v3965
        %v3967 = vpop.f32.mrb[0].mxu0
        %3968 = vmatprep.mubr.f32.mxu0 0.0
        %3969 = vmatmul.mubr.f32.gmra.mrb[0].mxu0 %v3767
        %v3970 = vpop.f32.mrb[0].mxu0
        %v3971 = vadd.f32 0.0, %v3970
        %v3972 = vpop.f32.mrb[0].mxu0
        %3973 = vmatprep.mubr.f32.mxu0 0.0
        %3974 = vmatmul.mubr.f32.gmra.mrb[0].mxu0 %v3770
        %v3975 = vpop.f32.mrb[0].mxu0
        %v3976 = vadd.f32 0.0, %v3975
        %v3977 = vpop.f32.mrb[0].mxu0
        %3978 = vmatprep.mubr.f32.mxu0 0.0
        %3979 = vmatmul.mubr.f32.gmra.mrb[0].mxu0 %v3773
        %v3980 = vpop.f32.mrb[0].mxu0
        %v3981 = vadd.f32 0.0, %v3980
        %v3982 = vpop.f32.mrb[0].mxu0
        %3983 = vmatprep.mubr.f32.mxu0 0.0
        %3984 = vmatmul.mubr.f32.gmra.mrb[0].mxu0 %v3776
        %v3985 = vpop.f32.mrb[0].mxu0
        %v3986 = vadd.f32 0.0, %v3985
        %v3987 = vpop.f32.mrb[0].mxu0
        %3988 = vmatprep.mubr.f32.mxu0 0.0
        %3989 = vmatmul.mubr.f32.gmra.mrb[0].mxu0 %v3779
        %v3990 = vpop.f32.mrb[0].mxu0
        %v3991 = vadd.f32 0.0, %v3990
        %v3992 = vpop.f32.mrb[0].mxu0
        %3993 = vmatprep.mubr.f32.mxu0 0.0
        %3994 = vmatmul.mubr.f32.gmra.mrb[0].mxu0 %v3782
        %v3995 = vpop.f32.mrb[0].mxu0
        %v3996 = vadd.f32 0.0, %v3995
        %v3997 = vpop.f32.mrb[0].mxu0
        %3998 = vmatprep.mubr.f32.mxu0 0.0
        %3999 = vmatmul.mubr.f32.gmra.mrb[0].mxu0 %v3785
        %v4000 = vpop.f32.mrb[0].mxu0
        %v4001 = vadd.f32 0.0, %v4000
        %v4002 = vpop.f32.mrb[0].mxu0
        %4003 = vmatprep.mubr.f32.mxu0 0.0
        %4004 = vmatmul.mubr.f32.gmra.mrb[0].mxu0 %v3788
        %v4005 = vpop.f32.mrb[0].mxu0
        %v4006 = vadd.f32 0.0, %v4005
        %v4007 = vpop.f32.mrb[0].mxu0
        %4008 = vmatprep.mubr.f32.mxu0 0.0
        %4009 = vmatmul.mubr.f32.gmra.mrb[0].mxu0 %v3791
        %v4010 = vpop.f32.mrb[0].mxu0
        %v4011 = vadd.f32 0.0, %v4010
        %v4012 = vpop.f32.mrb[0].mxu0
        %4013 = vmatprep.mubr.f32.mxu0 0.0
        %4014 = vmatmul.mubr.f32.gmra.mrb[0].mxu0 %v3794
        %v4015 = vpop.f32.mrb[0].mxu0
        %v4016 = vadd.f32 0.0, %v4015
        %v4017 = vpop.f32.mrb[0].mxu0
        %4018 = vmatprep.mubr.f32.mxu0 0.0
        %4019 = vmatmul.mubr.f32.gmra.mrb[0].mxu0 %v3797
        %v4020 = vpop.f32.mrb[0].mxu0
        %v4021 = vadd.f32 0.0, %v4020
        %v4022 = vpop.f32.mrb[0].mxu0
        %4023 = vdwg.mxu0
        %v4024 = vsel %vm614, %v3866, -inf
        %v4025 = vsel %vm614, %v3871, -inf
        %v4026 = vmax.f32 %v4024, %v4025
        %v4027 = vrot.slane %v4026, 4
        %v4028 = vmax.f32 %v4026, %v4027
        %v4029 = vrot.slane %v4028, 2
        %v4030 = vmax.f32 %v4028, %v4029
        %v4031 = vrot.slane %v4030, 1
        %v4032 = vmax.f32 %v4030, %v4031
        %v4033 = vsel %vm614, %v3876, -inf
        %v4034 = vsel %vm614, %v3881, -inf
        %v4035 = vmax.f32 %v4033, %v4034
        %v4036 = vrot.slane %v4035, 4
        %v4037 = vmax.f32 %v4035, %v4036
        %v4038 = vrot.slane %v4037, 2
        %v4039 = vmax.f32 %v4037, %v4038
        %v4040 = vrot.slane %v4039, 1
        %v4041 = vmax.f32 %v4039, %v4040
        %v4042 = vsel %vm614, %v3886, -inf
        %v4043 = vsel %vm614, %v3891, -inf
        %v4044 = vmax.f32 %v4042, %v4043
        %v4045 = vrot.slane %v4044, 4
        %v4046 = vmax.f32 %v4044, %v4045
        %v4047 = vrot.slane %v4046, 2
        %v4048 = vmax.f32 %v4046, %v4047
        %v4049 = vrot.slane %v4048, 1
        %v4050 = vmax.f32 %v4048, %v4049
        %v4051 = vsel %vm614, %v3896, -inf
        %v4052 = vsel %vm614, %v3901, -inf
        %v4053 = vmax.f32 %v4051, %v4052
        %v4054 = vrot.slane %v4053, 4
        %v4055 = vmax.f32 %v4053, %v4054
        %v4056 = vrot.slane %v4055, 2
        %v4057 = vmax.f32 %v4055, %v4056
        %v4058 = vrot.slane %v4057, 1
        %v4059 = vmax.f32 %v4057, %v4058
        %v4060 = vsel %vm614, %v3906, -inf
        %v4061 = vsel %vm614, %v3911, -inf
        %v4062 = vmax.f32 %v4060, %v4061
        %v4063 = vrot.slane %v4062, 4
        %v4064 = vmax.f32 %v4062, %v4063
        %v4065 = vrot.slane %v4064, 2
        %v4066 = vmax.f32 %v4064, %v4065
        %v4067 = vrot.slane %v4066, 1
        %v4068 = vmax.f32 %v4066, %v4067
        %v4069 = vsel %vm614, %v3916, -inf
        %v4070 = vsel %vm614, %v3921, -inf
        %v4071 = vmax.f32 %v4069, %v4070
        %v4072 = vrot.slane %v4071, 4
        %v4073 = vmax.f32 %v4071, %v4072
        %v4074 = vrot.slane %v4073, 2
        %v4075 = vmax.f32 %v4073, %v4074
        %v4076 = vrot.slane %v4075, 1
        %v4077 = vmax.f32 %v4075, %v4076
        %v4078 = vsel %vm614, %v3926, -inf
        %v4079 = vsel %vm614, %v3931, -inf
        %v4080 = vmax.f32 %v4078, %v4079
        %v4081 = vrot.slane %v4080, 4
        %v4082 = vmax.f32 %v4080, %v4081
        %v4083 = vrot.slane %v4082, 2
        %v4084 = vmax.f32 %v4082, %v4083
        %v4085 = vrot.slane %v4084, 1
        %v4086 = vmax.f32 %v4084, %v4085
        %v4087 = vsel %vm614, %v3936, -inf
        %v4088 = vsel %vm614, %v3941, -inf
        %v4089 = vmax.f32 %v4087, %v4088
        %v4090 = vrot.slane %v4089, 4
        %v4091 = vmax.f32 %v4089, %v4090
        %v4092 = vrot.slane %v4091, 2
        %v4093 = vmax.f32 %v4091, %v4092
        %v4094 = vrot.slane %v4093, 1
        %v4095 = vmax.f32 %v4093, %v4094
        %v4096 = vsel %vm614, %v3946, -inf
        %v4097 = vsel %vm614, %v3951, -inf
        %v4098 = vmax.f32 %v4096, %v4097
        %v4099 = vrot.slane %v4098, 4
        %v4100 = vmax.f32 %v4098, %v4099
        %v4101 = vrot.slane %v4100, 2
        %v4102 = vmax.f32 %v4100, %v4101
        %v4103 = vrot.slane %v4102, 1
        %v4104 = vmax.f32 %v4102, %v4103
        %v4105 = vsel %vm614, %v3956, -inf
        %v4106 = vsel %vm614, %v3961, -inf
        %v4107 = vmax.f32 %v4105, %v4106
        %v4108 = vrot.slane %v4107, 4
        %v4109 = vmax.f32 %v4107, %v4108
        %v4110 = vrot.slane %v4109, 2
        %v4111 = vmax.f32 %v4109, %v4110
        %v4112 = vrot.slane %v4111, 1
        %v4113 = vmax.f32 %v4111, %v4112
        %v4114 = vsel %vm614, %v3966, -inf
        %v4115 = vsel %vm614, %v3971, -inf
        %v4116 = vmax.f32 %v4114, %v4115
        %v4117 = vrot.slane %v4116, 4
        %v4118 = vmax.f32 %v4116, %v4117
        %v4119 = vrot.slane %v4118, 2
        %v4120 = vmax.f32 %v4118, %v4119
        %v4121 = vrot.slane %v4120, 1
        %v4122 = vmax.f32 %v4120, %v4121
        %v4123 = vsel %vm614, %v3976, -inf
        %v4124 = vsel %vm614, %v3981, -inf
        %v4125 = vmax.f32 %v4123, %v4124
        %v4126 = vrot.slane %v4125, 4
        %v4127 = vmax.f32 %v4125, %v4126
        %v4128 = vrot.slane %v4127, 2
        %v4129 = vmax.f32 %v4127, %v4128
        %v4130 = vrot.slane %v4129, 1
        %v4131 = vmax.f32 %v4129, %v4130
        %v4132 = vsel %vm614, %v3986, -inf
        %v4133 = vsel %vm614, %v3991, -inf
        %v4134 = vmax.f32 %v4132, %v4133
        %v4135 = vrot.slane %v4134, 4
        %v4136 = vmax.f32 %v4134, %v4135
        %v4137 = vrot.slane %v4136, 2
        %v4138 = vmax.f32 %v4136, %v4137
        %v4139 = vrot.slane %v4138, 1
        %v4140 = vmax.f32 %v4138, %v4139
        %v4141 = vsel %vm614, %v3996, -inf
        %v4142 = vsel %vm614, %v4001, -inf
        %v4143 = vmax.f32 %v4141, %v4142
        %v4144 = vrot.slane %v4143, 4
        %v4145 = vmax.f32 %v4143, %v4144
        %v4146 = vrot.slane %v4145, 2
        %v4147 = vmax.f32 %v4145, %v4146
        %v4148 = vrot.slane %v4147, 1
        %v4149 = vmax.f32 %v4147, %v4148
        %v4150 = vsel %vm614, %v4006, -inf
        %v4151 = vsel %vm614, %v4011, -inf
        %v4152 = vmax.f32 %v4150, %v4151
        %v4153 = vrot.slane %v4152, 4
        %v4154 = vmax.f32 %v4152, %v4153
        %v4155 = vrot.slane %v4154, 2
        %v4156 = vmax.f32 %v4154, %v4155
        %v4157 = vrot.slane %v4156, 1
        %v4158 = vmax.f32 %v4156, %v4157
        %v4159 = vsel %vm614, %v4016, -inf
        %v4160 = vsel %vm614, %v4021, -inf
        %v4161 = vmax.f32 %v4159, %v4160
        %v4162 = vrot.slane %v4161, 4
        %v4163 = vmax.f32 %v4161, %v4162
        %v4164 = vrot.slane %v4163, 2
        %v4165 = vmax.f32 %v4163, %v4164
        %v4166 = vrot.slane %v4165, 1
        %v4167 = vmax.f32 %v4165, %v4166
        %v4184 = vsel %vm775, %v4041, %v4032
        %v4185 = vsel %vm777, %v4050, %v4184
        %v4186 = vsel %vm779, %v4059, %v4185
        %v4187 = vsel %vm781, %v4068, %v4186
        %v4188 = vsel %vm783, %v4077, %v4187
        %v4189 = vsel %vm785, %v4086, %v4188
        %v4190 = vsel %vm787, %v4095, %v4189
        %v4191 = vsel %vm775, %v4113, %v4104
        %v4192 = vsel %vm777, %v4122, %v4191
        %v4193 = vsel %vm779, %v4131, %v4192
        %v4194 = vsel %vm781, %v4140, %v4193
        %v4195 = vsel %vm783, %v4149, %v4194
        %v4196 = vsel %vm785, %v4158, %v4195
        %v4197 = vsel %vm787, %v4167, %v4196
        %4200 = vst.msk [vmem:[#allocation2 + $0x60] sm:$0xff] %vm614, %v4190
        %4201 = vst.msk [vmem:[#allocation2 + $0x68] sm:$0xff] %vm614, %v4197
        %v4202 = vld [vmem:[%s191 + $0x38] sm:$0xff]
        %v4204 = vcombine.high %v4202, %v4202
        %4206 = vxpose.xlu0.b32.start [1/16] %v4202, 128
        %4207 = vxpose.xlu0.b32.cont [2/16] 0.0, 128
        %4208 = vxpose.xlu0.b32.cont [3/16] 0.0, 128
        %4209 = vxpose.xlu0.b32.cont [4/16] 0.0, 128
        %4210 = vxpose.xlu0.b32.cont [5/16] 0.0, 128
        %4211 = vxpose.xlu0.b32.cont [6/16] 0.0, 128
        %4212 = vxpose.xlu0.b32.cont [7/16] 0.0, 128
        %4213 = vxpose.xlu0.b32.cont [8/16] 0.0, 128
        %4214 = vxpose.xlu0.b32.cont [9/16] 0.0, 128
        %4215 = vxpose.xlu0.b32.cont [10/16] 0.0, 128
        %4216 = vxpose.xlu0.b32.cont [11/16] 0.0, 128
        %4217 = vxpose.xlu0.b32.cont [12/16] 0.0, 128
        %4218 = vxpose.xlu0.b32.cont [13/16] 0.0, 128
        %4219 = vxpose.xlu0.b32.cont [14/16] 0.0, 128
        %4220 = vxpose.xlu0.b32.cont [15/16] 0.0, 128
        %4221 = vxpose.xlu0.b32.end [16/16] 0.0, 128
        %v4222 = vpop.trf.xlu0
        %v4223 = vpop.trf.xlu0
        %v4224 = vpop.trf.xlu0
        %v4225 = vpop.trf.xlu0
        %v4226 = vpop.trf.xlu0
        %v4227 = vpop.trf.xlu0
        %v4228 = vpop.trf.xlu0
        %v4229 = vpop.trf.xlu0
        %v4230 = vpop.trf.xlu0
        %v4231 = vpop.trf.xlu0
        %v4232 = vpop.trf.xlu0
        %v4233 = vpop.trf.xlu0
        %v4234 = vpop.trf.xlu0
        %v4235 = vpop.trf.xlu0
        %v4236 = vpop.trf.xlu0
        %v4237 = vpop.trf.xlu0
        %4238 = vxpose.xlu0.b32.start [1/16] %v4204, 128
        %4239 = vxpose.xlu0.b32.cont [2/16] 0.0, 128
        %4240 = vxpose.xlu0.b32.cont [3/16] 0.0, 128
        %4241 = vxpose.xlu0.b32.cont [4/16] 0.0, 128
        %4242 = vxpose.xlu0.b32.cont [5/16] 0.0, 128
        %4243 = vxpose.xlu0.b32.cont [6/16] 0.0, 128
        %4244 = vxpose.xlu0.b32.cont [7/16] 0.0, 128
        %4245 = vxpose.xlu0.b32.cont [8/16] 0.0, 128
        %4246 = vxpose.xlu0.b32.cont [9/16] 0.0, 128
        %4247 = vxpose.xlu0.b32.cont [10/16] 0.0, 128
        %4248 = vxpose.xlu0.b32.cont [11/16] 0.0, 128
        %4249 = vxpose.xlu0.b32.cont [12/16] 0.0, 128
        %4250 = vxpose.xlu0.b32.cont [13/16] 0.0, 128
        %4251 = vxpose.xlu0.b32.cont [14/16] 0.0, 128
        %4252 = vxpose.xlu0.b32.cont [15/16] 0.0, 128
        %4253 = vxpose.xlu0.b32.end [16/16] 0.0, 128
        %v4254 = vpop.trf.xlu0
        %v4255 = vpop.trf.xlu0
        %v4256 = vpop.trf.xlu0
        %v4257 = vpop.trf.xlu0
        %v4258 = vpop.trf.xlu0
        %v4259 = vpop.trf.xlu0
        %v4260 = vpop.trf.xlu0
        %v4261 = vpop.trf.xlu0
        %v4262 = vpop.trf.xlu0
        %v4263 = vpop.trf.xlu0
        %v4264 = vpop.trf.xlu0
        %v4265 = vpop.trf.xlu0
        %v4266 = vpop.trf.xlu0
        %v4267 = vpop.trf.xlu0
        %v4268 = vpop.trf.xlu0
        %v4269 = vpop.trf.xlu0
        %v4271 = vsel %vm288, %v4222, 0
        %v4274 = vsel %vm288, %v4223, 0
        %v4277 = vsel %vm288, %v4224, 0
        %v4280 = vsel %vm288, %v4225, 0
        %v4283 = vsel %vm288, %v4226, 0
        %v4286 = vsel %vm288, %v4227, 0
        %v4289 = vsel %vm288, %v4228, 0
        %v4292 = vsel %vm288, %v4229, 0
        %v4295 = vsel %vm288, %v4230, 0
        %v4298 = vsel %vm288, %v4231, 0
        %v4301 = vsel %vm288, %v4232, 0
        %v4304 = vsel %vm288, %v4233, 0
        %v4307 = vsel %vm288, %v4234, 0
        %v4310 = vsel %vm288, %v4235, 0
        %v4313 = vsel %vm288, %v4236, 0
        %v4316 = vsel %vm288, %v4237, 0
        %v4319 = vsel %vm288, %v4254, 0
        %v4322 = vsel %vm288, %v4255, 0
        %v4325 = vsel %vm288, %v4256, 0
        %v4328 = vsel %vm288, %v4257, 0
        %v4331 = vsel %vm288, %v4258, 0
        %v4334 = vsel %vm288, %v4259, 0
        %v4337 = vsel %vm288, %v4260, 0
        %v4340 = vsel %vm288, %v4261, 0
        %v4343 = vsel %vm288, %v4262, 0
        %v4346 = vsel %vm288, %v4263, 0
        %v4349 = vsel %vm288, %v4264, 0
        %v4352 = vsel %vm288, %v4265, 0
        %v4355 = vsel %vm288, %v4266, 0
        %v4358 = vsel %vm288, %v4267, 0
        %v4361 = vsel %vm288, %v4268, 0
        %v4364 = vsel %vm288, %v4269, 0
        %4366 = vmatprep.subr.mxu0 0.0
        %4367 = vmatpush1.msra.mxu0 %v387
        %4368 = vmatprep.subr.mxu0 0.0
        %4369 = vmatpush1.msra.mxu0 0.0
        %4370 = vmatprep.subr.mxu0 0.0
        %4371 = vmatpush1.msra.mxu0 0.0
        %4372 = vmatprep.subr.mxu0 0.0
        %4373 = vmatpush1.msra.mxu0 0.0
        %4374 = vmatprep.subr.mxu0 0.0
        %4375 = vmatpush1.msra.mxu0 0.0
        %4376 = vmatprep.subr.mxu0 0.0
        %4377 = vmatpush1.msra.mxu0 0.0
        %4378 = vmatprep.subr.mxu0 0.0
        %4379 = vmatpush1.msra.mxu0 0.0
        %4380 = vmatprep.subr.mxu0 0.0
        %4381 = vmatpush1.msra.mxu0 0.0
        %4382 = vmatprep.subr.mxu0 0.0
        %4383 = vmatpush1.msra.mxu0 0.0
        %4384 = vmatprep.subr.mxu0 0.0
        %4385 = vmatpush1.msra.mxu0 0.0
        %4386 = vmatprep.subr.mxu0 0.0
        %4387 = vmatpush1.msra.mxu0 0.0
        %4388 = vmatprep.subr.mxu0 0.0
        %4389 = vmatpush1.msra.mxu0 0.0
        %4390 = vmatprep.subr.mxu0 0.0
        %4391 = vmatpush1.msra.mxu0 0.0
        %4392 = vmatprep.subr.mxu0 0.0
        %4393 = vmatpush1.msra.mxu0 0.0
        %4394 = vmatprep.subr.mxu0 0.0
        %4395 = vmatpush1.msra.mxu0 0.0
        %4396 = vmatprep.subr.mxu0 0.0
        %4397 = vmatpush1.msra.mxu0 0.0
        %4398 = vmatprep.subr.mxu0 0.0
        %4399 = vmatpush1.msra.mxu0 0.0
        %4400 = vmatprep.subr.mxu0 0.0
        %4401 = vmatpush1.msra.mxu0 0.0
        %4402 = vmatprep.subr.mxu0 0.0
        %4403 = vmatpush1.msra.mxu0 0.0
        %4404 = vmatprep.subr.mxu0 0.0
        %4405 = vmatpush1.msra.mxu0 0.0
        %4406 = vmatprep.subr.mxu0 0.0
        %4407 = vmatpush1.msra.mxu0 0.0
        %4408 = vmatprep.subr.mxu0 0.0
        %4409 = vmatpush1.msra.mxu0 0.0
        %4410 = vmatprep.subr.mxu0 0.0
        %4411 = vmatpush1.msra.mxu0 0.0
        %4412 = vmatprep.subr.mxu0 0.0
        %4413 = vmatpush1.msra.mxu0 0.0
        %4414 = vmatprep.subr.mxu0 0.0
        %4415 = vmatpush1.msra.mxu0 0.0
        %4416 = vmatprep.subr.mxu0 0.0
        %4417 = vmatpush1.msra.mxu0 0.0
        %4418 = vmatprep.subr.mxu0 0.0
        %4419 = vmatpush1.msra.mxu0 0.0
        %4420 = vmatprep.subr.mxu0 0.0
        %4421 = vmatpush1.msra.mxu0 0.0
        %4422 = vmatprep.subr.mxu0 0.0
        %4423 = vmatpush1.msra.mxu0 0.0
        %4424 = vmatprep.subr.mxu0 0.0
        %4425 = vmatpush1.msra.mxu0 0.0
        %4426 = vmatprep.subr.mxu0 0.0
        %4427 = vmatpush1.msra.mxu0 0.0
        %4428 = vmatprep.subr.mxu0 0.0
        %4429 = vmatpush1.msra.mxu0 0.0
        %4430 = vmatprep.mubr.f32.mxu0 0.0
        %4431 = vmatmul.mubr.f32.gmra.mrb[0].mxu0 %v4271
        %v4432 = vpop.f32.mrb[0].mxu0
        %v4433 = vadd.f32 0.0, %v4432
        %v4434 = vpop.f32.mrb[0].mxu0
        %4435 = vmatprep.mubr.f32.mxu0 0.0
        %4436 = vmatmul.mubr.f32.gmra.mrb[0].mxu0 %v4274
        %v4437 = vpop.f32.mrb[0].mxu0
        %v4438 = vadd.f32 0.0, %v4437
        %v4439 = vpop.f32.mrb[0].mxu0
        %4440 = vmatprep.mubr.f32.mxu0 0.0
        %4441 = vmatmul.mubr.f32.gmra.mrb[0].mxu0 %v4277
        %v4442 = vpop.f32.mrb[0].mxu0
        %v4443 = vadd.f32 0.0, %v4442
        %v4444 = vpop.f32.mrb[0].mxu0
        %4445 = vmatprep.mubr.f32.mxu0 0.0
        %4446 = vmatmul.mubr.f32.gmra.mrb[0].mxu0 %v4280
        %v4447 = vpop.f32.mrb[0].mxu0
        %v4448 = vadd.f32 0.0, %v4447
        %v4449 = vpop.f32.mrb[0].mxu0
        %4450 = vmatprep.mubr.f32.mxu0 0.0
        %4451 = vmatmul.mubr.f32.gmra.mrb[0].mxu0 %v4283
        %v4452 = vpop.f32.mrb[0].mxu0
        %v4453 = vadd.f32 0.0, %v4452
        %v4454 = vpop.f32.mrb[0].mxu0
        %4455 = vmatprep.mubr.f32.mxu0 0.0
        %4456 = vmatmul.mubr.f32.gmra.mrb[0].mxu0 %v4286
        %v4457 = vpop.f32.mrb[0].mxu0
        %v4458 = vadd.f32 0.0, %v4457
        %v4459 = vpop.f32.mrb[0].mxu0
        %4460 = vmatprep.mubr.f32.mxu0 0.0
        %4461 = vmatmul.mubr.f32.gmra.mrb[0].mxu0 %v4289
        %v4462 = vpop.f32.mrb[0].mxu0
        %v4463 = vadd.f32 0.0, %v4462
        %v4464 = vpop.f32.mrb[0].mxu0
        %4465 = vmatprep.mubr.f32.mxu0 0.0
        %4466 = vmatmul.mubr.f32.gmra.mrb[0].mxu0 %v4292
        %v4467 = vpop.f32.mrb[0].mxu0
        %v4468 = vadd.f32 0.0, %v4467
        %v4469 = vpop.f32.mrb[0].mxu0
        %4470 = vmatprep.mubr.f32.mxu0 0.0
        %4471 = vmatmul.mubr.f32.gmra.mrb[0].mxu0 %v4295
        %v4472 = vpop.f32.mrb[0].mxu0
        %v4473 = vadd.f32 0.0, %v4472
        %v4474 = vpop.f32.mrb[0].mxu0
        %4475 = vmatprep.mubr.f32.mxu0 0.0
        %4476 = vmatmul.mubr.f32.gmra.mrb[0].mxu0 %v4298
        %v4477 = vpop.f32.mrb[0].mxu0
        %v4478 = vadd.f32 0.0, %v4477
        %v4479 = vpop.f32.mrb[0].mxu0
        %4480 = vmatprep.mubr.f32.mxu0 0.0
        %4481 = vmatmul.mubr.f32.gmra.mrb[0].mxu0 %v4301
        %v4482 = vpop.f32.mrb[0].mxu0
        %v4483 = vadd.f32 0.0, %v4482
        %v4484 = vpop.f32.mrb[0].mxu0
        %4485 = vmatprep.mubr.f32.mxu0 0.0
        %4486 = vmatmul.mubr.f32.gmra.mrb[0].mxu0 %v4304
        %v4487 = vpop.f32.mrb[0].mxu0
        %v4488 = vadd.f32 0.0, %v4487
        %v4489 = vpop.f32.mrb[0].mxu0
        %4490 = vmatprep.mubr.f32.mxu0 0.0
        %4491 = vmatmul.mubr.f32.gmra.mrb[0].mxu0 %v4307
        %v4492 = vpop.f32.mrb[0].mxu0
        %v4493 = vadd.f32 0.0, %v4492
        %v4494 = vpop.f32.mrb[0].mxu0
        %4495 = vmatprep.mubr.f32.mxu0 0.0
        %4496 = vmatmul.mubr.f32.gmra.mrb[0].mxu0 %v4310
        %v4497 = vpop.f32.mrb[0].mxu0
        %v4498 = vadd.f32 0.0, %v4497
        %v4499 = vpop.f32.mrb[0].mxu0
        %4500 = vmatprep.mubr.f32.mxu0 0.0
        %4501 = vmatmul.mubr.f32.gmra.mrb[0].mxu0 %v4313
        %v4502 = vpop.f32.mrb[0].mxu0
        %v4503 = vadd.f32 0.0, %v4502
        %v4504 = vpop.f32.mrb[0].mxu0
        %4505 = vmatprep.mubr.f32.mxu0 0.0
        %4506 = vmatmul.mubr.f32.gmra.mrb[0].mxu0 %v4316
        %v4507 = vpop.f32.mrb[0].mxu0
        %v4508 = vadd.f32 0.0, %v4507
        %v4509 = vpop.f32.mrb[0].mxu0
        %4510 = vmatprep.mubr.f32.mxu0 0.0
        %4511 = vmatmul.mubr.f32.gmra.mrb[0].mxu0 %v4319
        %v4512 = vpop.f32.mrb[0].mxu0
        %v4513 = vadd.f32 0.0, %v4512
        %v4514 = vpop.f32.mrb[0].mxu0
        %4515 = vmatprep.mubr.f32.mxu0 0.0
        %4516 = vmatmul.mubr.f32.gmra.mrb[0].mxu0 %v4322
        %v4517 = vpop.f32.mrb[0].mxu0
        %v4518 = vadd.f32 0.0, %v4517
        %v4519 = vpop.f32.mrb[0].mxu0
        %4520 = vmatprep.mubr.f32.mxu0 0.0
        %4521 = vmatmul.mubr.f32.gmra.mrb[0].mxu0 %v4325
        %v4522 = vpop.f32.mrb[0].mxu0
        %v4523 = vadd.f32 0.0, %v4522
        %v4524 = vpop.f32.mrb[0].mxu0
        %4525 = vmatprep.mubr.f32.mxu0 0.0
        %4526 = vmatmul.mubr.f32.gmra.mrb[0].mxu0 %v4328
        %v4527 = vpop.f32.mrb[0].mxu0
        %v4528 = vadd.f32 0.0, %v4527
        %v4529 = vpop.f32.mrb[0].mxu0
        %4530 = vmatprep.mubr.f32.mxu0 0.0
        %4531 = vmatmul.mubr.f32.gmra.mrb[0].mxu0 %v4331
        %v4532 = vpop.f32.mrb[0].mxu0
        %v4533 = vadd.f32 0.0, %v4532
        %v4534 = vpop.f32.mrb[0].mxu0
        %4535 = vmatprep.mubr.f32.mxu0 0.0
        %4536 = vmatmul.mubr.f32.gmra.mrb[0].mxu0 %v4334
        %v4537 = vpop.f32.mrb[0].mxu0
        %v4538 = vadd.f32 0.0, %v4537
        %v4539 = vpop.f32.mrb[0].mxu0
        %4540 = vmatprep.mubr.f32.mxu0 0.0
        %4541 = vmatmul.mubr.f32.gmra.mrb[0].mxu0 %v4337
        %v4542 = vpop.f32.mrb[0].mxu0
        %v4543 = vadd.f32 0.0, %v4542
        %v4544 = vpop.f32.mrb[0].mxu0
        %4545 = vmatprep.mubr.f32.mxu0 0.0
        %4546 = vmatmul.mubr.f32.gmra.mrb[0].mxu0 %v4340
        %v4547 = vpop.f32.mrb[0].mxu0
        %v4548 = vadd.f32 0.0, %v4547
        %v4549 = vpop.f32.mrb[0].mxu0
        %4550 = vmatprep.mubr.f32.mxu0 0.0
        %4551 = vmatmul.mubr.f32.gmra.mrb[0].mxu0 %v4343
        %v4552 = vpop.f32.mrb[0].mxu0
        %v4553 = vadd.f32 0.0, %v4552
        %v4554 = vpop.f32.mrb[0].mxu0
        %4555 = vmatprep.mubr.f32.mxu0 0.0
        %4556 = vmatmul.mubr.f32.gmra.mrb[0].mxu0 %v4346
        %v4557 = vpop.f32.mrb[0].mxu0
        %v4558 = vadd.f32 0.0, %v4557
        %v4559 = vpop.f32.mrb[0].mxu0
        %4560 = vmatprep.mubr.f32.mxu0 0.0
        %4561 = vmatmul.mubr.f32.gmra.mrb[0].mxu0 %v4349
        %v4562 = vpop.f32.mrb[0].mxu0
        %v4563 = vadd.f32 0.0, %v4562
        %v4564 = vpop.f32.mrb[0].mxu0
        %4565 = vmatprep.mubr.f32.mxu0 0.0
        %4566 = vmatmul.mubr.f32.gmra.mrb[0].mxu0 %v4352
        %v4567 = vpop.f32.mrb[0].mxu0
        %v4568 = vadd.f32 0.0, %v4567
        %v4569 = vpop.f32.mrb[0].mxu0
        %4570 = vmatprep.mubr.f32.mxu0 0.0
        %4571 = vmatmul.mubr.f32.gmra.mrb[0].mxu0 %v4355
        %v4572 = vpop.f32.mrb[0].mxu0
        %v4573 = vadd.f32 0.0, %v4572
        %v4574 = vpop.f32.mrb[0].mxu0
        %4575 = vmatprep.mubr.f32.mxu0 0.0
        %4576 = vmatmul.mubr.f32.gmra.mrb[0].mxu0 %v4358
        %v4577 = vpop.f32.mrb[0].mxu0
        %v4578 = vadd.f32 0.0, %v4577
        %v4579 = vpop.f32.mrb[0].mxu0
        %4580 = vmatprep.mubr.f32.mxu0 0.0
        %4581 = vmatmul.mubr.f32.gmra.mrb[0].mxu0 %v4361
        %v4582 = vpop.f32.mrb[0].mxu0
        %v4583 = vadd.f32 0.0, %v4582
        %v4584 = vpop.f32.mrb[0].mxu0
        %4585 = vmatprep.mubr.f32.mxu0 0.0
        %4586 = vmatmul.mubr.f32.gmra.mrb[0].mxu0 %v4364
        %v4587 = vpop.f32.mrb[0].mxu0
        %v4588 = vadd.f32 0.0, %v4587
        %v4589 = vpop.f32.mrb[0].mxu0
        %4590 = vdwg.mxu0
        %v4591 = vsel %vm614, %v4433, -inf
        %v4592 = vsel %vm614, %v4438, -inf
        %v4593 = vmax.f32 %v4591, %v4592
        %v4594 = vrot.slane %v4593, 4
        %v4595 = vmax.f32 %v4593, %v4594
        %v4596 = vrot.slane %v4595, 2
        %v4597 = vmax.f32 %v4595, %v4596
        %v4598 = vrot.slane %v4597, 1
        %v4599 = vmax.f32 %v4597, %v4598
        %v4600 = vsel %vm614, %v4443, -inf
        %v4601 = vsel %vm614, %v4448, -inf
        %v4602 = vmax.f32 %v4600, %v4601
        %v4603 = vrot.slane %v4602, 4
        %v4604 = vmax.f32 %v4602, %v4603
        %v4605 = vrot.slane %v4604, 2
        %v4606 = vmax.f32 %v4604, %v4605
        %v4607 = vrot.slane %v4606, 1
        %v4608 = vmax.f32 %v4606, %v4607
        %v4609 = vsel %vm614, %v4453, -inf
        %v4610 = vsel %vm614, %v4458, -inf
        %v4611 = vmax.f32 %v4609, %v4610
        %v4612 = vrot.slane %v4611, 4
        %v4613 = vmax.f32 %v4611, %v4612
        %v4614 = vrot.slane %v4613, 2
        %v4615 = vmax.f32 %v4613, %v4614
        %v4616 = vrot.slane %v4615, 1
        %v4617 = vmax.f32 %v4615, %v4616
        %v4618 = vsel %vm614, %v4463, -inf
        %v4619 = vsel %vm614, %v4468, -inf
        %v4620 = vmax.f32 %v4618, %v4619
        %v4621 = vrot.slane %v4620, 4
        %v4622 = vmax.f32 %v4620, %v4621
        %v4623 = vrot.slane %v4622, 2
        %v4624 = vmax.f32 %v4622, %v4623
        %v4625 = vrot.slane %v4624, 1
        %v4626 = vmax.f32 %v4624, %v4625
        %v4627 = vsel %vm614, %v4473, -inf
        %v4628 = vsel %vm614, %v4478, -inf
        %v4629 = vmax.f32 %v4627, %v4628
        %v4630 = vrot.slane %v4629, 4
        %v4631 = vmax.f32 %v4629, %v4630
        %v4632 = vrot.slane %v4631, 2
        %v4633 = vmax.f32 %v4631, %v4632
        %v4634 = vrot.slane %v4633, 1
        %v4635 = vmax.f32 %v4633, %v4634
        %v4636 = vsel %vm614, %v4483, -inf
        %v4637 = vsel %vm614, %v4488, -inf
        %v4638 = vmax.f32 %v4636, %v4637
        %v4639 = vrot.slane %v4638, 4
        %v4640 = vmax.f32 %v4638, %v4639
        %v4641 = vrot.slane %v4640, 2
        %v4642 = vmax.f32 %v4640, %v4641
        %v4643 = vrot.slane %v4642, 1
        %v4644 = vmax.f32 %v4642, %v4643
        %v4645 = vsel %vm614, %v4493, -inf
        %v4646 = vsel %vm614, %v4498, -inf
        %v4647 = vmax.f32 %v4645, %v4646
        %v4648 = vrot.slane %v4647, 4
        %v4649 = vmax.f32 %v4647, %v4648
        %v4650 = vrot.slane %v4649, 2
        %v4651 = vmax.f32 %v4649, %v4650
        %v4652 = vrot.slane %v4651, 1
        %v4653 = vmax.f32 %v4651, %v4652
        %v4654 = vsel %vm614, %v4503, -inf
        %v4655 = vsel %vm614, %v4508, -inf
        %v4656 = vmax.f32 %v4654, %v4655
        %v4657 = vrot.slane %v4656, 4
        %v4658 = vmax.f32 %v4656, %v4657
        %v4659 = vrot.slane %v4658, 2
        %v4660 = vmax.f32 %v4658, %v4659
        %v4661 = vrot.slane %v4660, 1
        %v4662 = vmax.f32 %v4660, %v4661
        %v4663 = vsel %vm614, %v4513, -inf
        %v4664 = vsel %vm614, %v4518, -inf
        %v4665 = vmax.f32 %v4663, %v4664
        %v4666 = vrot.slane %v4665, 4
        %v4667 = vmax.f32 %v4665, %v4666
        %v4668 = vrot.slane %v4667, 2
        %v4669 = vmax.f32 %v4667, %v4668
        %v4670 = vrot.slane %v4669, 1
        %v4671 = vmax.f32 %v4669, %v4670
        %v4672 = vsel %vm614, %v4523, -inf
        %v4673 = vsel %vm614, %v4528, -inf
        %v4674 = vmax.f32 %v4672, %v4673
        %v4675 = vrot.slane %v4674, 4
        %v4676 = vmax.f32 %v4674, %v4675
        %v4677 = vrot.slane %v4676, 2
        %v4678 = vmax.f32 %v4676, %v4677
        %v4679 = vrot.slane %v4678, 1
        %v4680 = vmax.f32 %v4678, %v4679
        %v4681 = vsel %vm614, %v4533, -inf
        %v4682 = vsel %vm614, %v4538, -inf
        %v4683 = vmax.f32 %v4681, %v4682
        %v4684 = vrot.slane %v4683, 4
        %v4685 = vmax.f32 %v4683, %v4684
        %v4686 = vrot.slane %v4685, 2
        %v4687 = vmax.f32 %v4685, %v4686
        %v4688 = vrot.slane %v4687, 1
        %v4689 = vmax.f32 %v4687, %v4688
        %v4690 = vsel %vm614, %v4543, -inf
        %v4691 = vsel %vm614, %v4548, -inf
        %v4692 = vmax.f32 %v4690, %v4691
        %v4693 = vrot.slane %v4692, 4
        %v4694 = vmax.f32 %v4692, %v4693
        %v4695 = vrot.slane %v4694, 2
        %v4696 = vmax.f32 %v4694, %v4695
        %v4697 = vrot.slane %v4696, 1
        %v4698 = vmax.f32 %v4696, %v4697
        %v4699 = vsel %vm614, %v4553, -inf
        %v4700 = vsel %vm614, %v4558, -inf
        %v4701 = vmax.f32 %v4699, %v4700
        %v4702 = vrot.slane %v4701, 4
        %v4703 = vmax.f32 %v4701, %v4702
        %v4704 = vrot.slane %v4703, 2
        %v4705 = vmax.f32 %v4703, %v4704
        %v4706 = vrot.slane %v4705, 1
        %v4707 = vmax.f32 %v4705, %v4706
        %v4708 = vsel %vm614, %v4563, -inf
        %v4709 = vsel %vm614, %v4568, -inf
        %v4710 = vmax.f32 %v4708, %v4709
        %v4711 = vrot.slane %v4710, 4
        %v4712 = vmax.f32 %v4710, %v4711
        %v4713 = vrot.slane %v4712, 2
        %v4714 = vmax.f32 %v4712, %v4713
        %v4715 = vrot.slane %v4714, 1
        %v4716 = vmax.f32 %v4714, %v4715
        %v4717 = vsel %vm614, %v4573, -inf
        %v4718 = vsel %vm614, %v4578, -inf
        %v4719 = vmax.f32 %v4717, %v4718
        %v4720 = vrot.slane %v4719, 4
        %v4721 = vmax.f32 %v4719, %v4720
        %v4722 = vrot.slane %v4721, 2
        %v4723 = vmax.f32 %v4721, %v4722
        %v4724 = vrot.slane %v4723, 1
        %v4725 = vmax.f32 %v4723, %v4724
        %v4726 = vsel %vm614, %v4583, -inf
        %v4727 = vsel %vm614, %v4588, -inf
        %v4728 = vmax.f32 %v4726, %v4727
        %v4729 = vrot.slane %v4728, 4
        %v4730 = vmax.f32 %v4728, %v4729
        %v4731 = vrot.slane %v4730, 2
        %v4732 = vmax.f32 %v4730, %v4731
        %v4733 = vrot.slane %v4732, 1
        %v4734 = vmax.f32 %v4732, %v4733
        %v4751 = vsel %vm775, %v4608, %v4599
        %v4752 = vsel %vm777, %v4617, %v4751
        %v4753 = vsel %vm779, %v4626, %v4752
        %v4754 = vsel %vm781, %v4635, %v4753
        %v4755 = vsel %vm783, %v4644, %v4754
        %v4756 = vsel %vm785, %v4653, %v4755
        %v4757 = vsel %vm787, %v4662, %v4756
        %v4758 = vsel %vm775, %v4680, %v4671
        %v4759 = vsel %vm777, %v4689, %v4758
        %v4760 = vsel %vm779, %v4698, %v4759
        %v4761 = vsel %vm781, %v4707, %v4760
        %v4762 = vsel %vm783, %v4716, %v4761
        %v4763 = vsel %vm785, %v4725, %v4762
        %v4764 = vsel %vm787, %v4734, %v4763
        %4767 = vst.msk [vmem:[#allocation2 + $0x70] sm:$0xff] %vm614, %v4757
        %4768 = vst.msk [vmem:[#allocation2 + $0x78] sm:$0xff] %vm614, %v4764
        %v4769 = vld [vmem:[#allocation2] sm:$0xff]
        %v4770 = vld [vmem:[#allocation2 + $0x8] sm:$0xff]
        %v4771 = vld [vmem:[#allocation2 + $0x10] sm:$0xff]
        %v4772 = vld [vmem:[#allocation2 + $0x18] sm:$0xff]
        %v4773 = vld [vmem:[#allocation2 + $0x20] sm:$0xff]
        %v4774 = vld [vmem:[#allocation2 + $0x28] sm:$0xff]
        %v4775 = vld [vmem:[#allocation2 + $0x30] sm:$0xff]
        %v4776 = vld [vmem:[#allocation2 + $0x38] sm:$0xff]
        %v4777 = vld [vmem:[#allocation2 + $0x40] sm:$0xff]
        %v4778 = vld [vmem:[#allocation2 + $0x48] sm:$0xff]
        %v4779 = vld [vmem:[#allocation2 + $0x50] sm:$0xff]
        %v4780 = vld [vmem:[#allocation2 + $0x58] sm:$0xff]
        %v4781 = vld [vmem:[#allocation2 + $0x60] sm:$0xff]
        %v4782 = vld [vmem:[#allocation2 + $0x68] sm:$0xff]
        %v4783 = vld [vmem:[#allocation2 + $0x70] sm:$0xff]
        %v4784 = vld [vmem:[#allocation2 + $0x78] sm:$0xff]
        %v4785 = vld [vmem:[%s2] sm:$0x1]
        %v4787 = vlaneseq
        %v4788 = vshrl.u32 %v4787, 7
        %v4789 = vsub.s32 0, %v4788
        %v4790 = vrot.slane %v4785, %v4789
        %v4792 = vadd.f32 %v4769, %v4790
        %v4793 = vadd.f32 %v4770, %v4790
        %v4794 = vadd.f32 %v4771, %v4790
        %v4795 = vadd.f32 %v4772, %v4790
        %v4796 = vadd.f32 %v4773, %v4790
        %v4797 = vadd.f32 %v4774, %v4790
        %v4798 = vadd.f32 %v4775, %v4790
        %v4799 = vadd.f32 %v4776, %v4790
        %v4800 = vadd.f32 %v4777, %v4790
        %v4801 = vadd.f32 %v4778, %v4790
        %v4802 = vadd.f32 %v4779, %v4790
        %v4803 = vadd.f32 %v4780, %v4790
        %v4804 = vadd.f32 %v4781, %v4790
        %v4805 = vadd.f32 %v4782, %v4790
        %v4806 = vadd.f32 %v4783, %v4790
        %v4807 = vadd.f32 %v4784, %v4790
        %v4808 = vmax.f32 %v4792, 0.0
        %v4809 = vmax.f32 %v4793, 0.0
        %v4810 = vmax.f32 %v4794, 0.0
        %v4811 = vmax.f32 %v4795, 0.0
        %v4812 = vmax.f32 %v4796, 0.0
        %v4813 = vmax.f32 %v4797, 0.0
        %v4814 = vmax.f32 %v4798, 0.0
        %v4815 = vmax.f32 %v4799, 0.0
        %v4816 = vmax.f32 %v4800, 0.0
        %v4817 = vmax.f32 %v4801, 0.0
        %v4818 = vmax.f32 %v4802, 0.0
        %v4819 = vmax.f32 %v4803, 0.0
        %v4820 = vmax.f32 %v4804, 0.0
        %v4821 = vmax.f32 %v4805, 0.0
        %v4822 = vmax.f32 %v4806, 0.0
        %v4823 = vmax.f32 %v4807, 0.0
        %4824 = vxpose.xlu0.b32.start [1/16] %v4808, 128
        %4825 = vxpose.xlu0.b32.cont [2/16] %v4809, 128
        %4826 = vxpose.xlu0.b32.cont [3/16] %v4810, 128
        %4827 = vxpose.xlu0.b32.cont [4/16] %v4811, 128
        %4828 = vxpose.xlu0.b32.cont [5/16] %v4812, 128
        %4829 = vxpose.xlu0.b32.cont [6/16] %v4813, 128
        %4830 = vxpose.xlu0.b32.cont [7/16] %v4814, 128
        %4831 = vxpose.xlu0.b32.cont [8/16] %v4815, 128
        %4832 = vxpose.xlu0.b32.cont [9/16] %v4816, 128
        %4833 = vxpose.xlu0.b32.cont [10/16] %v4817, 128
        %4834 = vxpose.xlu0.b32.cont [11/16] %v4818, 128
        %4835 = vxpose.xlu0.b32.cont [12/16] %v4819, 128
        %4836 = vxpose.xlu0.b32.cont [13/16] %v4820, 128
        %4837 = vxpose.xlu0.b32.cont [14/16] %v4821, 128
        %4838 = vxpose.xlu0.b32.cont [15/16] %v4822, 128
        %4839 = vxpose.xlu0.b32.end [16/16] %v4823, 128
        %v4840 = vpop.trf.xlu0
        %v4841 = vpop.trf.xlu0
        %v4842 = vpop.trf.xlu0
        %v4843 = vpop.trf.xlu0
        %v4844 = vpop.trf.xlu0
        %v4845 = vpop.trf.xlu0
        %v4846 = vpop.trf.xlu0
        %v4847 = vpop.trf.xlu0
        %v4848 = vpop.trf.xlu0
        %v4849 = vpop.trf.xlu0
        %v4850 = vpop.trf.xlu0
        %v4851 = vpop.trf.xlu0
        %v4852 = vpop.trf.xlu0
        %v4853 = vpop.trf.xlu0
        %v4854 = vpop.trf.xlu0
        %v4855 = vpop.trf.xlu0
        %4856 = vst [vmem:[%s217] sm:$0xff] %v4840
        %4857 = vst [vmem:[%s217 + $0x8] sm:$0xff] %v4841
        %4858 = vst [vmem:[%s217 + $0x10] sm:$0xff] %v4842
        %4859 = vst [vmem:[%s217 + $0x18] sm:$0xff] %v4843
        %s4860 = sand.u32 %s113, 1
        %s4861 = scalar_lea.sflag [#allocation5], %s4860
        %s4862 = sand.u32 %s113, 1
        %s4863 = smul.addr %s4862, 32
        %s4864 = scalar_lea.vmem [#allocation8], %s4863
        // Predicated region
        $region41: #{tpu_custom_call.1} parent=31 // pred_check
          %p4865 = pneg %p123
        $region42: #{tpu_custom_call.1} parent=31 // pred_check_branch
          %4867 = sbr.rel (%p4865) target = $region44
        $region43: #{tpu_custom_call.1} parent=31 // pred_region
          %s4869 = ssub.s32 512, 512
          %4870 = vsyncadd %s4861, %s4869
          %s4871 = smul.addr %s25, 8
          %s4872 = sadd.s32 %s26, %s4871
          %s4873 = smul.addr %s4872, 128
          %s4874 = scalar_lea.hbm %s3, %s4873
          %s4875 = sshll.u32 %s4864, 4
          %s4876 = int_to_ptr.vmem [resolvable:$true] %s4875
          %4881 = dma.vmem_to_hbm [thread:$0]  %s4876, 512, %s4874, %s4861, 128, 256, 8
        $region44: #{tpu_custom_call.1} parent=31 // pred_fallthru
          _
      $region32: #{tpu_custom_call.1} parent=5 // pred_fallthru
        _
      %p4882 = scmp.le.s32.totalorder 2, %s16
      // Predicated region
      $region45: #{tpu_custom_call.1} parent=5 // pred_check
        %p4883 = pneg %p4882
      $region46: #{tpu_custom_call.1} parent=5 // pred_check_branch
        %4885 = sbr.rel (%p4883) target = $region48
      $region47: #{tpu_custom_call.1} parent=5 // pred_region
        %s4886 = ssub.s32 %s16, 2
        // Predicated region
        $region49: #{tpu_custom_call.1} parent=47 // pred_check
          %p4887 = pneg %p129
        $region50: #{tpu_custom_call.1} parent=47 // pred_check_branch
          %4889 = sbr.rel (%p4887) target = $region52
        $region51: #{tpu_custom_call.1} parent=47 // pred_region
          %s4890 = sand.u32 %s114, 1
          %s4891 = scalar_lea.sflag [#allocation5], %s4890
          %s4892 = sand.u32 %s114, 1
          %s4893 = smul.addr %s4892, 32
          %s4894 = scalar_lea.vmem [#allocation8], %s4893
          %4895 = dma.done %s4891, 512
        $region52: #{tpu_custom_call.1} parent=47 // pred_fallthru
          _
      $region48: #{tpu_custom_call.1} parent=5 // pred_fallthru
        _
    $region6: #{tpu_custom_call.1} parent=1 // loop_footer
      %s20 = sadd.s32 1, %s16
    $region7: #{tpu_custom_call.1} parent=1 // loop_footer_branch
      %15 = sbr.rel target = $region3
    $region8: #{tpu_custom_call.1} parent=1 // loop_exit
      _
    %4896 = vsyncpa [#allocation4], 1
    %s4897 = scalar_lea.sflag [#allocation4], 1
    %4898 = vsyncpa %s4897, 1
    %4899 = vsyncpa [#allocation7], 1
    %4900 = vsyncpa [#allocation5], 1
    %s4901 = scalar_lea.sflag [#allocation5], 1
    %4902 = vsyncpa %s4901, 1

</llo_original>
